<compile_context>
chip_gen: v7x
topology: tpu7x:2x2x1
jax: 0.10.0
libtpu: 0.0.40
codegen_flags: <defaults>
</compile_context>

<pallas_src>
import functools

import jax
import jax.numpy as jnp
import numpy as np
from jax.experimental import pallas as pl
from jax.experimental.pallas import tpu as pltpu


def _spatial_attention_kernel(
    x_ref,                                    # (1, C, H, W)  VMEM block
    w1a_ref, b1a_ref, w1b_ref, b1b_ref,       # SMEM, flattened, BN-folded (group 1)
    w2a_ref, b2a_ref, w2b_ref, b2b_ref,       # SMEM, flattened, BN-folded (group 2)
    out_ref,                                  # (1, 1, H, W)  VMEM block (attention map)
    xp_ref,                                   # (C, H+2P, W+2P) scratch: doubly padded x
    y1p_ref,                                  # (M, H+2P, W)    scratch: grp1 mid, H halo
    y2p_ref,                                  # (M, H, W+2P)    scratch: grp2 mid, W halo
    *, C, H, W, K,
):
    M = C // 2
    P = (K - 1) // 2
    f32 = jnp.float32

    # ---- stage 0: one copy of x into the merged padded scratch; zero only the
    # P-wide halo stripes (centers are always fully overwritten below). --------
    xp_ref[:, 0:P, :] = jnp.zeros((C, P, W + 2 * P), f32)
    xp_ref[:, H + P:H + 2 * P, :] = jnp.zeros((C, P, W + 2 * P), f32)
    xp_ref[:, :, 0:P] = jnp.zeros((C, H + 2 * P, P), f32)
    xp_ref[:, :, W + P:W + 2 * P] = jnp.zeros((C, H + 2 * P, P), f32)
    xp_ref[:, P:P + H, P:P + W] = x_ref[0].astype(f32)

    y1p_ref[:, 0:P, :] = jnp.zeros((M, P, W), f32)
    y1p_ref[:, H + P:H + 2 * P, :] = jnp.zeros((M, P, W), f32)
    y2p_ref[:, :, 0:P] = jnp.zeros((M, H, P), f32)
    y2p_ref[:, :, W + P:W + 2 * P] = jnp.zeros((M, H, P), f32)

    # ---- group 1, stage 1: (1,K) conv C->M, +bias, ReLU (keep H halo for stage 2).
    # m outermost -> a single live (H, W) accumulator. --------------------------
    for m in range(M):
        acc = jnp.zeros((H, W), f32)
        for c in range(C):
            for k in range(K):
                acc = acc + w1a_ref[(m * C + c) * K + k] * xp_ref[c, P:P + H, k:k + W]
        y1p_ref[m, P:P + H, :] = jnp.maximum(acc + b1a_ref[m], 0.0)

    # ---- group 1, stage 2: (K,1) conv M->1, +bias, ReLU ----
    z1 = jnp.zeros((H, W), f32)
    for m in range(M):
        for k in range(K):
            z1 = z1 + w1b_ref[m * K + k] * y1p_ref[m, k:k + H, :]
    z1 = jnp.maximum(z1 + b1b_ref[0], 0.0)

    # ---- group 2, stage 1: (K,1) conv C->M, +bias, ReLU (keep W halo for stage 2) ----
    for m in range(M):
        acc = jnp.zeros((H, W), f32)
        for c in range(C):
            for k in range(K):
                acc = acc + w2a_ref[(m * C + c) * K + k] * xp_ref[c, k:k + H, P:P + W]
        y2p_ref[m, :, P:P + W] = jnp.maximum(acc + b2a_ref[m], 0.0)

    # ---- group 2, stage 2: (1,K) conv M->1, +bias, ReLU ----
    z2 = jnp.zeros((H, W), f32)
    for m in range(M):
        for k in range(K):
            z2 = z2 + w2b_ref[m * K + k] * y2p_ref[m, :, k:k + W]
    z2 = jnp.maximum(z2 + b2b_ref[0], 0.0)

    # ---- sigmoid; single (1,1,H,W) store (broadcast to C happens outside). ----
    s = z1 + z2                               # z1, z2 >= 0  ->  exp(-s) <= 1, no overflow
    att = 1.0 / (1.0 + jnp.exp(-s))           # exp on EUP; exact divide keeps bit-closeness
    out_ref[0, 0] = att.astype(out_ref.dtype)


def _fold_conv_bn(w, b, gamma, beta, mean, var, eps=1e-5):
    """Fold inference-mode BatchNorm into the preceding conv weight/bias."""
    scale = gamma / jnp.sqrt(var + eps)
    w_f = (w * scale[:, None, None, None]).astype(jnp.float32)
    b_f = ((b - mean) * scale + beta).astype(jnp.float32)
    return w_f, b_f


def spatial_attention(x, params, *, kernel_size=9):
    N, C, H, W = x.shape
    assert C % 2 == 0, "in_channels must be even (C // 2 mid channels)"
    assert kernel_size % 2 == 1, "kernel_size must be odd to match PyTorch padding"
    M = C // 2
    K = kernel_size
    P = (K - 1) // 2

    w1a, b1a = _fold_conv_bn(params["g1_conv1k_w"], params["g1_conv1k_b"], *params["g1_bn1"])
    w1b, b1b = _fold_conv_bn(params["g1_convk1_w"], params["g1_convk1_b"], *params["g1_bn2"])
    w2a, b2a = _fold_conv_bn(params["g2_convk1_w"], params["g2_convk1_b"], *params["g2_bn1"])
    w2b, b2b = _fold_conv_bn(params["g2_conv1k_w"], params["g2_conv1k_b"], *params["g2_bn2"])

    # Flatten weights for SMEM scalar access:
    #   w1a (M,C,1,K) / w2a (M,C,K,1) -> flat index (m*C + c)*K + k
    #   w1b (1,M,K,1) / w2b (1,M,1,K) -> flat index  m*K + k
    w1a_f = w1a.reshape(-1)
    w1b_f = w1b.reshape(-1)
    w2a_f = w2a.reshape(-1)
    w2b_f = w2b.reshape(-1)

    kernel = functools.partial(_spatial_attention_kernel, C=C, H=H, W=W, K=K)
    smem = pl.BlockSpec(memory_space=pltpu.MemorySpace.SMEM)

    # Explicit VMEM budget (v5e default scoped VMEM is only 16 MiB):
    #  double-buffered in/out blocks + scratch, with generous headroom.
    itemsize = jnp.dtype(x.dtype).itemsize
    scratch_bytes = 4 * (C * (H + 2 * P) * (W + 2 * P)
                         + M * (H + 2 * P) * W
                         + M * H * (W + 2 * P))
    io_bytes = 2 * itemsize * (C * H * W + H * W)
    vmem_limit = int(min(max(16 << 20, 3 * (scratch_bytes + io_bytes) + (2 << 20)),
                         48 << 20))

    att = pl.pallas_call(
        kernel,
        out_shape=jax.ShapeDtypeStruct((N, 1, H, W), x.dtype),
        grid_spec=pltpu.PrefetchScalarGridSpec(
            num_scalar_prefetch=0,
            grid=(N,),
            in_specs=[
                pl.BlockSpec((1, C, H, W), lambda n: (n, 0, 0, 0)),
                smem, smem, smem, smem,
                smem, smem, smem, smem,
            ],
            out_specs=pl.BlockSpec((1, 1, H, W), lambda n: (n, 0, 0, 0)),
            scratch_shapes=[
                pltpu.VMEM((C, H + 2 * P, W + 2 * P), jnp.float32),
                pltpu.VMEM((M, H + 2 * P, W), jnp.float32),
                pltpu.VMEM((M, H, W + 2 * P), jnp.float32),
            ],
        ),
        compiler_params=pltpu.CompilerParams(
            dimension_semantics=("parallel",),
            vmem_limit_bytes=vmem_limit,
        ),
    )(x, w1a_f, b1a, w1b_f, b1b, w2a_f, b2a, w2b_f, b2b)

    # expand_as(input_).clone(): broadcast back to all C channels outside the
    # kernel (cuts kernel output HBM bytes by C x).
    return jnp.broadcast_to(att, (N, C, H, W))


def _reference_spatial_attention(x, params, kernel_size=9):
    """Pure-JAX reference of the PyTorch module (inference-mode BN)."""
    P = (kernel_size - 1) // 2
    eps = 1e-5

    def conv(x, w, b, pad):
        y = jax.lax.conv_general_dilated(
            x, w, window_strides=(1, 1), padding=pad,
            dimension_numbers=("NCHW", "OIHW", "NCHW"),
            precision=jax.lax.Precision.HIGHEST)
        return y + b[None, :, None, None]

    def bn(x, gamma, beta, mean, var):
        inv = gamma / jnp.sqrt(var + eps)
        return (x - mean[None, :, None, None]) * inv[None, :, None, None] \
            + beta[None, :, None, None]

    g1 = conv(x, params["g1_conv1k_w"], params["g1_conv1k_b"], ((0, 0), (P, P)))
    g1 = jax.nn.relu(bn(g1, *params["g1_bn1"]))
    g1 = conv(g1, params["g1_convk1_w"], params["g1_convk1_b"], ((P, P), (0, 0)))
    g1 = jax.nn.relu(bn(g1, *params["g1_bn2"]))

    g2 = conv(x, params["g2_convk1_w"], params["g2_convk1_b"], ((P, P), (0, 0)))
    g2 = jax.nn.relu(bn(g2, *params["g2_bn1"]))
    g2 = conv(g2, params["g2_conv1k_w"], params["g2_conv1k_b"], ((0, 0), (P, P)))
    g2 = jax.nn.relu(bn(g2, *params["g2_bn2"]))

    att = jax.nn.sigmoid(g1 + g2)             # (N, 1, H, W)
    return jnp.broadcast_to(att, x.shape)


def _make_bn_params(key, c):
    k1, k2, k3, k4 = jax.random.split(key, 4)
    gamma = 1.0 + 0.1 * jax.random.normal(k1, (c,), jnp.float32)
    beta = 0.1 * jax.random.normal(k2, (c,), jnp.float32)
    mean = 0.1 * jax.random.normal(k3, (c,), jnp.float32)
    var = 1.0 + 0.1 * jax.random.uniform(k4, (c,), jnp.float32)
    return gamma, beta, mean, var


if __name__ == "__main__":
    N, C, H, W = 2, 4, 16, 16
    K = 9
    M = C // 2

    keys = jax.random.split(jax.random.PRNGKey(0), 13)
    params = {
        "g1_conv1k_w": 0.2 * jax.random.normal(keys[0], (M, C, 1, K), jnp.float32),
        "g1_conv1k_b": 0.1 * jax.random.normal(keys[1], (M,), jnp.float32),
        "g1_bn1": _make_bn_params(keys[2], M),
        "g1_convk1_w": 0.2 * jax.random.normal(keys[3], (1, M, K, 1), jnp.float32),
        "g1_convk1_b": 0.1 * jax.random.normal(keys[4], (1,), jnp.float32),
        "g1_bn2": _make_bn_params(keys[5], 1),
        "g2_convk1_w": 0.2 * jax.random.normal(keys[6], (M, C, K, 1), jnp.float32),
        "g2_convk1_b": 0.1 * jax.random.normal(keys[7], (M,), jnp.float32),
        "g2_bn1": _make_bn_params(keys[8], M),
        "g2_conv1k_w": 0.2 * jax.random.normal(keys[9], (1, M, 1, K), jnp.float32),
        "g2_conv1k_b": 0.1 * jax.random.normal(keys[10], (1,), jnp.float32),
        "g2_bn2": _make_bn_params(keys[11], 1),
    }
    x = jax.random.normal(keys[12], (N, C, H, W), jnp.float32)

    out = jax.block_until_ready(spatial_attention(x, params, kernel_size=K))

    ref = jax.block_until_ready(_reference_spatial_attention(x, params, kernel_size=K))
    assert out.shape == x.shape
    np.testing.assert_allclose(np.asarray(out), np.asarray(ref), rtol=1e-4, atol=1e-5)

    print("KERNEL_OK")
</pallas_src>

<mosaic_0001>
module attributes {stable_mosaic.version = 11 : i64} {
  func.func @_spatial_attention_kernel(%arg0: i32, %arg1: memref<1x4x16x16xf32, #tpu.memory_space<vmem>>, %arg2: memref<72xf32, #tpu.memory_space<smem>>, %arg3: memref<2xf32, #tpu.memory_space<smem>>, %arg4: memref<18xf32, #tpu.memory_space<smem>>, %arg5: memref<1xf32, #tpu.memory_space<smem>>, %arg6: memref<72xf32, #tpu.memory_space<smem>>, %arg7: memref<2xf32, #tpu.memory_space<smem>>, %arg8: memref<18xf32, #tpu.memory_space<smem>>, %arg9: memref<1xf32, #tpu.memory_space<smem>>, %arg10: memref<1x1x16x16xf32, #tpu.memory_space<vmem>>, %arg11: memref<4x24x24xf32, #tpu.memory_space<vmem>>, %arg12: memref<2x24x16xf32, #tpu.memory_space<vmem>>, %arg13: memref<2x16x24xf32, #tpu.memory_space<vmem>>) attributes {dimension_semantics = [#tpu.dimension_semantics<parallel>], iteration_bounds = array<i64: 2>, scalar_prefetch = 0 : i64, scratch_operands = 3 : i64, tpu.core_type = #tpu.core_type<tc>, window_params = [{transform_indices = @transform_0, window_bounds = array<i64: 1, 4, 16, 16>}, {transform_indices = @transform_1, window_bounds = array<i64: 72>}, {transform_indices = @transform_2, window_bounds = array<i64: 2>}, {transform_indices = @transform_3, window_bounds = array<i64: 18>}, {transform_indices = @transform_4, window_bounds = array<i64: 1>}, {transform_indices = @transform_5, window_bounds = array<i64: 72>}, {transform_indices = @transform_6, window_bounds = array<i64: 2>}, {transform_indices = @transform_7, window_bounds = array<i64: 18>}, {transform_indices = @transform_8, window_bounds = array<i64: 1>}, {transform_indices = @transform_9, window_bounds = array<i64: 1, 1, 16, 16>}]} {
    %cst = arith.constant 0.000000e+00 : f32
    %0 = vector.broadcast %cst : f32 to vector<4x4x24xf32>
    %c0 = arith.constant 0 : index
    %c0_0 = arith.constant 0 : index
    %c0_1 = arith.constant 0 : index
    %1 = vector.load %arg11[%c0, %c0_0, %c0_1] : memref<4x24x24xf32, #tpu.memory_space<vmem>>, vector<4x4x24xf32>
    tpu.vector_store %arg11[%c0, %c0_0, %c0_1], %0 {strides = array<i32>} : memref<4x24x24xf32, #tpu.memory_space<vmem>>, vector<4x4x24xf32>,
    %cst_2 = arith.constant 0.000000e+00 : f32
    %2 = vector.broadcast %cst_2 : f32 to vector<4x4x24xf32>
    %c0_3 = arith.constant 0 : index
    %c20 = arith.constant 20 : index
    %c0_4 = arith.constant 0 : index
    %3 = vector.load %arg11[%c0_3, %c20, %c0_4] : memref<4x24x24xf32, #tpu.memory_space<vmem>>, vector<4x4x24xf32>
    tpu.vector_store %arg11[%c0_3, %c20, %c0_4], %2 {strides = array<i32>} : memref<4x24x24xf32, #tpu.memory_space<vmem>>, vector<4x4x24xf32>,
    %cst_5 = arith.constant 0.000000e+00 : f32
    %4 = vector.broadcast %cst_5 : f32 to vector<4x24x4xf32>
    %c0_6 = arith.constant 0 : index
    %c0_7 = arith.constant 0 : index
    %c0_8 = arith.constant 0 : index
    %5 = vector.load %arg11[%c0_6, %c0_7, %c0_8] : memref<4x24x24xf32, #tpu.memory_space<vmem>>, vector<4x24x4xf32>
    tpu.vector_store %arg11[%c0_6, %c0_7, %c0_8], %4 {strides = array<i32>} : memref<4x24x24xf32, #tpu.memory_space<vmem>>, vector<4x24x4xf32>,
    %cst_9 = arith.constant 0.000000e+00 : f32
    %6 = vector.broadcast %cst_9 : f32 to vector<4x24x4xf32>
    %c0_10 = arith.constant 0 : index
    %c0_11 = arith.constant 0 : index
    %c20_12 = arith.constant 20 : index
    %7 = vector.load %arg11[%c0_10, %c0_11, %c20_12] : memref<4x24x24xf32, #tpu.memory_space<vmem>>, vector<4x24x4xf32>
    tpu.vector_store %arg11[%c0_10, %c0_11, %c20_12], %6 {strides = array<i32>} : memref<4x24x24xf32, #tpu.memory_space<vmem>>, vector<4x24x4xf32>,
    %c0_13 = arith.constant 0 : index
    %c0_14 = arith.constant 0 : index
    %c0_15 = arith.constant 0 : index
    %c0_16 = arith.constant 0 : index
    %8 = vector.load %arg1[%c0_13, %c0_14, %c0_15, %c0_16] : memref<1x4x16x16xf32, #tpu.memory_space<vmem>>, vector<1x4x16x16xf32>
    %9 = vector.shape_cast %8 : vector<1x4x16x16xf32> to vector<4x16x16xf32>
    %c0_17 = arith.constant 0 : index
    %c4 = arith.constant 4 : index
    %c4_18 = arith.constant 4 : index
    %10 = vector.load %arg11[%c0_17, %c4, %c4_18] : memref<4x24x24xf32, #tpu.memory_space<vmem>>, vector<4x16x16xf32>
    tpu.vector_store %arg11[%c0_17, %c4, %c4_18], %9 {strides = array<i32>} : memref<4x24x24xf32, #tpu.memory_space<vmem>>, vector<4x16x16xf32>,
    %cst_19 = arith.constant 0.000000e+00 : f32
    %11 = vector.broadcast %cst_19 : f32 to vector<2x4x16xf32>
    %c0_20 = arith.constant 0 : index
    %c0_21 = arith.constant 0 : index
    %c0_22 = arith.constant 0 : index
    %12 = vector.load %arg12[%c0_20, %c0_21, %c0_22] : memref<2x24x16xf32, #tpu.memory_space<vmem>>, vector<2x4x16xf32>
    tpu.vector_store %arg12[%c0_20, %c0_21, %c0_22], %11 {strides = array<i32>} : memref<2x24x16xf32, #tpu.memory_space<vmem>>, vector<2x4x16xf32>,
    %cst_23 = arith.constant 0.000000e+00 : f32
    %13 = vector.broadcast %cst_23 : f32 to vector<2x4x16xf32>
    %c0_24 = arith.constant 0 : index
    %c20_25 = arith.constant 20 : index
    %c0_26 = arith.constant 0 : index
    %14 = vector.load %arg12[%c0_24, %c20_25, %c0_26] : memref<2x24x16xf32, #tpu.memory_space<vmem>>, vector<2x4x16xf32>
    tpu.vector_store %arg12[%c0_24, %c20_25, %c0_26], %13 {strides = array<i32>} : memref<2x24x16xf32, #tpu.memory_space<vmem>>, vector<2x4x16xf32>,
    %cst_27 = arith.constant 0.000000e+00 : f32
    %15 = vector.broadcast %cst_27 : f32 to vector<2x16x4xf32>
    %c0_28 = arith.constant 0 : index
    %c0_29 = arith.constant 0 : index
    %c0_30 = arith.constant 0 : index
    %16 = vector.load %arg13[%c0_28, %c0_29, %c0_30] : memref<2x16x24xf32, #tpu.memory_space<vmem>>, vector<2x16x4xf32>
    tpu.vector_store %arg13[%c0_28, %c0_29, %c0_30], %15 {strides = array<i32>} : memref<2x16x24xf32, #tpu.memory_space<vmem>>, vector<2x16x4xf32>,
    %cst_31 = arith.constant 0.000000e+00 : f32
    %17 = vector.broadcast %cst_31 : f32 to vector<2x16x4xf32>
    %c0_32 = arith.constant 0 : index
    %c0_33 = arith.constant 0 : index
    %c20_34 = arith.constant 20 : index
    %18 = vector.load %arg13[%c0_32, %c0_33, %c20_34] : memref<2x16x24xf32, #tpu.memory_space<vmem>>, vector<2x16x4xf32>
    tpu.vector_store %arg13[%c0_32, %c0_33, %c20_34], %17 {strides = array<i32>} : memref<2x16x24xf32, #tpu.memory_space<vmem>>, vector<2x16x4xf32>,
    %cst_35 = arith.constant 0.000000e+00 : f32
    %19 = vector.broadcast %cst_35 : f32 to vector<16x16xf32>
    %c0_36 = arith.constant 0 : index
    %20 = memref.load %arg2[%c0_36] : memref<72xf32, #tpu.memory_space<smem>>
    %c0_37 = arith.constant 0 : index
    %c4_38 = arith.constant 4 : index
    %c0_39 = arith.constant 0 : index
    %21 = vector.load %arg11[%c0_37, %c4_38, %c0_39] : memref<4x24x24xf32, #tpu.memory_space<vmem>>, vector<1x16x16xf32>
    %22 = vector.shape_cast %21 : vector<1x16x16xf32> to vector<16x16xf32>
    %23 = vector.broadcast %20 : f32 to vector<16x16xf32>
    %24 = arith.mulf %23, %22 : vector<16x16xf32>
    %25 = arith.addf %19, %24 : vector<16x16xf32>
    %c1 = arith.constant 1 : index
    %26 = memref.load %arg2[%c1] : memref<72xf32, #tpu.memory_space<smem>>
    %c0_40 = arith.constant 0 : index
    %c4_41 = arith.constant 4 : index
    %c1_42 = arith.constant 1 : index
    %27 = vector.load %arg11[%c0_40, %c4_41, %c1_42] : memref<4x24x24xf32, #tpu.memory_space<vmem>>, vector<1x16x16xf32>
    %28 = vector.shape_cast %27 : vector<1x16x16xf32> to vector<16x16xf32>
    %29 = vector.broadcast %26 : f32 to vector<16x16xf32>
    %30 = arith.mulf %29, %28 : vector<16x16xf32>
    %31 = arith.addf %25, %30 : vector<16x16xf32>
    %c2 = arith.constant 2 : index
    %32 = memref.load %arg2[%c2] : memref<72xf32, #tpu.memory_space<smem>>
    %c0_43 = arith.constant 0 : index
    %c4_44 = arith.constant 4 : index
    %c2_45 = arith.constant 2 : index
    %33 = vector.load %arg11[%c0_43, %c4_44, %c2_45] : memref<4x24x24xf32, #tpu.memory_space<vmem>>, vector<1x16x16xf32>
    %34 = vector.shape_cast %33 : vector<1x16x16xf32> to vector<16x16xf32>
    %35 = vector.broadcast %32 : f32 to vector<16x16xf32>
    %36 = arith.mulf %35, %34 : vector<16x16xf32>
    %37 = arith.addf %31, %36 : vector<16x16xf32>
    %c3 = arith.constant 3 : index
    %38 = memref.load %arg2[%c3] : memref<72xf32, #tpu.memory_space<smem>>
    %c0_46 = arith.constant 0 : index
    %c4_47 = arith.constant 4 : index
    %c3_48 = arith.constant 3 : index
    %39 = vector.load %arg11[%c0_46, %c4_47, %c3_48] : memref<4x24x24xf32, #tpu.memory_space<vmem>>, vector<1x16x16xf32>
    %40 = vector.shape_cast %39 : vector<1x16x16xf32> to vector<16x16xf32>
    %41 = vector.broadcast %38 : f32 to vector<16x16xf32>
    %42 = arith.mulf %41, %40 : vector<16x16xf32>
    %43 = arith.addf %37, %42 : vector<16x16xf32>
    %c4_49 = arith.constant 4 : index
    %44 = memref.load %arg2[%c4_49] : memref<72xf32, #tpu.memory_space<smem>>
    %c0_50 = arith.constant 0 : index
    %c4_51 = arith.constant 4 : index
    %c4_52 = arith.constant 4 : index
    %45 = vector.load %arg11[%c0_50, %c4_51, %c4_52] : memref<4x24x24xf32, #tpu.memory_space<vmem>>, vector<1x16x16xf32>
    %46 = vector.shape_cast %45 : vector<1x16x16xf32> to vector<16x16xf32>
    %47 = vector.broadcast %44 : f32 to vector<16x16xf32>
    %48 = arith.mulf %47, %46 : vector<16x16xf32>
    %49 = arith.addf %43, %48 : vector<16x16xf32>
    %c5 = arith.constant 5 : index
    %50 = memref.load %arg2[%c5] : memref<72xf32, #tpu.memory_space<smem>>
    %c0_53 = arith.constant 0 : index
    %c4_54 = arith.constant 4 : index
    %c5_55 = arith.constant 5 : index
    %51 = vector.load %arg11[%c0_53, %c4_54, %c5_55] : memref<4x24x24xf32, #tpu.memory_space<vmem>>, vector<1x16x16xf32>
    %52 = vector.shape_cast %51 : vector<1x16x16xf32> to vector<16x16xf32>
    %53 = vector.broadcast %50 : f32 to vector<16x16xf32>
    %54 = arith.mulf %53, %52 : vector<16x16xf32>
    %55 = arith.addf %49, %54 : vector<16x16xf32>
    %c6 = arith.constant 6 : index
    %56 = memref.load %arg2[%c6] : memref<72xf32, #tpu.memory_space<smem>>
    %c0_56 = arith.constant 0 : index
    %c4_57 = arith.constant 4 : index
    %c6_58 = arith.constant 6 : index
    %57 = vector.load %arg11[%c0_56, %c4_57, %c6_58] : memref<4x24x24xf32, #tpu.memory_space<vmem>>, vector<1x16x16xf32>
    %58 = vector.shape_cast %57 : vector<1x16x16xf32> to vector<16x16xf32>
    %59 = vector.broadcast %56 : f32 to vector<16x16xf32>
    %60 = arith.mulf %59, %58 : vector<16x16xf32>
    %61 = arith.addf %55, %60 : vector<16x16xf32>
    %c7 = arith.constant 7 : index
    %62 = memref.load %arg2[%c7] : memref<72xf32, #tpu.memory_space<smem>>
    %c0_59 = arith.constant 0 : index
    %c4_60 = arith.constant 4 : index
    %c7_61 = arith.constant 7 : index
    %63 = vector.load %arg11[%c0_59, %c4_60, %c7_61] : memref<4x24x24xf32, #tpu.memory_space<vmem>>, vector<1x16x16xf32>
    %64 = vector.shape_cast %63 : vector<1x16x16xf32> to vector<16x16xf32>
    %65 = vector.broadcast %62 : f32 to vector<16x16xf32>
    %66 = arith.mulf %65, %64 : vector<16x16xf32>
    %67 = arith.addf %61, %66 : vector<16x16xf32>
    %c8 = arith.constant 8 : index
    %68 = memref.load %arg2[%c8] : memref<72xf32, #tpu.memory_space<smem>>
    %c0_62 = arith.constant 0 : index
    %c4_63 = arith.constant 4 : index
    %c8_64 = arith.constant 8 : index
    %69 = vector.load %arg11[%c0_62, %c4_63, %c8_64] : memref<4x24x24xf32, #tpu.memory_space<vmem>>, vector<1x16x16xf32>
    %70 = vector.shape_cast %69 : vector<1x16x16xf32> to vector<16x16xf32>
    %71 = vector.broadcast %68 : f32 to vector<16x16xf32>
    %72 = arith.mulf %71, %70 : vector<16x16xf32>
    %73 = arith.addf %67, %72 : vector<16x16xf32>
    %c9 = arith.constant 9 : index
    %74 = memref.load %arg2[%c9] : memref<72xf32, #tpu.memory_space<smem>>
    %c1_65 = arith.constant 1 : index
    %c4_66 = arith.constant 4 : index
    %c0_67 = arith.constant 0 : index
    %75 = vector.load %arg11[%c1_65, %c4_66, %c0_67] : memref<4x24x24xf32, #tpu.memory_space<vmem>>, vector<1x16x16xf32>
    %76 = vector.shape_cast %75 : vector<1x16x16xf32> to vector<16x16xf32>
    %77 = vector.broadcast %74 : f32 to vector<16x16xf32>
    %78 = arith.mulf %77, %76 : vector<16x16xf32>
    %79 = arith.addf %73, %78 : vector<16x16xf32>
    %c10 = arith.constant 10 : index
    %80 = memref.load %arg2[%c10] : memref<72xf32, #tpu.memory_space<smem>>
    %c1_68 = arith.constant 1 : index
    %c4_69 = arith.constant 4 : index
    %c1_70 = arith.constant 1 : index
    %81 = vector.load %arg11[%c1_68, %c4_69, %c1_70] : memref<4x24x24xf32, #tpu.memory_space<vmem>>, vector<1x16x16xf32>
    %82 = vector.shape_cast %81 : vector<1x16x16xf32> to vector<16x16xf32>
    %83 = vector.broadcast %80 : f32 to vector<16x16xf32>
    %84 = arith.mulf %83, %82 : vector<16x16xf32>
    %85 = arith.addf %79, %84 : vector<16x16xf32>
    %c11 = arith.constant 11 : index
    %86 = memref.load %arg2[%c11] : memref<72xf32, #tpu.memory_space<smem>>
    %c1_71 = arith.constant 1 : index
    %c4_72 = arith.constant 4 : index
    %c2_73 = arith.constant 2 : index
    %87 = vector.load %arg11[%c1_71, %c4_72, %c2_73] : memref<4x24x24xf32, #tpu.memory_space<vmem>>, vector<1x16x16xf32>
    %88 = vector.shape_cast %87 : vector<1x16x16xf32> to vector<16x16xf32>
    %89 = vector.broadcast %86 : f32 to vector<16x16xf32>
    %90 = arith.mulf %89, %88 : vector<16x16xf32>
    %91 = arith.addf %85, %90 : vector<16x16xf32>
    %c12 = arith.constant 12 : index
    %92 = memref.load %arg2[%c12] : memref<72xf32, #tpu.memory_space<smem>>
    %c1_74 = arith.constant 1 : index
    %c4_75 = arith.constant 4 : index
    %c3_76 = arith.constant 3 : index
    %93 = vector.load %arg11[%c1_74, %c4_75, %c3_76] : memref<4x24x24xf32, #tpu.memory_space<vmem>>, vector<1x16x16xf32>
    %94 = vector.shape_cast %93 : vector<1x16x16xf32> to vector<16x16xf32>
    %95 = vector.broadcast %92 : f32 to vector<16x16xf32>
    %96 = arith.mulf %95, %94 : vector<16x16xf32>
    %97 = arith.addf %91, %96 : vector<16x16xf32>
    %c13 = arith.constant 13 : index
    %98 = memref.load %arg2[%c13] : memref<72xf32, #tpu.memory_space<smem>>
    %c1_77 = arith.constant 1 : index
    %c4_78 = arith.constant 4 : index
    %c4_79 = arith.constant 4 : index
    %99 = vector.load %arg11[%c1_77, %c4_78, %c4_79] : memref<4x24x24xf32, #tpu.memory_space<vmem>>, vector<1x16x16xf32>
    %100 = vector.shape_cast %99 : vector<1x16x16xf32> to vector<16x16xf32>
    %101 = vector.broadcast %98 : f32 to vector<16x16xf32>
    %102 = arith.mulf %101, %100 : vector<16x16xf32>
    %103 = arith.addf %97, %102 : vector<16x16xf32>
    %c14 = arith.constant 14 : index
    %104 = memref.load %arg2[%c14] : memref<72xf32, #tpu.memory_space<smem>>
    %c1_80 = arith.constant 1 : index
    %c4_81 = arith.constant 4 : index
    %c5_82 = arith.constant 5 : index
    %105 = vector.load %arg11[%c1_80, %c4_81, %c5_82] : memref<4x24x24xf32, #tpu.memory_space<vmem>>, vector<1x16x16xf32>
    %106 = vector.shape_cast %105 : vector<1x16x16xf32> to vector<16x16xf32>
    %107 = vector.broadcast %104 : f32 to vector<16x16xf32>
    %108 = arith.mulf %107, %106 : vector<16x16xf32>
    %109 = arith.addf %103, %108 : vector<16x16xf32>
    %c15 = arith.constant 15 : index
    %110 = memref.load %arg2[%c15] : memref<72xf32, #tpu.memory_space<smem>>
    %c1_83 = arith.constant 1 : index
    %c4_84 = arith.constant 4 : index
    %c6_85 = arith.constant 6 : index
    %111 = vector.load %arg11[%c1_83, %c4_84, %c6_85] : memref<4x24x24xf32, #tpu.memory_space<vmem>>, vector<1x16x16xf32>
    %112 = vector.shape_cast %111 : vector<1x16x16xf32> to vector<16x16xf32>
    %113 = vector.broadcast %110 : f32 to vector<16x16xf32>
    %114 = arith.mulf %113, %112 : vector<16x16xf32>
    %115 = arith.addf %109, %114 : vector<16x16xf32>
    %c16 = arith.constant 16 : index
    %116 = memref.load %arg2[%c16] : memref<72xf32, #tpu.memory_space<smem>>
    %c1_86 = arith.constant 1 : index
    %c4_87 = arith.constant 4 : index
    %c7_88 = arith.constant 7 : index
    %117 = vector.load %arg11[%c1_86, %c4_87, %c7_88] : memref<4x24x24xf32, #tpu.memory_space<vmem>>, vector<1x16x16xf32>
    %118 = vector.shape_cast %117 : vector<1x16x16xf32> to vector<16x16xf32>
    %119 = vector.broadcast %116 : f32 to vector<16x16xf32>
    %120 = arith.mulf %119, %118 : vector<16x16xf32>
    %121 = arith.addf %115, %120 : vector<16x16xf32>
    %c17 = arith.constant 17 : index
    %122 = memref.load %arg2[%c17] : memref<72xf32, #tpu.memory_space<smem>>
    %c1_89 = arith.constant 1 : index
    %c4_90 = arith.constant 4 : index
    %c8_91 = arith.constant 8 : index
    %123 = vector.load %arg11[%c1_89, %c4_90, %c8_91] : memref<4x24x24xf32, #tpu.memory_space<vmem>>, vector<1x16x16xf32>
    %124 = vector.shape_cast %123 : vector<1x16x16xf32> to vector<16x16xf32>
    %125 = vector.broadcast %122 : f32 to vector<16x16xf32>
    %126 = arith.mulf %125, %124 : vector<16x16xf32>
    %127 = arith.addf %121, %126 : vector<16x16xf32>
    %c18 = arith.constant 18 : index
    %128 = memref.load %arg2[%c18] : memref<72xf32, #tpu.memory_space<smem>>
    %c2_92 = arith.constant 2 : index
    %c4_93 = arith.constant 4 : index
    %c0_94 = arith.constant 0 : index
    %129 = vector.load %arg11[%c2_92, %c4_93, %c0_94] : memref<4x24x24xf32, #tpu.memory_space<vmem>>, vector<1x16x16xf32>
    %130 = vector.shape_cast %129 : vector<1x16x16xf32> to vector<16x16xf32>
    %131 = vector.broadcast %128 : f32 to vector<16x16xf32>
    %132 = arith.mulf %131, %130 : vector<16x16xf32>
    %133 = arith.addf %127, %132 : vector<16x16xf32>
    %c19 = arith.constant 19 : index
    %134 = memref.load %arg2[%c19] : memref<72xf32, #tpu.memory_space<smem>>
    %c2_95 = arith.constant 2 : index
    %c4_96 = arith.constant 4 : index
    %c1_97 = arith.constant 1 : index
    %135 = vector.load %arg11[%c2_95, %c4_96, %c1_97] : memref<4x24x24xf32, #tpu.memory_space<vmem>>, vector<1x16x16xf32>
    %136 = vector.shape_cast %135 : vector<1x16x16xf32> to vector<16x16xf32>
    %137 = vector.broadcast %134 : f32 to vector<16x16xf32>
    %138 = arith.mulf %137, %136 : vector<16x16xf32>
    %139 = arith.addf %133, %138 : vector<16x16xf32>
    %c20_98 = arith.constant 20 : index
    %140 = memref.load %arg2[%c20_98] : memref<72xf32, #tpu.memory_space<smem>>
    %c2_99 = arith.constant 2 : index
    %c4_100 = arith.constant 4 : index
    %c2_101 = arith.constant 2 : index
    %141 = vector.load %arg11[%c2_99, %c4_100, %c2_101] : memref<4x24x24xf32, #tpu.memory_space<vmem>>, vector<1x16x16xf32>
    %142 = vector.shape_cast %141 : vector<1x16x16xf32> to vector<16x16xf32>
    %143 = vector.broadcast %140 : f32 to vector<16x16xf32>
    %144 = arith.mulf %143, %142 : vector<16x16xf32>
    %145 = arith.addf %139, %144 : vector<16x16xf32>
    %c21 = arith.constant 21 : index
    %146 = memref.load %arg2[%c21] : memref<72xf32, #tpu.memory_space<smem>>
    %c2_102 = arith.constant 2 : index
    %c4_103 = arith.constant 4 : index
    %c3_104 = arith.constant 3 : index
    %147 = vector.load %arg11[%c2_102, %c4_103, %c3_104] : memref<4x24x24xf32, #tpu.memory_space<vmem>>, vector<1x16x16xf32>
    %148 = vector.shape_cast %147 : vector<1x16x16xf32> to vector<16x16xf32>
    %149 = vector.broadcast %146 : f32 to vector<16x16xf32>
    %150 = arith.mulf %149, %148 : vector<16x16xf32>
    %151 = arith.addf %145, %150 : vector<16x16xf32>
    %c22 = arith.constant 22 : index
    %152 = memref.load %arg2[%c22] : memref<72xf32, #tpu.memory_space<smem>>
    %c2_105 = arith.constant 2 : index
    %c4_106 = arith.constant 4 : index
    %c4_107 = arith.constant 4 : index
    %153 = vector.load %arg11[%c2_105, %c4_106, %c4_107] : memref<4x24x24xf32, #tpu.memory_space<vmem>>, vector<1x16x16xf32>
    %154 = vector.shape_cast %153 : vector<1x16x16xf32> to vector<16x16xf32>
    %155 = vector.broadcast %152 : f32 to vector<16x16xf32>
    %156 = arith.mulf %155, %154 : vector<16x16xf32>
    %157 = arith.addf %151, %156 : vector<16x16xf32>
    %c23 = arith.constant 23 : index
    %158 = memref.load %arg2[%c23] : memref<72xf32, #tpu.memory_space<smem>>
    %c2_108 = arith.constant 2 : index
    %c4_109 = arith.constant 4 : index
    %c5_110 = arith.constant 5 : index
    %159 = vector.load %arg11[%c2_108, %c4_109, %c5_110] : memref<4x24x24xf32, #tpu.memory_space<vmem>>, vector<1x16x16xf32>
    %160 = vector.shape_cast %159 : vector<1x16x16xf32> to vector<16x16xf32>
    %161 = vector.broadcast %158 : f32 to vector<16x16xf32>
    %162 = arith.mulf %161, %160 : vector<16x16xf32>
    %163 = arith.addf %157, %162 : vector<16x16xf32>
    %c24 = arith.constant 24 : index
    %164 = memref.load %arg2[%c24] : memref<72xf32, #tpu.memory_space<smem>>
    %c2_111 = arith.constant 2 : index
    %c4_112 = arith.constant 4 : index
    %c6_113 = arith.constant 6 : index
    %165 = vector.load %arg11[%c2_111, %c4_112, %c6_113] : memref<4x24x24xf32, #tpu.memory_space<vmem>>, vector<1x16x16xf32>
    %166 = vector.shape_cast %165 : vector<1x16x16xf32> to vector<16x16xf32>
    %167 = vector.broadcast %164 : f32 to vector<16x16xf32>
    %168 = arith.mulf %167, %166 : vector<16x16xf32>
    %169 = arith.addf %163, %168 : vector<16x16xf32>
    %c25 = arith.constant 25 : index
    %170 = memref.load %arg2[%c25] : memref<72xf32, #tpu.memory_space<smem>>
    %c2_114 = arith.constant 2 : index
    %c4_115 = arith.constant 4 : index
    %c7_116 = arith.constant 7 : index
    %171 = vector.load %arg11[%c2_114, %c4_115, %c7_116] : memref<4x24x24xf32, #tpu.memory_space<vmem>>, vector<1x16x16xf32>
    %172 = vector.shape_cast %171 : vector<1x16x16xf32> to vector<16x16xf32>
    %173 = vector.broadcast %170 : f32 to vector<16x16xf32>
    %174 = arith.mulf %173, %172 : vector<16x16xf32>
    %175 = arith.addf %169, %174 : vector<16x16xf32>
    %c26 = arith.constant 26 : index
    %176 = memref.load %arg2[%c26] : memref<72xf32, #tpu.memory_space<smem>>
    %c2_117 = arith.constant 2 : index
    %c4_118 = arith.constant 4 : index
    %c8_119 = arith.constant 8 : index
    %177 = vector.load %arg11[%c2_117, %c4_118, %c8_119] : memref<4x24x24xf32, #tpu.memory_space<vmem>>, vector<1x16x16xf32>
    %178 = vector.shape_cast %177 : vector<1x16x16xf32> to vector<16x16xf32>
    %179 = vector.broadcast %176 : f32 to vector<16x16xf32>
    %180 = arith.mulf %179, %178 : vector<16x16xf32>
    %181 = arith.addf %175, %180 : vector<16x16xf32>
    %c27 = arith.constant 27 : index
    %182 = memref.load %arg2[%c27] : memref<72xf32, #tpu.memory_space<smem>>
    %c3_120 = arith.constant 3 : index
    %c4_121 = arith.constant 4 : index
    %c0_122 = arith.constant 0 : index
    %183 = vector.load %arg11[%c3_120, %c4_121, %c0_122] : memref<4x24x24xf32, #tpu.memory_space<vmem>>, vector<1x16x16xf32>
    %184 = vector.shape_cast %183 : vector<1x16x16xf32> to vector<16x16xf32>
    %185 = vector.broadcast %182 : f32 to vector<16x16xf32>
    %186 = arith.mulf %185, %184 : vector<16x16xf32>
    %187 = arith.addf %181, %186 : vector<16x16xf32>
    %c28 = arith.constant 28 : index
    %188 = memref.load %arg2[%c28] : memref<72xf32, #tpu.memory_space<smem>>
    %c3_123 = arith.constant 3 : index
    %c4_124 = arith.constant 4 : index
    %c1_125 = arith.constant 1 : index
    %189 = vector.load %arg11[%c3_123, %c4_124, %c1_125] : memref<4x24x24xf32, #tpu.memory_space<vmem>>, vector<1x16x16xf32>
    %190 = vector.shape_cast %189 : vector<1x16x16xf32> to vector<16x16xf32>
    %191 = vector.broadcast %188 : f32 to vector<16x16xf32>
    %192 = arith.mulf %191, %190 : vector<16x16xf32>
    %193 = arith.addf %187, %192 : vector<16x16xf32>
    %c29 = arith.constant 29 : index
    %194 = memref.load %arg2[%c29] : memref<72xf32, #tpu.memory_space<smem>>
    %c3_126 = arith.constant 3 : index
    %c4_127 = arith.constant 4 : index
    %c2_128 = arith.constant 2 : index
    %195 = vector.load %arg11[%c3_126, %c4_127, %c2_128] : memref<4x24x24xf32, #tpu.memory_space<vmem>>, vector<1x16x16xf32>
    %196 = vector.shape_cast %195 : vector<1x16x16xf32> to vector<16x16xf32>
    %197 = vector.broadcast %194 : f32 to vector<16x16xf32>
    %198 = arith.mulf %197, %196 : vector<16x16xf32>
    %199 = arith.addf %193, %198 : vector<16x16xf32>
    %c30 = arith.constant 30 : index
    %200 = memref.load %arg2[%c30] : memref<72xf32, #tpu.memory_space<smem>>
    %c3_129 = arith.constant 3 : index
    %c4_130 = arith.constant 4 : index
    %c3_131 = arith.constant 3 : index
    %201 = vector.load %arg11[%c3_129, %c4_130, %c3_131] : memref<4x24x24xf32, #tpu.memory_space<vmem>>, vector<1x16x16xf32>
    %202 = vector.shape_cast %201 : vector<1x16x16xf32> to vector<16x16xf32>
    %203 = vector.broadcast %200 : f32 to vector<16x16xf32>
    %204 = arith.mulf %203, %202 : vector<16x16xf32>
    %205 = arith.addf %199, %204 : vector<16x16xf32>
    %c31 = arith.constant 31 : index
    %206 = memref.load %arg2[%c31] : memref<72xf32, #tpu.memory_space<smem>>
    %c3_132 = arith.constant 3 : index
    %c4_133 = arith.constant 4 : index
    %c4_134 = arith.constant 4 : index
    %207 = vector.load %arg11[%c3_132, %c4_133, %c4_134] : memref<4x24x24xf32, #tpu.memory_space<vmem>>, vector<1x16x16xf32>
    %208 = vector.shape_cast %207 : vector<1x16x16xf32> to vector<16x16xf32>
    %209 = vector.broadcast %206 : f32 to vector<16x16xf32>
    %210 = arith.mulf %209, %208 : vector<16x16xf32>
    %211 = arith.addf %205, %210 : vector<16x16xf32>
    %c32 = arith.constant 32 : index
    %212 = memref.load %arg2[%c32] : memref<72xf32, #tpu.memory_space<smem>>
    %c3_135 = arith.constant 3 : index
    %c4_136 = arith.constant 4 : index
    %c5_137 = arith.constant 5 : index
    %213 = vector.load %arg11[%c3_135, %c4_136, %c5_137] : memref<4x24x24xf32, #tpu.memory_space<vmem>>, vector<1x16x16xf32>
    %214 = vector.shape_cast %213 : vector<1x16x16xf32> to vector<16x16xf32>
    %215 = vector.broadcast %212 : f32 to vector<16x16xf32>
    %216 = arith.mulf %215, %214 : vector<16x16xf32>
    %217 = arith.addf %211, %216 : vector<16x16xf32>
    %c33 = arith.constant 33 : index
    %218 = memref.load %arg2[%c33] : memref<72xf32, #tpu.memory_space<smem>>
    %c3_138 = arith.constant 3 : index
    %c4_139 = arith.constant 4 : index
    %c6_140 = arith.constant 6 : index
    %219 = vector.load %arg11[%c3_138, %c4_139, %c6_140] : memref<4x24x24xf32, #tpu.memory_space<vmem>>, vector<1x16x16xf32>
    %220 = vector.shape_cast %219 : vector<1x16x16xf32> to vector<16x16xf32>
    %221 = vector.broadcast %218 : f32 to vector<16x16xf32>
    %222 = arith.mulf %221, %220 : vector<16x16xf32>
    %223 = arith.addf %217, %222 : vector<16x16xf32>
    %c34 = arith.constant 34 : index
    %224 = memref.load %arg2[%c34] : memref<72xf32, #tpu.memory_space<smem>>
    %c3_141 = arith.constant 3 : index
    %c4_142 = arith.constant 4 : index
    %c7_143 = arith.constant 7 : index
    %225 = vector.load %arg11[%c3_141, %c4_142, %c7_143] : memref<4x24x24xf32, #tpu.memory_space<vmem>>, vector<1x16x16xf32>
    %226 = vector.shape_cast %225 : vector<1x16x16xf32> to vector<16x16xf32>
    %227 = vector.broadcast %224 : f32 to vector<16x16xf32>
    %228 = arith.mulf %227, %226 : vector<16x16xf32>
    %229 = arith.addf %223, %228 : vector<16x16xf32>
    %c35 = arith.constant 35 : index
    %230 = memref.load %arg2[%c35] : memref<72xf32, #tpu.memory_space<smem>>
    %c3_144 = arith.constant 3 : index
    %c4_145 = arith.constant 4 : index
    %c8_146 = arith.constant 8 : index
    %231 = vector.load %arg11[%c3_144, %c4_145, %c8_146] : memref<4x24x24xf32, #tpu.memory_space<vmem>>, vector<1x16x16xf32>
    %232 = vector.shape_cast %231 : vector<1x16x16xf32> to vector<16x16xf32>
    %233 = vector.broadcast %230 : f32 to vector<16x16xf32>
    %234 = arith.mulf %233, %232 : vector<16x16xf32>
    %235 = arith.addf %229, %234 : vector<16x16xf32>
    %c0_147 = arith.constant 0 : index
    %236 = memref.load %arg3[%c0_147] : memref<2xf32, #tpu.memory_space<smem>>
    %237 = vector.broadcast %236 : f32 to vector<16x16xf32>
    %238 = arith.addf %235, %237 : vector<16x16xf32>
    %cst_148 = arith.constant 0.000000e+00 : f32
    %239 = vector.broadcast %cst_148 : f32 to vector<16x16xf32>
    %240 = arith.maximumf %238, %239 : vector<16x16xf32>
    %c0_149 = arith.constant 0 : index
    %c4_150 = arith.constant 4 : index
    %c0_151 = arith.constant 0 : index
    %241 = vector.load %arg12[%c0_149, %c4_150, %c0_151] : memref<2x24x16xf32, #tpu.memory_space<vmem>>, vector<1x16x16xf32>
    %242 = vector.shape_cast %241 : vector<1x16x16xf32> to vector<16x16xf32>
    %243 = vector.shape_cast %240 : vector<16x16xf32> to vector<1x16x16xf32>
    tpu.vector_store %arg12[%c0_149, %c4_150, %c0_151], %243 {strides = array<i32>} : memref<2x24x16xf32, #tpu.memory_space<vmem>>, vector<1x16x16xf32>,
    %cst_152 = arith.constant 0.000000e+00 : f32
    %244 = vector.broadcast %cst_152 : f32 to vector<16x16xf32>
    %c36 = arith.constant 36 : index
    %245 = memref.load %arg2[%c36] : memref<72xf32, #tpu.memory_space<smem>>
    %c0_153 = arith.constant 0 : index
    %c4_154 = arith.constant 4 : index
    %c0_155 = arith.constant 0 : index
    %246 = vector.load %arg11[%c0_153, %c4_154, %c0_155] : memref<4x24x24xf32, #tpu.memory_space<vmem>>, vector<1x16x16xf32>
    %247 = vector.shape_cast %246 : vector<1x16x16xf32> to vector<16x16xf32>
    %248 = vector.broadcast %245 : f32 to vector<16x16xf32>
    %249 = arith.mulf %248, %247 : vector<16x16xf32>
    %250 = arith.addf %244, %249 : vector<16x16xf32>
    %c37 = arith.constant 37 : index
    %251 = memref.load %arg2[%c37] : memref<72xf32, #tpu.memory_space<smem>>
    %c0_156 = arith.constant 0 : index
    %c4_157 = arith.constant 4 : index
    %c1_158 = arith.constant 1 : index
    %252 = vector.load %arg11[%c0_156, %c4_157, %c1_158] : memref<4x24x24xf32, #tpu.memory_space<vmem>>, vector<1x16x16xf32>
    %253 = vector.shape_cast %252 : vector<1x16x16xf32> to vector<16x16xf32>
    %254 = vector.broadcast %251 : f32 to vector<16x16xf32>
    %255 = arith.mulf %254, %253 : vector<16x16xf32>
    %256 = arith.addf %250, %255 : vector<16x16xf32>
    %c38 = arith.constant 38 : index
    %257 = memref.load %arg2[%c38] : memref<72xf32, #tpu.memory_space<smem>>
    %c0_159 = arith.constant 0 : index
    %c4_160 = arith.constant 4 : index
    %c2_161 = arith.constant 2 : index
    %258 = vector.load %arg11[%c0_159, %c4_160, %c2_161] : memref<4x24x24xf32, #tpu.memory_space<vmem>>, vector<1x16x16xf32>
    %259 = vector.shape_cast %258 : vector<1x16x16xf32> to vector<16x16xf32>
    %260 = vector.broadcast %257 : f32 to vector<16x16xf32>
    %261 = arith.mulf %260, %259 : vector<16x16xf32>
    %262 = arith.addf %256, %261 : vector<16x16xf32>
    %c39 = arith.constant 39 : index
    %263 = memref.load %arg2[%c39] : memref<72xf32, #tpu.memory_space<smem>>
    %c0_162 = arith.constant 0 : index
    %c4_163 = arith.constant 4 : index
    %c3_164 = arith.constant 3 : index
    %264 = vector.load %arg11[%c0_162, %c4_163, %c3_164] : memref<4x24x24xf32, #tpu.memory_space<vmem>>, vector<1x16x16xf32>
    %265 = vector.shape_cast %264 : vector<1x16x16xf32> to vector<16x16xf32>
    %266 = vector.broadcast %263 : f32 to vector<16x16xf32>
    %267 = arith.mulf %266, %265 : vector<16x16xf32>
    %268 = arith.addf %262, %267 : vector<16x16xf32>
    %c40 = arith.constant 40 : index
    %269 = memref.load %arg2[%c40] : memref<72xf32, #tpu.memory_space<smem>>
    %c0_165 = arith.constant 0 : index
    %c4_166 = arith.constant 4 : index
    %c4_167 = arith.constant 4 : index
    %270 = vector.load %arg11[%c0_165, %c4_166, %c4_167] : memref<4x24x24xf32, #tpu.memory_space<vmem>>, vector<1x16x16xf32>
    %271 = vector.shape_cast %270 : vector<1x16x16xf32> to vector<16x16xf32>
    %272 = vector.broadcast %269 : f32 to vector<16x16xf32>
    %273 = arith.mulf %272, %271 : vector<16x16xf32>
    %274 = arith.addf %268, %273 : vector<16x16xf32>
    %c41 = arith.constant 41 : index
    %275 = memref.load %arg2[%c41] : memref<72xf32, #tpu.memory_space<smem>>
    %c0_168 = arith.constant 0 : index
    %c4_169 = arith.constant 4 : index
    %c5_170 = arith.constant 5 : index
    %276 = vector.load %arg11[%c0_168, %c4_169, %c5_170] : memref<4x24x24xf32, #tpu.memory_space<vmem>>, vector<1x16x16xf32>
    %277 = vector.shape_cast %276 : vector<1x16x16xf32> to vector<16x16xf32>
    %278 = vector.broadcast %275 : f32 to vector<16x16xf32>
    %279 = arith.mulf %278, %277 : vector<16x16xf32>
    %280 = arith.addf %274, %279 : vector<16x16xf32>
    %c42 = arith.constant 42 : index
    %281 = memref.load %arg2[%c42] : memref<72xf32, #tpu.memory_space<smem>>
    %c0_171 = arith.constant 0 : index
    %c4_172 = arith.constant 4 : index
    %c6_173 = arith.constant 6 : index
    %282 = vector.load %arg11[%c0_171, %c4_172, %c6_173] : memref<4x24x24xf32, #tpu.memory_space<vmem>>, vector<1x16x16xf32>
    %283 = vector.shape_cast %282 : vector<1x16x16xf32> to vector<16x16xf32>
    %284 = vector.broadcast %281 : f32 to vector<16x16xf32>
    %285 = arith.mulf %284, %283 : vector<16x16xf32>
    %286 = arith.addf %280, %285 : vector<16x16xf32>
    %c43 = arith.constant 43 : index
    %287 = memref.load %arg2[%c43] : memref<72xf32, #tpu.memory_space<smem>>
    %c0_174 = arith.constant 0 : index
    %c4_175 = arith.constant 4 : index
    %c7_176 = arith.constant 7 : index
    %288 = vector.load %arg11[%c0_174, %c4_175, %c7_176] : memref<4x24x24xf32, #tpu.memory_space<vmem>>, vector<1x16x16xf32>
    %289 = vector.shape_cast %288 : vector<1x16x16xf32> to vector<16x16xf32>
    %290 = vector.broadcast %287 : f32 to vector<16x16xf32>
    %291 = arith.mulf %290, %289 : vector<16x16xf32>
    %292 = arith.addf %286, %291 : vector<16x16xf32>
    %c44 = arith.constant 44 : index
    %293 = memref.load %arg2[%c44] : memref<72xf32, #tpu.memory_space<smem>>
    %c0_177 = arith.constant 0 : index
    %c4_178 = arith.constant 4 : index
    %c8_179 = arith.constant 8 : index
    %294 = vector.load %arg11[%c0_177, %c4_178, %c8_179] : memref<4x24x24xf32, #tpu.memory_space<vmem>>, vector<1x16x16xf32>
    %295 = vector.shape_cast %294 : vector<1x16x16xf32> to vector<16x16xf32>
    %296 = vector.broadcast %293 : f32 to vector<16x16xf32>
    %297 = arith.mulf %296, %295 : vector<16x16xf32>
    %298 = arith.addf %292, %297 : vector<16x16xf32>
    %c45 = arith.constant 45 : index
    %299 = memref.load %arg2[%c45] : memref<72xf32, #tpu.memory_space<smem>>
    %c1_180 = arith.constant 1 : index
    %c4_181 = arith.constant 4 : index
    %c0_182 = arith.constant 0 : index
    %300 = vector.load %arg11[%c1_180, %c4_181, %c0_182] : memref<4x24x24xf32, #tpu.memory_space<vmem>>, vector<1x16x16xf32>
    %301 = vector.shape_cast %300 : vector<1x16x16xf32> to vector<16x16xf32>
    %302 = vector.broadcast %299 : f32 to vector<16x16xf32>
    %303 = arith.mulf %302, %301 : vector<16x16xf32>
    %304 = arith.addf %298, %303 : vector<16x16xf32>
    %c46 = arith.constant 46 : index
    %305 = memref.load %arg2[%c46] : memref<72xf32, #tpu.memory_space<smem>>
    %c1_183 = arith.constant 1 : index
    %c4_184 = arith.constant 4 : index
    %c1_185 = arith.constant 1 : index
    %306 = vector.load %arg11[%c1_183, %c4_184, %c1_185] : memref<4x24x24xf32, #tpu.memory_space<vmem>>, vector<1x16x16xf32>
    %307 = vector.shape_cast %306 : vector<1x16x16xf32> to vector<16x16xf32>
    %308 = vector.broadcast %305 : f32 to vector<16x16xf32>
    %309 = arith.mulf %308, %307 : vector<16x16xf32>
    %310 = arith.addf %304, %309 : vector<16x16xf32>
    %c47 = arith.constant 47 : index
    %311 = memref.load %arg2[%c47] : memref<72xf32, #tpu.memory_space<smem>>
    %c1_186 = arith.constant 1 : index
    %c4_187 = arith.constant 4 : index
    %c2_188 = arith.constant 2 : index
    %312 = vector.load %arg11[%c1_186, %c4_187, %c2_188] : memref<4x24x24xf32, #tpu.memory_space<vmem>>, vector<1x16x16xf32>
    %313 = vector.shape_cast %312 : vector<1x16x16xf32> to vector<16x16xf32>
    %314 = vector.broadcast %311 : f32 to vector<16x16xf32>
    %315 = arith.mulf %314, %313 : vector<16x16xf32>
    %316 = arith.addf %310, %315 : vector<16x16xf32>
    %c48 = arith.constant 48 : index
    %317 = memref.load %arg2[%c48] : memref<72xf32, #tpu.memory_space<smem>>
    %c1_189 = arith.constant 1 : index
    %c4_190 = arith.constant 4 : index
    %c3_191 = arith.constant 3 : index
    %318 = vector.load %arg11[%c1_189, %c4_190, %c3_191] : memref<4x24x24xf32, #tpu.memory_space<vmem>>, vector<1x16x16xf32>
    %319 = vector.shape_cast %318 : vector<1x16x16xf32> to vector<16x16xf32>
    %320 = vector.broadcast %317 : f32 to vector<16x16xf32>
    %321 = arith.mulf %320, %319 : vector<16x16xf32>
    %322 = arith.addf %316, %321 : vector<16x16xf32>
    %c49 = arith.constant 49 : index
    %323 = memref.load %arg2[%c49] : memref<72xf32, #tpu.memory_space<smem>>
    %c1_192 = arith.constant 1 : index
    %c4_193 = arith.constant 4 : index
    %c4_194 = arith.constant 4 : index
    %324 = vector.load %arg11[%c1_192, %c4_193, %c4_194] : memref<4x24x24xf32, #tpu.memory_space<vmem>>, vector<1x16x16xf32>
    %325 = vector.shape_cast %324 : vector<1x16x16xf32> to vector<16x16xf32>
    %326 = vector.broadcast %323 : f32 to vector<16x16xf32>
    %327 = arith.mulf %326, %325 : vector<16x16xf32>
    %328 = arith.addf %322, %327 : vector<16x16xf32>
    %c50 = arith.constant 50 : index
    %329 = memref.load %arg2[%c50] : memref<72xf32, #tpu.memory_space<smem>>
    %c1_195 = arith.constant 1 : index
    %c4_196 = arith.constant 4 : index
    %c5_197 = arith.constant 5 : index
    %330 = vector.load %arg11[%c1_195, %c4_196, %c5_197] : memref<4x24x24xf32, #tpu.memory_space<vmem>>, vector<1x16x16xf32>
    %331 = vector.shape_cast %330 : vector<1x16x16xf32> to vector<16x16xf32>
    %332 = vector.broadcast %329 : f32 to vector<16x16xf32>
    %333 = arith.mulf %332, %331 : vector<16x16xf32>
    %334 = arith.addf %328, %333 : vector<16x16xf32>
    %c51 = arith.constant 51 : index
    %335 = memref.load %arg2[%c51] : memref<72xf32, #tpu.memory_space<smem>>
    %c1_198 = arith.constant 1 : index
    %c4_199 = arith.constant 4 : index
    %c6_200 = arith.constant 6 : index
    %336 = vector.load %arg11[%c1_198, %c4_199, %c6_200] : memref<4x24x24xf32, #tpu.memory_space<vmem>>, vector<1x16x16xf32>
    %337 = vector.shape_cast %336 : vector<1x16x16xf32> to vector<16x16xf32>
    %338 = vector.broadcast %335 : f32 to vector<16x16xf32>
    %339 = arith.mulf %338, %337 : vector<16x16xf32>
    %340 = arith.addf %334, %339 : vector<16x16xf32>
    %c52 = arith.constant 52 : index
    %341 = memref.load %arg2[%c52] : memref<72xf32, #tpu.memory_space<smem>>
    %c1_201 = arith.constant 1 : index
    %c4_202 = arith.constant 4 : index
    %c7_203 = arith.constant 7 : index
    %342 = vector.load %arg11[%c1_201, %c4_202, %c7_203] : memref<4x24x24xf32, #tpu.memory_space<vmem>>, vector<1x16x16xf32>
    %343 = vector.shape_cast %342 : vector<1x16x16xf32> to vector<16x16xf32>
    %344 = vector.broadcast %341 : f32 to vector<16x16xf32>
    %345 = arith.mulf %344, %343 : vector<16x16xf32>
    %346 = arith.addf %340, %345 : vector<16x16xf32>
    %c53 = arith.constant 53 : index
    %347 = memref.load %arg2[%c53] : memref<72xf32, #tpu.memory_space<smem>>
    %c1_204 = arith.constant 1 : index
    %c4_205 = arith.constant 4 : index
    %c8_206 = arith.constant 8 : index
    %348 = vector.load %arg11[%c1_204, %c4_205, %c8_206] : memref<4x24x24xf32, #tpu.memory_space<vmem>>, vector<1x16x16xf32>
    %349 = vector.shape_cast %348 : vector<1x16x16xf32> to vector<16x16xf32>
    %350 = vector.broadcast %347 : f32 to vector<16x16xf32>
    %351 = arith.mulf %350, %349 : vector<16x16xf32>
    %352 = arith.addf %346, %351 : vector<16x16xf32>
    %c54 = arith.constant 54 : index
    %353 = memref.load %arg2[%c54] : memref<72xf32, #tpu.memory_space<smem>>
    %c2_207 = arith.constant 2 : index
    %c4_208 = arith.constant 4 : index
    %c0_209 = arith.constant 0 : index
    %354 = vector.load %arg11[%c2_207, %c4_208, %c0_209] : memref<4x24x24xf32, #tpu.memory_space<vmem>>, vector<1x16x16xf32>
    %355 = vector.shape_cast %354 : vector<1x16x16xf32> to vector<16x16xf32>
    %356 = vector.broadcast %353 : f32 to vector<16x16xf32>
    %357 = arith.mulf %356, %355 : vector<16x16xf32>
    %358 = arith.addf %352, %357 : vector<16x16xf32>
    %c55 = arith.constant 55 : index
    %359 = memref.load %arg2[%c55] : memref<72xf32, #tpu.memory_space<smem>>
    %c2_210 = arith.constant 2 : index
    %c4_211 = arith.constant 4 : index
    %c1_212 = arith.constant 1 : index
    %360 = vector.load %arg11[%c2_210, %c4_211, %c1_212] : memref<4x24x24xf32, #tpu.memory_space<vmem>>, vector<1x16x16xf32>
    %361 = vector.shape_cast %360 : vector<1x16x16xf32> to vector<16x16xf32>
    %362 = vector.broadcast %359 : f32 to vector<16x16xf32>
    %363 = arith.mulf %362, %361 : vector<16x16xf32>
    %364 = arith.addf %358, %363 : vector<16x16xf32>
    %c56 = arith.constant 56 : index
    %365 = memref.load %arg2[%c56] : memref<72xf32, #tpu.memory_space<smem>>
    %c2_213 = arith.constant 2 : index
    %c4_214 = arith.constant 4 : index
    %c2_215 = arith.constant 2 : index
    %366 = vector.load %arg11[%c2_213, %c4_214, %c2_215] : memref<4x24x24xf32, #tpu.memory_space<vmem>>, vector<1x16x16xf32>
    %367 = vector.shape_cast %366 : vector<1x16x16xf32> to vector<16x16xf32>
    %368 = vector.broadcast %365 : f32 to vector<16x16xf32>
    %369 = arith.mulf %368, %367 : vector<16x16xf32>
    %370 = arith.addf %364, %369 : vector<16x16xf32>
    %c57 = arith.constant 57 : index
    %371 = memref.load %arg2[%c57] : memref<72xf32, #tpu.memory_space<smem>>
    %c2_216 = arith.constant 2 : index
    %c4_217 = arith.constant 4 : index
    %c3_218 = arith.constant 3 : index
    %372 = vector.load %arg11[%c2_216, %c4_217, %c3_218] : memref<4x24x24xf32, #tpu.memory_space<vmem>>, vector<1x16x16xf32>
    %373 = vector.shape_cast %372 : vector<1x16x16xf32> to vector<16x16xf32>
    %374 = vector.broadcast %371 : f32 to vector<16x16xf32>
    %375 = arith.mulf %374, %373 : vector<16x16xf32>
    %376 = arith.addf %370, %375 : vector<16x16xf32>
    %c58 = arith.constant 58 : index
    %377 = memref.load %arg2[%c58] : memref<72xf32, #tpu.memory_space<smem>>
    %c2_219 = arith.constant 2 : index
    %c4_220 = arith.constant 4 : index
    %c4_221 = arith.constant 4 : index
    %378 = vector.load %arg11[%c2_219, %c4_220, %c4_221] : memref<4x24x24xf32, #tpu.memory_space<vmem>>, vector<1x16x16xf32>
    %379 = vector.shape_cast %378 : vector<1x16x16xf32> to vector<16x16xf32>
    %380 = vector.broadcast %377 : f32 to vector<16x16xf32>
    %381 = arith.mulf %380, %379 : vector<16x16xf32>
    %382 = arith.addf %376, %381 : vector<16x16xf32>
    %c59 = arith.constant 59 : index
    %383 = memref.load %arg2[%c59] : memref<72xf32, #tpu.memory_space<smem>>
    %c2_222 = arith.constant 2 : index
    %c4_223 = arith.constant 4 : index
    %c5_224 = arith.constant 5 : index
    %384 = vector.load %arg11[%c2_222, %c4_223, %c5_224] : memref<4x24x24xf32, #tpu.memory_space<vmem>>, vector<1x16x16xf32>
    %385 = vector.shape_cast %384 : vector<1x16x16xf32> to vector<16x16xf32>
    %386 = vector.broadcast %383 : f32 to vector<16x16xf32>
    %387 = arith.mulf %386, %385 : vector<16x16xf32>
    %388 = arith.addf %382, %387 : vector<16x16xf32>
    %c60 = arith.constant 60 : index
    %389 = memref.load %arg2[%c60] : memref<72xf32, #tpu.memory_space<smem>>
    %c2_225 = arith.constant 2 : index
    %c4_226 = arith.constant 4 : index
    %c6_227 = arith.constant 6 : index
    %390 = vector.load %arg11[%c2_225, %c4_226, %c6_227] : memref<4x24x24xf32, #tpu.memory_space<vmem>>, vector<1x16x16xf32>
    %391 = vector.shape_cast %390 : vector<1x16x16xf32> to vector<16x16xf32>
    %392 = vector.broadcast %389 : f32 to vector<16x16xf32>
    %393 = arith.mulf %392, %391 : vector<16x16xf32>
    %394 = arith.addf %388, %393 : vector<16x16xf32>
    %c61 = arith.constant 61 : index
    %395 = memref.load %arg2[%c61] : memref<72xf32, #tpu.memory_space<smem>>
    %c2_228 = arith.constant 2 : index
    %c4_229 = arith.constant 4 : index
    %c7_230 = arith.constant 7 : index
    %396 = vector.load %arg11[%c2_228, %c4_229, %c7_230] : memref<4x24x24xf32, #tpu.memory_space<vmem>>, vector<1x16x16xf32>
    %397 = vector.shape_cast %396 : vector<1x16x16xf32> to vector<16x16xf32>
    %398 = vector.broadcast %395 : f32 to vector<16x16xf32>
    %399 = arith.mulf %398, %397 : vector<16x16xf32>
    %400 = arith.addf %394, %399 : vector<16x16xf32>
    %c62 = arith.constant 62 : index
    %401 = memref.load %arg2[%c62] : memref<72xf32, #tpu.memory_space<smem>>
    %c2_231 = arith.constant 2 : index
    %c4_232 = arith.constant 4 : index
    %c8_233 = arith.constant 8 : index
    %402 = vector.load %arg11[%c2_231, %c4_232, %c8_233] : memref<4x24x24xf32, #tpu.memory_space<vmem>>, vector<1x16x16xf32>
    %403 = vector.shape_cast %402 : vector<1x16x16xf32> to vector<16x16xf32>
    %404 = vector.broadcast %401 : f32 to vector<16x16xf32>
    %405 = arith.mulf %404, %403 : vector<16x16xf32>
    %406 = arith.addf %400, %405 : vector<16x16xf32>
    %c63 = arith.constant 63 : index
    %407 = memref.load %arg2[%c63] : memref<72xf32, #tpu.memory_space<smem>>
    %c3_234 = arith.constant 3 : index
    %c4_235 = arith.constant 4 : index
    %c0_236 = arith.constant 0 : index
    %408 = vector.load %arg11[%c3_234, %c4_235, %c0_236] : memref<4x24x24xf32, #tpu.memory_space<vmem>>, vector<1x16x16xf32>
    %409 = vector.shape_cast %408 : vector<1x16x16xf32> to vector<16x16xf32>
    %410 = vector.broadcast %407 : f32 to vector<16x16xf32>
    %411 = arith.mulf %410, %409 : vector<16x16xf32>
    %412 = arith.addf %406, %411 : vector<16x16xf32>
    %c64 = arith.constant 64 : index
    %413 = memref.load %arg2[%c64] : memref<72xf32, #tpu.memory_space<smem>>
    %c3_237 = arith.constant 3 : index
    %c4_238 = arith.constant 4 : index
    %c1_239 = arith.constant 1 : index
    %414 = vector.load %arg11[%c3_237, %c4_238, %c1_239] : memref<4x24x24xf32, #tpu.memory_space<vmem>>, vector<1x16x16xf32>
    %415 = vector.shape_cast %414 : vector<1x16x16xf32> to vector<16x16xf32>
    %416 = vector.broadcast %413 : f32 to vector<16x16xf32>
    %417 = arith.mulf %416, %415 : vector<16x16xf32>
    %418 = arith.addf %412, %417 : vector<16x16xf32>
    %c65 = arith.constant 65 : index
    %419 = memref.load %arg2[%c65] : memref<72xf32, #tpu.memory_space<smem>>
    %c3_240 = arith.constant 3 : index
    %c4_241 = arith.constant 4 : index
    %c2_242 = arith.constant 2 : index
    %420 = vector.load %arg11[%c3_240, %c4_241, %c2_242] : memref<4x24x24xf32, #tpu.memory_space<vmem>>, vector<1x16x16xf32>
    %421 = vector.shape_cast %420 : vector<1x16x16xf32> to vector<16x16xf32>
    %422 = vector.broadcast %419 : f32 to vector<16x16xf32>
    %423 = arith.mulf %422, %421 : vector<16x16xf32>
    %424 = arith.addf %418, %423 : vector<16x16xf32>
    %c66 = arith.constant 66 : index
    %425 = memref.load %arg2[%c66] : memref<72xf32, #tpu.memory_space<smem>>
    %c3_243 = arith.constant 3 : index
    %c4_244 = arith.constant 4 : index
    %c3_245 = arith.constant 3 : index
    %426 = vector.load %arg11[%c3_243, %c4_244, %c3_245] : memref<4x24x24xf32, #tpu.memory_space<vmem>>, vector<1x16x16xf32>
    %427 = vector.shape_cast %426 : vector<1x16x16xf32> to vector<16x16xf32>
    %428 = vector.broadcast %425 : f32 to vector<16x16xf32>
    %429 = arith.mulf %428, %427 : vector<16x16xf32>
    %430 = arith.addf %424, %429 : vector<16x16xf32>
    %c67 = arith.constant 67 : index
    %431 = memref.load %arg2[%c67] : memref<72xf32, #tpu.memory_space<smem>>
    %c3_246 = arith.constant 3 : index
    %c4_247 = arith.constant 4 : index
    %c4_248 = arith.constant 4 : index
    %432 = vector.load %arg11[%c3_246, %c4_247, %c4_248] : memref<4x24x24xf32, #tpu.memory_space<vmem>>, vector<1x16x16xf32>
    %433 = vector.shape_cast %432 : vector<1x16x16xf32> to vector<16x16xf32>
    %434 = vector.broadcast %431 : f32 to vector<16x16xf32>
    %435 = arith.mulf %434, %433 : vector<16x16xf32>
    %436 = arith.addf %430, %435 : vector<16x16xf32>
    %c68 = arith.constant 68 : index
    %437 = memref.load %arg2[%c68] : memref<72xf32, #tpu.memory_space<smem>>
    %c3_249 = arith.constant 3 : index
    %c4_250 = arith.constant 4 : index
    %c5_251 = arith.constant 5 : index
    %438 = vector.load %arg11[%c3_249, %c4_250, %c5_251] : memref<4x24x24xf32, #tpu.memory_space<vmem>>, vector<1x16x16xf32>
    %439 = vector.shape_cast %438 : vector<1x16x16xf32> to vector<16x16xf32>
    %440 = vector.broadcast %437 : f32 to vector<16x16xf32>
    %441 = arith.mulf %440, %439 : vector<16x16xf32>
    %442 = arith.addf %436, %441 : vector<16x16xf32>
    %c69 = arith.constant 69 : index
    %443 = memref.load %arg2[%c69] : memref<72xf32, #tpu.memory_space<smem>>
    %c3_252 = arith.constant 3 : index
    %c4_253 = arith.constant 4 : index
    %c6_254 = arith.constant 6 : index
    %444 = vector.load %arg11[%c3_252, %c4_253, %c6_254] : memref<4x24x24xf32, #tpu.memory_space<vmem>>, vector<1x16x16xf32>
    %445 = vector.shape_cast %444 : vector<1x16x16xf32> to vector<16x16xf32>
    %446 = vector.broadcast %443 : f32 to vector<16x16xf32>
    %447 = arith.mulf %446, %445 : vector<16x16xf32>
    %448 = arith.addf %442, %447 : vector<16x16xf32>
    %c70 = arith.constant 70 : index
    %449 = memref.load %arg2[%c70] : memref<72xf32, #tpu.memory_space<smem>>
    %c3_255 = arith.constant 3 : index
    %c4_256 = arith.constant 4 : index
    %c7_257 = arith.constant 7 : index
    %450 = vector.load %arg11[%c3_255, %c4_256, %c7_257] : memref<4x24x24xf32, #tpu.memory_space<vmem>>, vector<1x16x16xf32>
    %451 = vector.shape_cast %450 : vector<1x16x16xf32> to vector<16x16xf32>
    %452 = vector.broadcast %449 : f32 to vector<16x16xf32>
    %453 = arith.mulf %452, %451 : vector<16x16xf32>
    %454 = arith.addf %448, %453 : vector<16x16xf32>
    %c71 = arith.constant 71 : index
    %455 = memref.load %arg2[%c71] : memref<72xf32, #tpu.memory_space<smem>>
    %c3_258 = arith.constant 3 : index
    %c4_259 = arith.constant 4 : index
    %c8_260 = arith.constant 8 : index
    %456 = vector.load %arg11[%c3_258, %c4_259, %c8_260] : memref<4x24x24xf32, #tpu.memory_space<vmem>>, vector<1x16x16xf32>
    %457 = vector.shape_cast %456 : vector<1x16x16xf32> to vector<16x16xf32>
    %458 = vector.broadcast %455 : f32 to vector<16x16xf32>
    %459 = arith.mulf %458, %457 : vector<16x16xf32>
    %460 = arith.addf %454, %459 : vector<16x16xf32>
    %c1_261 = arith.constant 1 : index
    %461 = memref.load %arg3[%c1_261] : memref<2xf32, #tpu.memory_space<smem>>
    %462 = vector.broadcast %461 : f32 to vector<16x16xf32>
    %463 = arith.addf %460, %462 : vector<16x16xf32>
    %cst_262 = arith.constant 0.000000e+00 : f32
    %464 = vector.broadcast %cst_262 : f32 to vector<16x16xf32>
    %465 = arith.maximumf %463, %464 : vector<16x16xf32>
    %c1_263 = arith.constant 1 : index
    %c4_264 = arith.constant 4 : index
    %c0_265 = arith.constant 0 : index
    %466 = vector.load %arg12[%c1_263, %c4_264, %c0_265] : memref<2x24x16xf32, #tpu.memory_space<vmem>>, vector<1x16x16xf32>
    %467 = vector.shape_cast %466 : vector<1x16x16xf32> to vector<16x16xf32>
    %468 = vector.shape_cast %465 : vector<16x16xf32> to vector<1x16x16xf32>
    tpu.vector_store %arg12[%c1_263, %c4_264, %c0_265], %468 {strides = array<i32>} : memref<2x24x16xf32, #tpu.memory_space<vmem>>, vector<1x16x16xf32>,
    %cst_266 = arith.constant 0.000000e+00 : f32
    %469 = vector.broadcast %cst_266 : f32 to vector<16x16xf32>
    %c0_267 = arith.constant 0 : index
    %470 = memref.load %arg4[%c0_267] : memref<18xf32, #tpu.memory_space<smem>>
    %c0_268 = arith.constant 0 : index
    %c0_269 = arith.constant 0 : index
    %c0_270 = arith.constant 0 : index
    %471 = vector.load %arg12[%c0_268, %c0_269, %c0_270] : memref<2x24x16xf32, #tpu.memory_space<vmem>>, vector<1x16x16xf32>
    %472 = vector.shape_cast %471 : vector<1x16x16xf32> to vector<16x16xf32>
    %473 = vector.broadcast %470 : f32 to vector<16x16xf32>
    %474 = arith.mulf %473, %472 : vector<16x16xf32>
    %475 = arith.addf %469, %474 : vector<16x16xf32>
    %c1_271 = arith.constant 1 : index
    %476 = memref.load %arg4[%c1_271] : memref<18xf32, #tpu.memory_space<smem>>
    %c0_272 = arith.constant 0 : index
    %c1_273 = arith.constant 1 : index
    %c0_274 = arith.constant 0 : index
    %477 = vector.load %arg12[%c0_272, %c1_273, %c0_274] : memref<2x24x16xf32, #tpu.memory_space<vmem>>, vector<1x16x16xf32>
    %478 = vector.shape_cast %477 : vector<1x16x16xf32> to vector<16x16xf32>
    %479 = vector.broadcast %476 : f32 to vector<16x16xf32>
    %480 = arith.mulf %479, %478 : vector<16x16xf32>
    %481 = arith.addf %475, %480 : vector<16x16xf32>
    %c2_275 = arith.constant 2 : index
    %482 = memref.load %arg4[%c2_275] : memref<18xf32, #tpu.memory_space<smem>>
    %c0_276 = arith.constant 0 : index
    %c2_277 = arith.constant 2 : index
    %c0_278 = arith.constant 0 : index
    %483 = vector.load %arg12[%c0_276, %c2_277, %c0_278] : memref<2x24x16xf32, #tpu.memory_space<vmem>>, vector<1x16x16xf32>
    %484 = vector.shape_cast %483 : vector<1x16x16xf32> to vector<16x16xf32>
    %485 = vector.broadcast %482 : f32 to vector<16x16xf32>
    %486 = arith.mulf %485, %484 : vector<16x16xf32>
    %487 = arith.addf %481, %486 : vector<16x16xf32>
    %c3_279 = arith.constant 3 : index
    %488 = memref.load %arg4[%c3_279] : memref<18xf32, #tpu.memory_space<smem>>
    %c0_280 = arith.constant 0 : index
    %c3_281 = arith.constant 3 : index
    %c0_282 = arith.constant 0 : index
    %489 = vector.load %arg12[%c0_280, %c3_281, %c0_282] : memref<2x24x16xf32, #tpu.memory_space<vmem>>, vector<1x16x16xf32>
    %490 = vector.shape_cast %489 : vector<1x16x16xf32> to vector<16x16xf32>
    %491 = vector.broadcast %488 : f32 to vector<16x16xf32>
    %492 = arith.mulf %491, %490 : vector<16x16xf32>
    %493 = arith.addf %487, %492 : vector<16x16xf32>
    %c4_283 = arith.constant 4 : index
    %494 = memref.load %arg4[%c4_283] : memref<18xf32, #tpu.memory_space<smem>>
    %c0_284 = arith.constant 0 : index
    %c4_285 = arith.constant 4 : index
    %c0_286 = arith.constant 0 : index
    %495 = vector.load %arg12[%c0_284, %c4_285, %c0_286] : memref<2x24x16xf32, #tpu.memory_space<vmem>>, vector<1x16x16xf32>
    %496 = vector.shape_cast %495 : vector<1x16x16xf32> to vector<16x16xf32>
    %497 = vector.broadcast %494 : f32 to vector<16x16xf32>
    %498 = arith.mulf %497, %496 : vector<16x16xf32>
    %499 = arith.addf %493, %498 : vector<16x16xf32>
    %c5_287 = arith.constant 5 : index
    %500 = memref.load %arg4[%c5_287] : memref<18xf32, #tpu.memory_space<smem>>
    %c0_288 = arith.constant 0 : index
    %c5_289 = arith.constant 5 : index
    %c0_290 = arith.constant 0 : index
    %501 = vector.load %arg12[%c0_288, %c5_289, %c0_290] : memref<2x24x16xf32, #tpu.memory_space<vmem>>, vector<1x16x16xf32>
    %502 = vector.shape_cast %501 : vector<1x16x16xf32> to vector<16x16xf32>
    %503 = vector.broadcast %500 : f32 to vector<16x16xf32>
    %504 = arith.mulf %503, %502 : vector<16x16xf32>
    %505 = arith.addf %499, %504 : vector<16x16xf32>
    %c6_291 = arith.constant 6 : index
    %506 = memref.load %arg4[%c6_291] : memref<18xf32, #tpu.memory_space<smem>>
    %c0_292 = arith.constant 0 : index
    %c6_293 = arith.constant 6 : index
    %c0_294 = arith.constant 0 : index
    %507 = vector.load %arg12[%c0_292, %c6_293, %c0_294] : memref<2x24x16xf32, #tpu.memory_space<vmem>>, vector<1x16x16xf32>
    %508 = vector.shape_cast %507 : vector<1x16x16xf32> to vector<16x16xf32>
    %509 = vector.broadcast %506 : f32 to vector<16x16xf32>
    %510 = arith.mulf %509, %508 : vector<16x16xf32>
    %511 = arith.addf %505, %510 : vector<16x16xf32>
    %c7_295 = arith.constant 7 : index
    %512 = memref.load %arg4[%c7_295] : memref<18xf32, #tpu.memory_space<smem>>
    %c0_296 = arith.constant 0 : index
    %c7_297 = arith.constant 7 : index
    %c0_298 = arith.constant 0 : index
    %513 = vector.load %arg12[%c0_296, %c7_297, %c0_298] : memref<2x24x16xf32, #tpu.memory_space<vmem>>, vector<1x16x16xf32>
    %514 = vector.shape_cast %513 : vector<1x16x16xf32> to vector<16x16xf32>
    %515 = vector.broadcast %512 : f32 to vector<16x16xf32>
    %516 = arith.mulf %515, %514 : vector<16x16xf32>
    %517 = arith.addf %511, %516 : vector<16x16xf32>
    %c8_299 = arith.constant 8 : index
    %518 = memref.load %arg4[%c8_299] : memref<18xf32, #tpu.memory_space<smem>>
    %c0_300 = arith.constant 0 : index
    %c8_301 = arith.constant 8 : index
    %c0_302 = arith.constant 0 : index
    %519 = vector.load %arg12[%c0_300, %c8_301, %c0_302] : memref<2x24x16xf32, #tpu.memory_space<vmem>>, vector<1x16x16xf32>
    %520 = vector.shape_cast %519 : vector<1x16x16xf32> to vector<16x16xf32>
    %521 = vector.broadcast %518 : f32 to vector<16x16xf32>
    %522 = arith.mulf %521, %520 : vector<16x16xf32>
    %523 = arith.addf %517, %522 : vector<16x16xf32>
    %c9_303 = arith.constant 9 : index
    %524 = memref.load %arg4[%c9_303] : memref<18xf32, #tpu.memory_space<smem>>
    %c1_304 = arith.constant 1 : index
    %c0_305 = arith.constant 0 : index
    %c0_306 = arith.constant 0 : index
    %525 = vector.load %arg12[%c1_304, %c0_305, %c0_306] : memref<2x24x16xf32, #tpu.memory_space<vmem>>, vector<1x16x16xf32>
    %526 = vector.shape_cast %525 : vector<1x16x16xf32> to vector<16x16xf32>
    %527 = vector.broadcast %524 : f32 to vector<16x16xf32>
    %528 = arith.mulf %527, %526 : vector<16x16xf32>
    %529 = arith.addf %523, %528 : vector<16x16xf32>
    %c10_307 = arith.constant 10 : index
    %530 = memref.load %arg4[%c10_307] : memref<18xf32, #tpu.memory_space<smem>>
    %c1_308 = arith.constant 1 : index
    %c1_309 = arith.constant 1 : index
    %c0_310 = arith.constant 0 : index
    %531 = vector.load %arg12[%c1_308, %c1_309, %c0_310] : memref<2x24x16xf32, #tpu.memory_space<vmem>>, vector<1x16x16xf32>
    %532 = vector.shape_cast %531 : vector<1x16x16xf32> to vector<16x16xf32>
    %533 = vector.broadcast %530 : f32 to vector<16x16xf32>
    %534 = arith.mulf %533, %532 : vector<16x16xf32>
    %535 = arith.addf %529, %534 : vector<16x16xf32>
    %c11_311 = arith.constant 11 : index
    %536 = memref.load %arg4[%c11_311] : memref<18xf32, #tpu.memory_space<smem>>
    %c1_312 = arith.constant 1 : index
    %c2_313 = arith.constant 2 : index
    %c0_314 = arith.constant 0 : index
    %537 = vector.load %arg12[%c1_312, %c2_313, %c0_314] : memref<2x24x16xf32, #tpu.memory_space<vmem>>, vector<1x16x16xf32>
    %538 = vector.shape_cast %537 : vector<1x16x16xf32> to vector<16x16xf32>
    %539 = vector.broadcast %536 : f32 to vector<16x16xf32>
    %540 = arith.mulf %539, %538 : vector<16x16xf32>
    %541 = arith.addf %535, %540 : vector<16x16xf32>
    %c12_315 = arith.constant 12 : index
    %542 = memref.load %arg4[%c12_315] : memref<18xf32, #tpu.memory_space<smem>>
    %c1_316 = arith.constant 1 : index
    %c3_317 = arith.constant 3 : index
    %c0_318 = arith.constant 0 : index
    %543 = vector.load %arg12[%c1_316, %c3_317, %c0_318] : memref<2x24x16xf32, #tpu.memory_space<vmem>>, vector<1x16x16xf32>
    %544 = vector.shape_cast %543 : vector<1x16x16xf32> to vector<16x16xf32>
    %545 = vector.broadcast %542 : f32 to vector<16x16xf32>
    %546 = arith.mulf %545, %544 : vector<16x16xf32>
    %547 = arith.addf %541, %546 : vector<16x16xf32>
    %c13_319 = arith.constant 13 : index
    %548 = memref.load %arg4[%c13_319] : memref<18xf32, #tpu.memory_space<smem>>
    %c1_320 = arith.constant 1 : index
    %c4_321 = arith.constant 4 : index
    %c0_322 = arith.constant 0 : index
    %549 = vector.load %arg12[%c1_320, %c4_321, %c0_322] : memref<2x24x16xf32, #tpu.memory_space<vmem>>, vector<1x16x16xf32>
    %550 = vector.shape_cast %549 : vector<1x16x16xf32> to vector<16x16xf32>
    %551 = vector.broadcast %548 : f32 to vector<16x16xf32>
    %552 = arith.mulf %551, %550 : vector<16x16xf32>
    %553 = arith.addf %547, %552 : vector<16x16xf32>
    %c14_323 = arith.constant 14 : index
    %554 = memref.load %arg4[%c14_323] : memref<18xf32, #tpu.memory_space<smem>>
    %c1_324 = arith.constant 1 : index
    %c5_325 = arith.constant 5 : index
    %c0_326 = arith.constant 0 : index
    %555 = vector.load %arg12[%c1_324, %c5_325, %c0_326] : memref<2x24x16xf32, #tpu.memory_space<vmem>>, vector<1x16x16xf32>
    %556 = vector.shape_cast %555 : vector<1x16x16xf32> to vector<16x16xf32>
    %557 = vector.broadcast %554 : f32 to vector<16x16xf32>
    %558 = arith.mulf %557, %556 : vector<16x16xf32>
    %559 = arith.addf %553, %558 : vector<16x16xf32>
    %c15_327 = arith.constant 15 : index
    %560 = memref.load %arg4[%c15_327] : memref<18xf32, #tpu.memory_space<smem>>
    %c1_328 = arith.constant 1 : index
    %c6_329 = arith.constant 6 : index
    %c0_330 = arith.constant 0 : index
    %561 = vector.load %arg12[%c1_328, %c6_329, %c0_330] : memref<2x24x16xf32, #tpu.memory_space<vmem>>, vector<1x16x16xf32>
    %562 = vector.shape_cast %561 : vector<1x16x16xf32> to vector<16x16xf32>
    %563 = vector.broadcast %560 : f32 to vector<16x16xf32>
    %564 = arith.mulf %563, %562 : vector<16x16xf32>
    %565 = arith.addf %559, %564 : vector<16x16xf32>
    %c16_331 = arith.constant 16 : index
    %566 = memref.load %arg4[%c16_331] : memref<18xf32, #tpu.memory_space<smem>>
    %c1_332 = arith.constant 1 : index
    %c7_333 = arith.constant 7 : index
    %c0_334 = arith.constant 0 : index
    %567 = vector.load %arg12[%c1_332, %c7_333, %c0_334] : memref<2x24x16xf32, #tpu.memory_space<vmem>>, vector<1x16x16xf32>
    %568 = vector.shape_cast %567 : vector<1x16x16xf32> to vector<16x16xf32>
    %569 = vector.broadcast %566 : f32 to vector<16x16xf32>
    %570 = arith.mulf %569, %568 : vector<16x16xf32>
    %571 = arith.addf %565, %570 : vector<16x16xf32>
    %c17_335 = arith.constant 17 : index
    %572 = memref.load %arg4[%c17_335] : memref<18xf32, #tpu.memory_space<smem>>
    %c1_336 = arith.constant 1 : index
    %c8_337 = arith.constant 8 : index
    %c0_338 = arith.constant 0 : index
    %573 = vector.load %arg12[%c1_336, %c8_337, %c0_338] : memref<2x24x16xf32, #tpu.memory_space<vmem>>, vector<1x16x16xf32>
    %574 = vector.shape_cast %573 : vector<1x16x16xf32> to vector<16x16xf32>
    %575 = vector.broadcast %572 : f32 to vector<16x16xf32>
    %576 = arith.mulf %575, %574 : vector<16x16xf32>
    %577 = arith.addf %571, %576 : vector<16x16xf32>
    %c0_339 = arith.constant 0 : index
    %578 = memref.load %arg5[%c0_339] : memref<1xf32, #tpu.memory_space<smem>>
    %579 = vector.broadcast %578 : f32 to vector<16x16xf32>
    %580 = arith.addf %577, %579 : vector<16x16xf32>
    %cst_340 = arith.constant 0.000000e+00 : f32
    %581 = vector.broadcast %cst_340 : f32 to vector<16x16xf32>
    %582 = arith.maximumf %580, %581 : vector<16x16xf32>
    %cst_341 = arith.constant 0.000000e+00 : f32
    %583 = vector.broadcast %cst_341 : f32 to vector<16x16xf32>
    %c0_342 = arith.constant 0 : index
    %584 = memref.load %arg6[%c0_342] : memref<72xf32, #tpu.memory_space<smem>>
    %c0_343 = arith.constant 0 : index
    %c0_344 = arith.constant 0 : index
    %c4_345 = arith.constant 4 : index
    %585 = vector.load %arg11[%c0_343, %c0_344, %c4_345] : memref<4x24x24xf32, #tpu.memory_space<vmem>>, vector<1x16x16xf32>
    %586 = vector.shape_cast %585 : vector<1x16x16xf32> to vector<16x16xf32>
    %587 = vector.broadcast %584 : f32 to vector<16x16xf32>
    %588 = arith.mulf %587, %586 : vector<16x16xf32>
    %589 = arith.addf %583, %588 : vector<16x16xf32>
    %c1_346 = arith.constant 1 : index
    %590 = memref.load %arg6[%c1_346] : memref<72xf32, #tpu.memory_space<smem>>
    %c0_347 = arith.constant 0 : index
    %c1_348 = arith.constant 1 : index
    %c4_349 = arith.constant 4 : index
    %591 = vector.load %arg11[%c0_347, %c1_348, %c4_349] : memref<4x24x24xf32, #tpu.memory_space<vmem>>, vector<1x16x16xf32>
    %592 = vector.shape_cast %591 : vector<1x16x16xf32> to vector<16x16xf32>
    %593 = vector.broadcast %590 : f32 to vector<16x16xf32>
    %594 = arith.mulf %593, %592 : vector<16x16xf32>
    %595 = arith.addf %589, %594 : vector<16x16xf32>
    %c2_350 = arith.constant 2 : index
    %596 = memref.load %arg6[%c2_350] : memref<72xf32, #tpu.memory_space<smem>>
    %c0_351 = arith.constant 0 : index
    %c2_352 = arith.constant 2 : index
    %c4_353 = arith.constant 4 : index
    %597 = vector.load %arg11[%c0_351, %c2_352, %c4_353] : memref<4x24x24xf32, #tpu.memory_space<vmem>>, vector<1x16x16xf32>
    %598 = vector.shape_cast %597 : vector<1x16x16xf32> to vector<16x16xf32>
    %599 = vector.broadcast %596 : f32 to vector<16x16xf32>
    %600 = arith.mulf %599, %598 : vector<16x16xf32>
    %601 = arith.addf %595, %600 : vector<16x16xf32>
    %c3_354 = arith.constant 3 : index
    %602 = memref.load %arg6[%c3_354] : memref<72xf32, #tpu.memory_space<smem>>
    %c0_355 = arith.constant 0 : index
    %c3_356 = arith.constant 3 : index
    %c4_357 = arith.constant 4 : index
    %603 = vector.load %arg11[%c0_355, %c3_356, %c4_357] : memref<4x24x24xf32, #tpu.memory_space<vmem>>, vector<1x16x16xf32>
    %604 = vector.shape_cast %603 : vector<1x16x16xf32> to vector<16x16xf32>
    %605 = vector.broadcast %602 : f32 to vector<16x16xf32>
    %606 = arith.mulf %605, %604 : vector<16x16xf32>
    %607 = arith.addf %601, %606 : vector<16x16xf32>
    %c4_358 = arith.constant 4 : index
    %608 = memref.load %arg6[%c4_358] : memref<72xf32, #tpu.memory_space<smem>>
    %c0_359 = arith.constant 0 : index
    %c4_360 = arith.constant 4 : index
    %c4_361 = arith.constant 4 : index
    %609 = vector.load %arg11[%c0_359, %c4_360, %c4_361] : memref<4x24x24xf32, #tpu.memory_space<vmem>>, vector<1x16x16xf32>
    %610 = vector.shape_cast %609 : vector<1x16x16xf32> to vector<16x16xf32>
    %611 = vector.broadcast %608 : f32 to vector<16x16xf32>
    %612 = arith.mulf %611, %610 : vector<16x16xf32>
    %613 = arith.addf %607, %612 : vector<16x16xf32>
    %c5_362 = arith.constant 5 : index
    %614 = memref.load %arg6[%c5_362] : memref<72xf32, #tpu.memory_space<smem>>
    %c0_363 = arith.constant 0 : index
    %c5_364 = arith.constant 5 : index
    %c4_365 = arith.constant 4 : index
    %615 = vector.load %arg11[%c0_363, %c5_364, %c4_365] : memref<4x24x24xf32, #tpu.memory_space<vmem>>, vector<1x16x16xf32>
    %616 = vector.shape_cast %615 : vector<1x16x16xf32> to vector<16x16xf32>
    %617 = vector.broadcast %614 : f32 to vector<16x16xf32>
    %618 = arith.mulf %617, %616 : vector<16x16xf32>
    %619 = arith.addf %613, %618 : vector<16x16xf32>
    %c6_366 = arith.constant 6 : index
    %620 = memref.load %arg6[%c6_366] : memref<72xf32, #tpu.memory_space<smem>>
    %c0_367 = arith.constant 0 : index
    %c6_368 = arith.constant 6 : index
    %c4_369 = arith.constant 4 : index
    %621 = vector.load %arg11[%c0_367, %c6_368, %c4_369] : memref<4x24x24xf32, #tpu.memory_space<vmem>>, vector<1x16x16xf32>
    %622 = vector.shape_cast %621 : vector<1x16x16xf32> to vector<16x16xf32>
    %623 = vector.broadcast %620 : f32 to vector<16x16xf32>
    %624 = arith.mulf %623, %622 : vector<16x16xf32>
    %625 = arith.addf %619, %624 : vector<16x16xf32>
    %c7_370 = arith.constant 7 : index
    %626 = memref.load %arg6[%c7_370] : memref<72xf32, #tpu.memory_space<smem>>
    %c0_371 = arith.constant 0 : index
    %c7_372 = arith.constant 7 : index
    %c4_373 = arith.constant 4 : index
    %627 = vector.load %arg11[%c0_371, %c7_372, %c4_373] : memref<4x24x24xf32, #tpu.memory_space<vmem>>, vector<1x16x16xf32>
    %628 = vector.shape_cast %627 : vector<1x16x16xf32> to vector<16x16xf32>
    %629 = vector.broadcast %626 : f32 to vector<16x16xf32>
    %630 = arith.mulf %629, %628 : vector<16x16xf32>
    %631 = arith.addf %625, %630 : vector<16x16xf32>
    %c8_374 = arith.constant 8 : index
    %632 = memref.load %arg6[%c8_374] : memref<72xf32, #tpu.memory_space<smem>>
    %c0_375 = arith.constant 0 : index
    %c8_376 = arith.constant 8 : index
    %c4_377 = arith.constant 4 : index
    %633 = vector.load %arg11[%c0_375, %c8_376, %c4_377] : memref<4x24x24xf32, #tpu.memory_space<vmem>>, vector<1x16x16xf32>
    %634 = vector.shape_cast %633 : vector<1x16x16xf32> to vector<16x16xf32>
    %635 = vector.broadcast %632 : f32 to vector<16x16xf32>
    %636 = arith.mulf %635, %634 : vector<16x16xf32>
    %637 = arith.addf %631, %636 : vector<16x16xf32>
    %c9_378 = arith.constant 9 : index
    %638 = memref.load %arg6[%c9_378] : memref<72xf32, #tpu.memory_space<smem>>
    %c1_379 = arith.constant 1 : index
    %c0_380 = arith.constant 0 : index
    %c4_381 = arith.constant 4 : index
    %639 = vector.load %arg11[%c1_379, %c0_380, %c4_381] : memref<4x24x24xf32, #tpu.memory_space<vmem>>, vector<1x16x16xf32>
    %640 = vector.shape_cast %639 : vector<1x16x16xf32> to vector<16x16xf32>
    %641 = vector.broadcast %638 : f32 to vector<16x16xf32>
    %642 = arith.mulf %641, %640 : vector<16x16xf32>
    %643 = arith.addf %637, %642 : vector<16x16xf32>
    %c10_382 = arith.constant 10 : index
    %644 = memref.load %arg6[%c10_382] : memref<72xf32, #tpu.memory_space<smem>>
    %c1_383 = arith.constant 1 : index
    %c1_384 = arith.constant 1 : index
    %c4_385 = arith.constant 4 : index
    %645 = vector.load %arg11[%c1_383, %c1_384, %c4_385] : memref<4x24x24xf32, #tpu.memory_space<vmem>>, vector<1x16x16xf32>
    %646 = vector.shape_cast %645 : vector<1x16x16xf32> to vector<16x16xf32>
    %647 = vector.broadcast %644 : f32 to vector<16x16xf32>
    %648 = arith.mulf %647, %646 : vector<16x16xf32>
    %649 = arith.addf %643, %648 : vector<16x16xf32>
    %c11_386 = arith.constant 11 : index
    %650 = memref.load %arg6[%c11_386] : memref<72xf32, #tpu.memory_space<smem>>
    %c1_387 = arith.constant 1 : index
    %c2_388 = arith.constant 2 : index
    %c4_389 = arith.constant 4 : index
    %651 = vector.load %arg11[%c1_387, %c2_388, %c4_389] : memref<4x24x24xf32, #tpu.memory_space<vmem>>, vector<1x16x16xf32>
    %652 = vector.shape_cast %651 : vector<1x16x16xf32> to vector<16x16xf32>
    %653 = vector.broadcast %650 : f32 to vector<16x16xf32>
    %654 = arith.mulf %653, %652 : vector<16x16xf32>
    %655 = arith.addf %649, %654 : vector<16x16xf32>
    %c12_390 = arith.constant 12 : index
    %656 = memref.load %arg6[%c12_390] : memref<72xf32, #tpu.memory_space<smem>>
    %c1_391 = arith.constant 1 : index
    %c3_392 = arith.constant 3 : index
    %c4_393 = arith.constant 4 : index
    %657 = vector.load %arg11[%c1_391, %c3_392, %c4_393] : memref<4x24x24xf32, #tpu.memory_space<vmem>>, vector<1x16x16xf32>
    %658 = vector.shape_cast %657 : vector<1x16x16xf32> to vector<16x16xf32>
    %659 = vector.broadcast %656 : f32 to vector<16x16xf32>
    %660 = arith.mulf %659, %658 : vector<16x16xf32>
    %661 = arith.addf %655, %660 : vector<16x16xf32>
    %c13_394 = arith.constant 13 : index
    %662 = memref.load %arg6[%c13_394] : memref<72xf32, #tpu.memory_space<smem>>
    %c1_395 = arith.constant 1 : index
    %c4_396 = arith.constant 4 : index
    %c4_397 = arith.constant 4 : index
    %663 = vector.load %arg11[%c1_395, %c4_396, %c4_397] : memref<4x24x24xf32, #tpu.memory_space<vmem>>, vector<1x16x16xf32>
    %664 = vector.shape_cast %663 : vector<1x16x16xf32> to vector<16x16xf32>
    %665 = vector.broadcast %662 : f32 to vector<16x16xf32>
    %666 = arith.mulf %665, %664 : vector<16x16xf32>
    %667 = arith.addf %661, %666 : vector<16x16xf32>
    %c14_398 = arith.constant 14 : index
    %668 = memref.load %arg6[%c14_398] : memref<72xf32, #tpu.memory_space<smem>>
    %c1_399 = arith.constant 1 : index
    %c5_400 = arith.constant 5 : index
    %c4_401 = arith.constant 4 : index
    %669 = vector.load %arg11[%c1_399, %c5_400, %c4_401] : memref<4x24x24xf32, #tpu.memory_space<vmem>>, vector<1x16x16xf32>
    %670 = vector.shape_cast %669 : vector<1x16x16xf32> to vector<16x16xf32>
    %671 = vector.broadcast %668 : f32 to vector<16x16xf32>
    %672 = arith.mulf %671, %670 : vector<16x16xf32>
    %673 = arith.addf %667, %672 : vector<16x16xf32>
    %c15_402 = arith.constant 15 : index
    %674 = memref.load %arg6[%c15_402] : memref<72xf32, #tpu.memory_space<smem>>
    %c1_403 = arith.constant 1 : index
    %c6_404 = arith.constant 6 : index
    %c4_405 = arith.constant 4 : index
    %675 = vector.load %arg11[%c1_403, %c6_404, %c4_405] : memref<4x24x24xf32, #tpu.memory_space<vmem>>, vector<1x16x16xf32>
    %676 = vector.shape_cast %675 : vector<1x16x16xf32> to vector<16x16xf32>
    %677 = vector.broadcast %674 : f32 to vector<16x16xf32>
    %678 = arith.mulf %677, %676 : vector<16x16xf32>
    %679 = arith.addf %673, %678 : vector<16x16xf32>
    %c16_406 = arith.constant 16 : index
    %680 = memref.load %arg6[%c16_406] : memref<72xf32, #tpu.memory_space<smem>>
    %c1_407 = arith.constant 1 : index
    %c7_408 = arith.constant 7 : index
    %c4_409 = arith.constant 4 : index
    %681 = vector.load %arg11[%c1_407, %c7_408, %c4_409] : memref<4x24x24xf32, #tpu.memory_space<vmem>>, vector<1x16x16xf32>
    %682 = vector.shape_cast %681 : vector<1x16x16xf32> to vector<16x16xf32>
    %683 = vector.broadcast %680 : f32 to vector<16x16xf32>
    %684 = arith.mulf %683, %682 : vector<16x16xf32>
    %685 = arith.addf %679, %684 : vector<16x16xf32>
    %c17_410 = arith.constant 17 : index
    %686 = memref.load %arg6[%c17_410] : memref<72xf32, #tpu.memory_space<smem>>
    %c1_411 = arith.constant 1 : index
    %c8_412 = arith.constant 8 : index
    %c4_413 = arith.constant 4 : index
    %687 = vector.load %arg11[%c1_411, %c8_412, %c4_413] : memref<4x24x24xf32, #tpu.memory_space<vmem>>, vector<1x16x16xf32>
    %688 = vector.shape_cast %687 : vector<1x16x16xf32> to vector<16x16xf32>
    %689 = vector.broadcast %686 : f32 to vector<16x16xf32>
    %690 = arith.mulf %689, %688 : vector<16x16xf32>
    %691 = arith.addf %685, %690 : vector<16x16xf32>
    %c18_414 = arith.constant 18 : index
    %692 = memref.load %arg6[%c18_414] : memref<72xf32, #tpu.memory_space<smem>>
    %c2_415 = arith.constant 2 : index
    %c0_416 = arith.constant 0 : index
    %c4_417 = arith.constant 4 : index
    %693 = vector.load %arg11[%c2_415, %c0_416, %c4_417] : memref<4x24x24xf32, #tpu.memory_space<vmem>>, vector<1x16x16xf32>
    %694 = vector.shape_cast %693 : vector<1x16x16xf32> to vector<16x16xf32>
    %695 = vector.broadcast %692 : f32 to vector<16x16xf32>
    %696 = arith.mulf %695, %694 : vector<16x16xf32>
    %697 = arith.addf %691, %696 : vector<16x16xf32>
    %c19_418 = arith.constant 19 : index
    %698 = memref.load %arg6[%c19_418] : memref<72xf32, #tpu.memory_space<smem>>
    %c2_419 = arith.constant 2 : index
    %c1_420 = arith.constant 1 : index
    %c4_421 = arith.constant 4 : index
    %699 = vector.load %arg11[%c2_419, %c1_420, %c4_421] : memref<4x24x24xf32, #tpu.memory_space<vmem>>, vector<1x16x16xf32>
    %700 = vector.shape_cast %699 : vector<1x16x16xf32> to vector<16x16xf32>
    %701 = vector.broadcast %698 : f32 to vector<16x16xf32>
    %702 = arith.mulf %701, %700 : vector<16x16xf32>
    %703 = arith.addf %697, %702 : vector<16x16xf32>
    %c20_422 = arith.constant 20 : index
    %704 = memref.load %arg6[%c20_422] : memref<72xf32, #tpu.memory_space<smem>>
    %c2_423 = arith.constant 2 : index
    %c2_424 = arith.constant 2 : index
    %c4_425 = arith.constant 4 : index
    %705 = vector.load %arg11[%c2_423, %c2_424, %c4_425] : memref<4x24x24xf32, #tpu.memory_space<vmem>>, vector<1x16x16xf32>
    %706 = vector.shape_cast %705 : vector<1x16x16xf32> to vector<16x16xf32>
    %707 = vector.broadcast %704 : f32 to vector<16x16xf32>
    %708 = arith.mulf %707, %706 : vector<16x16xf32>
    %709 = arith.addf %703, %708 : vector<16x16xf32>
    %c21_426 = arith.constant 21 : index
    %710 = memref.load %arg6[%c21_426] : memref<72xf32, #tpu.memory_space<smem>>
    %c2_427 = arith.constant 2 : index
    %c3_428 = arith.constant 3 : index
    %c4_429 = arith.constant 4 : index
    %711 = vector.load %arg11[%c2_427, %c3_428, %c4_429] : memref<4x24x24xf32, #tpu.memory_space<vmem>>, vector<1x16x16xf32>
    %712 = vector.shape_cast %711 : vector<1x16x16xf32> to vector<16x16xf32>
    %713 = vector.broadcast %710 : f32 to vector<16x16xf32>
    %714 = arith.mulf %713, %712 : vector<16x16xf32>
    %715 = arith.addf %709, %714 : vector<16x16xf32>
    %c22_430 = arith.constant 22 : index
    %716 = memref.load %arg6[%c22_430] : memref<72xf32, #tpu.memory_space<smem>>
    %c2_431 = arith.constant 2 : index
    %c4_432 = arith.constant 4 : index
    %c4_433 = arith.constant 4 : index
    %717 = vector.load %arg11[%c2_431, %c4_432, %c4_433] : memref<4x24x24xf32, #tpu.memory_space<vmem>>, vector<1x16x16xf32>
    %718 = vector.shape_cast %717 : vector<1x16x16xf32> to vector<16x16xf32>
    %719 = vector.broadcast %716 : f32 to vector<16x16xf32>
    %720 = arith.mulf %719, %718 : vector<16x16xf32>
    %721 = arith.addf %715, %720 : vector<16x16xf32>
    %c23_434 = arith.constant 23 : index
    %722 = memref.load %arg6[%c23_434] : memref<72xf32, #tpu.memory_space<smem>>
    %c2_435 = arith.constant 2 : index
    %c5_436 = arith.constant 5 : index
    %c4_437 = arith.constant 4 : index
    %723 = vector.load %arg11[%c2_435, %c5_436, %c4_437] : memref<4x24x24xf32, #tpu.memory_space<vmem>>, vector<1x16x16xf32>
    %724 = vector.shape_cast %723 : vector<1x16x16xf32> to vector<16x16xf32>
    %725 = vector.broadcast %722 : f32 to vector<16x16xf32>
    %726 = arith.mulf %725, %724 : vector<16x16xf32>
    %727 = arith.addf %721, %726 : vector<16x16xf32>
    %c24_438 = arith.constant 24 : index
    %728 = memref.load %arg6[%c24_438] : memref<72xf32, #tpu.memory_space<smem>>
    %c2_439 = arith.constant 2 : index
    %c6_440 = arith.constant 6 : index
    %c4_441 = arith.constant 4 : index
    %729 = vector.load %arg11[%c2_439, %c6_440, %c4_441] : memref<4x24x24xf32, #tpu.memory_space<vmem>>, vector<1x16x16xf32>
    %730 = vector.shape_cast %729 : vector<1x16x16xf32> to vector<16x16xf32>
    %731 = vector.broadcast %728 : f32 to vector<16x16xf32>
    %732 = arith.mulf %731, %730 : vector<16x16xf32>
    %733 = arith.addf %727, %732 : vector<16x16xf32>
    %c25_442 = arith.constant 25 : index
    %734 = memref.load %arg6[%c25_442] : memref<72xf32, #tpu.memory_space<smem>>
    %c2_443 = arith.constant 2 : index
    %c7_444 = arith.constant 7 : index
    %c4_445 = arith.constant 4 : index
    %735 = vector.load %arg11[%c2_443, %c7_444, %c4_445] : memref<4x24x24xf32, #tpu.memory_space<vmem>>, vector<1x16x16xf32>
    %736 = vector.shape_cast %735 : vector<1x16x16xf32> to vector<16x16xf32>
    %737 = vector.broadcast %734 : f32 to vector<16x16xf32>
    %738 = arith.mulf %737, %736 : vector<16x16xf32>
    %739 = arith.addf %733, %738 : vector<16x16xf32>
    %c26_446 = arith.constant 26 : index
    %740 = memref.load %arg6[%c26_446] : memref<72xf32, #tpu.memory_space<smem>>
    %c2_447 = arith.constant 2 : index
    %c8_448 = arith.constant 8 : index
    %c4_449 = arith.constant 4 : index
    %741 = vector.load %arg11[%c2_447, %c8_448, %c4_449] : memref<4x24x24xf32, #tpu.memory_space<vmem>>, vector<1x16x16xf32>
    %742 = vector.shape_cast %741 : vector<1x16x16xf32> to vector<16x16xf32>
    %743 = vector.broadcast %740 : f32 to vector<16x16xf32>
    %744 = arith.mulf %743, %742 : vector<16x16xf32>
    %745 = arith.addf %739, %744 : vector<16x16xf32>
    %c27_450 = arith.constant 27 : index
    %746 = memref.load %arg6[%c27_450] : memref<72xf32, #tpu.memory_space<smem>>
    %c3_451 = arith.constant 3 : index
    %c0_452 = arith.constant 0 : index
    %c4_453 = arith.constant 4 : index
    %747 = vector.load %arg11[%c3_451, %c0_452, %c4_453] : memref<4x24x24xf32, #tpu.memory_space<vmem>>, vector<1x16x16xf32>
    %748 = vector.shape_cast %747 : vector<1x16x16xf32> to vector<16x16xf32>
    %749 = vector.broadcast %746 : f32 to vector<16x16xf32>
    %750 = arith.mulf %749, %748 : vector<16x16xf32>
    %751 = arith.addf %745, %750 : vector<16x16xf32>
    %c28_454 = arith.constant 28 : index
    %752 = memref.load %arg6[%c28_454] : memref<72xf32, #tpu.memory_space<smem>>
    %c3_455 = arith.constant 3 : index
    %c1_456 = arith.constant 1 : index
    %c4_457 = arith.constant 4 : index
    %753 = vector.load %arg11[%c3_455, %c1_456, %c4_457] : memref<4x24x24xf32, #tpu.memory_space<vmem>>, vector<1x16x16xf32>
    %754 = vector.shape_cast %753 : vector<1x16x16xf32> to vector<16x16xf32>
    %755 = vector.broadcast %752 : f32 to vector<16x16xf32>
    %756 = arith.mulf %755, %754 : vector<16x16xf32>
    %757 = arith.addf %751, %756 : vector<16x16xf32>
    %c29_458 = arith.constant 29 : index
    %758 = memref.load %arg6[%c29_458] : memref<72xf32, #tpu.memory_space<smem>>
    %c3_459 = arith.constant 3 : index
    %c2_460 = arith.constant 2 : index
    %c4_461 = arith.constant 4 : index
    %759 = vector.load %arg11[%c3_459, %c2_460, %c4_461] : memref<4x24x24xf32, #tpu.memory_space<vmem>>, vector<1x16x16xf32>
    %760 = vector.shape_cast %759 : vector<1x16x16xf32> to vector<16x16xf32>
    %761 = vector.broadcast %758 : f32 to vector<16x16xf32>
    %762 = arith.mulf %761, %760 : vector<16x16xf32>
    %763 = arith.addf %757, %762 : vector<16x16xf32>
    %c30_462 = arith.constant 30 : index
    %764 = memref.load %arg6[%c30_462] : memref<72xf32, #tpu.memory_space<smem>>
    %c3_463 = arith.constant 3 : index
    %c3_464 = arith.constant 3 : index
    %c4_465 = arith.constant 4 : index
    %765 = vector.load %arg11[%c3_463, %c3_464, %c4_465] : memref<4x24x24xf32, #tpu.memory_space<vmem>>, vector<1x16x16xf32>
    %766 = vector.shape_cast %765 : vector<1x16x16xf32> to vector<16x16xf32>
    %767 = vector.broadcast %764 : f32 to vector<16x16xf32>
    %768 = arith.mulf %767, %766 : vector<16x16xf32>
    %769 = arith.addf %763, %768 : vector<16x16xf32>
    %c31_466 = arith.constant 31 : index
    %770 = memref.load %arg6[%c31_466] : memref<72xf32, #tpu.memory_space<smem>>
    %c3_467 = arith.constant 3 : index
    %c4_468 = arith.constant 4 : index
    %c4_469 = arith.constant 4 : index
    %771 = vector.load %arg11[%c3_467, %c4_468, %c4_469] : memref<4x24x24xf32, #tpu.memory_space<vmem>>, vector<1x16x16xf32>
    %772 = vector.shape_cast %771 : vector<1x16x16xf32> to vector<16x16xf32>
    %773 = vector.broadcast %770 : f32 to vector<16x16xf32>
    %774 = arith.mulf %773, %772 : vector<16x16xf32>
    %775 = arith.addf %769, %774 : vector<16x16xf32>
    %c32_470 = arith.constant 32 : index
    %776 = memref.load %arg6[%c32_470] : memref<72xf32, #tpu.memory_space<smem>>
    %c3_471 = arith.constant 3 : index
    %c5_472 = arith.constant 5 : index
    %c4_473 = arith.constant 4 : index
    %777 = vector.load %arg11[%c3_471, %c5_472, %c4_473] : memref<4x24x24xf32, #tpu.memory_space<vmem>>, vector<1x16x16xf32>
    %778 = vector.shape_cast %777 : vector<1x16x16xf32> to vector<16x16xf32>
    %779 = vector.broadcast %776 : f32 to vector<16x16xf32>
    %780 = arith.mulf %779, %778 : vector<16x16xf32>
    %781 = arith.addf %775, %780 : vector<16x16xf32>
    %c33_474 = arith.constant 33 : index
    %782 = memref.load %arg6[%c33_474] : memref<72xf32, #tpu.memory_space<smem>>
    %c3_475 = arith.constant 3 : index
    %c6_476 = arith.constant 6 : index
    %c4_477 = arith.constant 4 : index
    %783 = vector.load %arg11[%c3_475, %c6_476, %c4_477] : memref<4x24x24xf32, #tpu.memory_space<vmem>>, vector<1x16x16xf32>
    %784 = vector.shape_cast %783 : vector<1x16x16xf32> to vector<16x16xf32>
    %785 = vector.broadcast %782 : f32 to vector<16x16xf32>
    %786 = arith.mulf %785, %784 : vector<16x16xf32>
    %787 = arith.addf %781, %786 : vector<16x16xf32>
    %c34_478 = arith.constant 34 : index
    %788 = memref.load %arg6[%c34_478] : memref<72xf32, #tpu.memory_space<smem>>
    %c3_479 = arith.constant 3 : index
    %c7_480 = arith.constant 7 : index
    %c4_481 = arith.constant 4 : index
    %789 = vector.load %arg11[%c3_479, %c7_480, %c4_481] : memref<4x24x24xf32, #tpu.memory_space<vmem>>, vector<1x16x16xf32>
    %790 = vector.shape_cast %789 : vector<1x16x16xf32> to vector<16x16xf32>
    %791 = vector.broadcast %788 : f32 to vector<16x16xf32>
    %792 = arith.mulf %791, %790 : vector<16x16xf32>
    %793 = arith.addf %787, %792 : vector<16x16xf32>
    %c35_482 = arith.constant 35 : index
    %794 = memref.load %arg6[%c35_482] : memref<72xf32, #tpu.memory_space<smem>>
    %c3_483 = arith.constant 3 : index
    %c8_484 = arith.constant 8 : index
    %c4_485 = arith.constant 4 : index
    %795 = vector.load %arg11[%c3_483, %c8_484, %c4_485] : memref<4x24x24xf32, #tpu.memory_space<vmem>>, vector<1x16x16xf32>
    %796 = vector.shape_cast %795 : vector<1x16x16xf32> to vector<16x16xf32>
    %797 = vector.broadcast %794 : f32 to vector<16x16xf32>
    %798 = arith.mulf %797, %796 : vector<16x16xf32>
    %799 = arith.addf %793, %798 : vector<16x16xf32>
    %c0_486 = arith.constant 0 : index
    %800 = memref.load %arg7[%c0_486] : memref<2xf32, #tpu.memory_space<smem>>
    %801 = vector.broadcast %800 : f32 to vector<16x16xf32>
    %802 = arith.addf %799, %801 : vector<16x16xf32>
    %cst_487 = arith.constant 0.000000e+00 : f32
    %803 = vector.broadcast %cst_487 : f32 to vector<16x16xf32>
    %804 = arith.maximumf %802, %803 : vector<16x16xf32>
    %c0_488 = arith.constant 0 : index
    %c0_489 = arith.constant 0 : index
    %c4_490 = arith.constant 4 : index
    %805 = vector.load %arg13[%c0_488, %c0_489, %c4_490] : memref<2x16x24xf32, #tpu.memory_space<vmem>>, vector<1x16x16xf32>
    %806 = vector.shape_cast %805 : vector<1x16x16xf32> to vector<16x16xf32>
    %807 = vector.shape_cast %804 : vector<16x16xf32> to vector<1x16x16xf32>
    tpu.vector_store %arg13[%c0_488, %c0_489, %c4_490], %807 {strides = array<i32>} : memref<2x16x24xf32, #tpu.memory_space<vmem>>, vector<1x16x16xf32>,
    %cst_491 = arith.constant 0.000000e+00 : f32
    %808 = vector.broadcast %cst_491 : f32 to vector<16x16xf32>
    %c36_492 = arith.constant 36 : index
    %809 = memref.load %arg6[%c36_492] : memref<72xf32, #tpu.memory_space<smem>>
    %c0_493 = arith.constant 0 : index
    %c0_494 = arith.constant 0 : index
    %c4_495 = arith.constant 4 : index
    %810 = vector.load %arg11[%c0_493, %c0_494, %c4_495] : memref<4x24x24xf32, #tpu.memory_space<vmem>>, vector<1x16x16xf32>
    %811 = vector.shape_cast %810 : vector<1x16x16xf32> to vector<16x16xf32>
    %812 = vector.broadcast %809 : f32 to vector<16x16xf32>
    %813 = arith.mulf %812, %811 : vector<16x16xf32>
    %814 = arith.addf %808, %813 : vector<16x16xf32>
    %c37_496 = arith.constant 37 : index
    %815 = memref.load %arg6[%c37_496] : memref<72xf32, #tpu.memory_space<smem>>
    %c0_497 = arith.constant 0 : index
    %c1_498 = arith.constant 1 : index
    %c4_499 = arith.constant 4 : index
    %816 = vector.load %arg11[%c0_497, %c1_498, %c4_499] : memref<4x24x24xf32, #tpu.memory_space<vmem>>, vector<1x16x16xf32>
    %817 = vector.shape_cast %816 : vector<1x16x16xf32> to vector<16x16xf32>
    %818 = vector.broadcast %815 : f32 to vector<16x16xf32>
    %819 = arith.mulf %818, %817 : vector<16x16xf32>
    %820 = arith.addf %814, %819 : vector<16x16xf32>
    %c38_500 = arith.constant 38 : index
    %821 = memref.load %arg6[%c38_500] : memref<72xf32, #tpu.memory_space<smem>>
    %c0_501 = arith.constant 0 : index
    %c2_502 = arith.constant 2 : index
    %c4_503 = arith.constant 4 : index
    %822 = vector.load %arg11[%c0_501, %c2_502, %c4_503] : memref<4x24x24xf32, #tpu.memory_space<vmem>>, vector<1x16x16xf32>
    %823 = vector.shape_cast %822 : vector<1x16x16xf32> to vector<16x16xf32>
    %824 = vector.broadcast %821 : f32 to vector<16x16xf32>
    %825 = arith.mulf %824, %823 : vector<16x16xf32>
    %826 = arith.addf %820, %825 : vector<16x16xf32>
    %c39_504 = arith.constant 39 : index
    %827 = memref.load %arg6[%c39_504] : memref<72xf32, #tpu.memory_space<smem>>
    %c0_505 = arith.constant 0 : index
    %c3_506 = arith.constant 3 : index
    %c4_507 = arith.constant 4 : index
    %828 = vector.load %arg11[%c0_505, %c3_506, %c4_507] : memref<4x24x24xf32, #tpu.memory_space<vmem>>, vector<1x16x16xf32>
    %829 = vector.shape_cast %828 : vector<1x16x16xf32> to vector<16x16xf32>
    %830 = vector.broadcast %827 : f32 to vector<16x16xf32>
    %831 = arith.mulf %830, %829 : vector<16x16xf32>
    %832 = arith.addf %826, %831 : vector<16x16xf32>
    %c40_508 = arith.constant 40 : index
    %833 = memref.load %arg6[%c40_508] : memref<72xf32, #tpu.memory_space<smem>>
    %c0_509 = arith.constant 0 : index
    %c4_510 = arith.constant 4 : index
    %c4_511 = arith.constant 4 : index
    %834 = vector.load %arg11[%c0_509, %c4_510, %c4_511] : memref<4x24x24xf32, #tpu.memory_space<vmem>>, vector<1x16x16xf32>
    %835 = vector.shape_cast %834 : vector<1x16x16xf32> to vector<16x16xf32>
    %836 = vector.broadcast %833 : f32 to vector<16x16xf32>
    %837 = arith.mulf %836, %835 : vector<16x16xf32>
    %838 = arith.addf %832, %837 : vector<16x16xf32>
    %c41_512 = arith.constant 41 : index
    %839 = memref.load %arg6[%c41_512] : memref<72xf32, #tpu.memory_space<smem>>
    %c0_513 = arith.constant 0 : index
    %c5_514 = arith.constant 5 : index
    %c4_515 = arith.constant 4 : index
    %840 = vector.load %arg11[%c0_513, %c5_514, %c4_515] : memref<4x24x24xf32, #tpu.memory_space<vmem>>, vector<1x16x16xf32>
    %841 = vector.shape_cast %840 : vector<1x16x16xf32> to vector<16x16xf32>
    %842 = vector.broadcast %839 : f32 to vector<16x16xf32>
    %843 = arith.mulf %842, %841 : vector<16x16xf32>
    %844 = arith.addf %838, %843 : vector<16x16xf32>
    %c42_516 = arith.constant 42 : index
    %845 = memref.load %arg6[%c42_516] : memref<72xf32, #tpu.memory_space<smem>>
    %c0_517 = arith.constant 0 : index
    %c6_518 = arith.constant 6 : index
    %c4_519 = arith.constant 4 : index
    %846 = vector.load %arg11[%c0_517, %c6_518, %c4_519] : memref<4x24x24xf32, #tpu.memory_space<vmem>>, vector<1x16x16xf32>
    %847 = vector.shape_cast %846 : vector<1x16x16xf32> to vector<16x16xf32>
    %848 = vector.broadcast %845 : f32 to vector<16x16xf32>
    %849 = arith.mulf %848, %847 : vector<16x16xf32>
    %850 = arith.addf %844, %849 : vector<16x16xf32>
    %c43_520 = arith.constant 43 : index
    %851 = memref.load %arg6[%c43_520] : memref<72xf32, #tpu.memory_space<smem>>
    %c0_521 = arith.constant 0 : index
    %c7_522 = arith.constant 7 : index
    %c4_523 = arith.constant 4 : index
    %852 = vector.load %arg11[%c0_521, %c7_522, %c4_523] : memref<4x24x24xf32, #tpu.memory_space<vmem>>, vector<1x16x16xf32>
    %853 = vector.shape_cast %852 : vector<1x16x16xf32> to vector<16x16xf32>
    %854 = vector.broadcast %851 : f32 to vector<16x16xf32>
    %855 = arith.mulf %854, %853 : vector<16x16xf32>
    %856 = arith.addf %850, %855 : vector<16x16xf32>
    %c44_524 = arith.constant 44 : index
    %857 = memref.load %arg6[%c44_524] : memref<72xf32, #tpu.memory_space<smem>>
    %c0_525 = arith.constant 0 : index
    %c8_526 = arith.constant 8 : index
    %c4_527 = arith.constant 4 : index
    %858 = vector.load %arg11[%c0_525, %c8_526, %c4_527] : memref<4x24x24xf32, #tpu.memory_space<vmem>>, vector<1x16x16xf32>
    %859 = vector.shape_cast %858 : vector<1x16x16xf32> to vector<16x16xf32>
    %860 = vector.broadcast %857 : f32 to vector<16x16xf32>
    %861 = arith.mulf %860, %859 : vector<16x16xf32>
    %862 = arith.addf %856, %861 : vector<16x16xf32>
    %c45_528 = arith.constant 45 : index
    %863 = memref.load %arg6[%c45_528] : memref<72xf32, #tpu.memory_space<smem>>
    %c1_529 = arith.constant 1 : index
    %c0_530 = arith.constant 0 : index
    %c4_531 = arith.constant 4 : index
    %864 = vector.load %arg11[%c1_529, %c0_530, %c4_531] : memref<4x24x24xf32, #tpu.memory_space<vmem>>, vector<1x16x16xf32>
    %865 = vector.shape_cast %864 : vector<1x16x16xf32> to vector<16x16xf32>
    %866 = vector.broadcast %863 : f32 to vector<16x16xf32>
    %867 = arith.mulf %866, %865 : vector<16x16xf32>
    %868 = arith.addf %862, %867 : vector<16x16xf32>
    %c46_532 = arith.constant 46 : index
    %869 = memref.load %arg6[%c46_532] : memref<72xf32, #tpu.memory_space<smem>>
    %c1_533 = arith.constant 1 : index
    %c1_534 = arith.constant 1 : index
    %c4_535 = arith.constant 4 : index
    %870 = vector.load %arg11[%c1_533, %c1_534, %c4_535] : memref<4x24x24xf32, #tpu.memory_space<vmem>>, vector<1x16x16xf32>
    %871 = vector.shape_cast %870 : vector<1x16x16xf32> to vector<16x16xf32>
    %872 = vector.broadcast %869 : f32 to vector<16x16xf32>
    %873 = arith.mulf %872, %871 : vector<16x16xf32>
    %874 = arith.addf %868, %873 : vector<16x16xf32>
    %c47_536 = arith.constant 47 : index
    %875 = memref.load %arg6[%c47_536] : memref<72xf32, #tpu.memory_space<smem>>
    %c1_537 = arith.constant 1 : index
    %c2_538 = arith.constant 2 : index
    %c4_539 = arith.constant 4 : index
    %876 = vector.load %arg11[%c1_537, %c2_538, %c4_539] : memref<4x24x24xf32, #tpu.memory_space<vmem>>, vector<1x16x16xf32>
    %877 = vector.shape_cast %876 : vector<1x16x16xf32> to vector<16x16xf32>
    %878 = vector.broadcast %875 : f32 to vector<16x16xf32>
    %879 = arith.mulf %878, %877 : vector<16x16xf32>
    %880 = arith.addf %874, %879 : vector<16x16xf32>
    %c48_540 = arith.constant 48 : index
    %881 = memref.load %arg6[%c48_540] : memref<72xf32, #tpu.memory_space<smem>>
    %c1_541 = arith.constant 1 : index
    %c3_542 = arith.constant 3 : index
    %c4_543 = arith.constant 4 : index
    %882 = vector.load %arg11[%c1_541, %c3_542, %c4_543] : memref<4x24x24xf32, #tpu.memory_space<vmem>>, vector<1x16x16xf32>
    %883 = vector.shape_cast %882 : vector<1x16x16xf32> to vector<16x16xf32>
    %884 = vector.broadcast %881 : f32 to vector<16x16xf32>
    %885 = arith.mulf %884, %883 : vector<16x16xf32>
    %886 = arith.addf %880, %885 : vector<16x16xf32>
    %c49_544 = arith.constant 49 : index
    %887 = memref.load %arg6[%c49_544] : memref<72xf32, #tpu.memory_space<smem>>
    %c1_545 = arith.constant 1 : index
    %c4_546 = arith.constant 4 : index
    %c4_547 = arith.constant 4 : index
    %888 = vector.load %arg11[%c1_545, %c4_546, %c4_547] : memref<4x24x24xf32, #tpu.memory_space<vmem>>, vector<1x16x16xf32>
    %889 = vector.shape_cast %888 : vector<1x16x16xf32> to vector<16x16xf32>
    %890 = vector.broadcast %887 : f32 to vector<16x16xf32>
    %891 = arith.mulf %890, %889 : vector<16x16xf32>
    %892 = arith.addf %886, %891 : vector<16x16xf32>
    %c50_548 = arith.constant 50 : index
    %893 = memref.load %arg6[%c50_548] : memref<72xf32, #tpu.memory_space<smem>>
    %c1_549 = arith.constant 1 : index
    %c5_550 = arith.constant 5 : index
    %c4_551 = arith.constant 4 : index
    %894 = vector.load %arg11[%c1_549, %c5_550, %c4_551] : memref<4x24x24xf32, #tpu.memory_space<vmem>>, vector<1x16x16xf32>
    %895 = vector.shape_cast %894 : vector<1x16x16xf32> to vector<16x16xf32>
    %896 = vector.broadcast %893 : f32 to vector<16x16xf32>
    %897 = arith.mulf %896, %895 : vector<16x16xf32>
    %898 = arith.addf %892, %897 : vector<16x16xf32>
    %c51_552 = arith.constant 51 : index
    %899 = memref.load %arg6[%c51_552] : memref<72xf32, #tpu.memory_space<smem>>
    %c1_553 = arith.constant 1 : index
    %c6_554 = arith.constant 6 : index
    %c4_555 = arith.constant 4 : index
    %900 = vector.load %arg11[%c1_553, %c6_554, %c4_555] : memref<4x24x24xf32, #tpu.memory_space<vmem>>, vector<1x16x16xf32>
    %901 = vector.shape_cast %900 : vector<1x16x16xf32> to vector<16x16xf32>
    %902 = vector.broadcast %899 : f32 to vector<16x16xf32>
    %903 = arith.mulf %902, %901 : vector<16x16xf32>
    %904 = arith.addf %898, %903 : vector<16x16xf32>
    %c52_556 = arith.constant 52 : index
    %905 = memref.load %arg6[%c52_556] : memref<72xf32, #tpu.memory_space<smem>>
    %c1_557 = arith.constant 1 : index
    %c7_558 = arith.constant 7 : index
    %c4_559 = arith.constant 4 : index
    %906 = vector.load %arg11[%c1_557, %c7_558, %c4_559] : memref<4x24x24xf32, #tpu.memory_space<vmem>>, vector<1x16x16xf32>
    %907 = vector.shape_cast %906 : vector<1x16x16xf32> to vector<16x16xf32>
    %908 = vector.broadcast %905 : f32 to vector<16x16xf32>
    %909 = arith.mulf %908, %907 : vector<16x16xf32>
    %910 = arith.addf %904, %909 : vector<16x16xf32>
    %c53_560 = arith.constant 53 : index
    %911 = memref.load %arg6[%c53_560] : memref<72xf32, #tpu.memory_space<smem>>
    %c1_561 = arith.constant 1 : index
    %c8_562 = arith.constant 8 : index
    %c4_563 = arith.constant 4 : index
    %912 = vector.load %arg11[%c1_561, %c8_562, %c4_563] : memref<4x24x24xf32, #tpu.memory_space<vmem>>, vector<1x16x16xf32>
    %913 = vector.shape_cast %912 : vector<1x16x16xf32> to vector<16x16xf32>
    %914 = vector.broadcast %911 : f32 to vector<16x16xf32>
    %915 = arith.mulf %914, %913 : vector<16x16xf32>
    %916 = arith.addf %910, %915 : vector<16x16xf32>
    %c54_564 = arith.constant 54 : index
    %917 = memref.load %arg6[%c54_564] : memref<72xf32, #tpu.memory_space<smem>>
    %c2_565 = arith.constant 2 : index
    %c0_566 = arith.constant 0 : index
    %c4_567 = arith.constant 4 : index
    %918 = vector.load %arg11[%c2_565, %c0_566, %c4_567] : memref<4x24x24xf32, #tpu.memory_space<vmem>>, vector<1x16x16xf32>
    %919 = vector.shape_cast %918 : vector<1x16x16xf32> to vector<16x16xf32>
    %920 = vector.broadcast %917 : f32 to vector<16x16xf32>
    %921 = arith.mulf %920, %919 : vector<16x16xf32>
    %922 = arith.addf %916, %921 : vector<16x16xf32>
    %c55_568 = arith.constant 55 : index
    %923 = memref.load %arg6[%c55_568] : memref<72xf32, #tpu.memory_space<smem>>
    %c2_569 = arith.constant 2 : index
    %c1_570 = arith.constant 1 : index
    %c4_571 = arith.constant 4 : index
    %924 = vector.load %arg11[%c2_569, %c1_570, %c4_571] : memref<4x24x24xf32, #tpu.memory_space<vmem>>, vector<1x16x16xf32>
    %925 = vector.shape_cast %924 : vector<1x16x16xf32> to vector<16x16xf32>
    %926 = vector.broadcast %923 : f32 to vector<16x16xf32>
    %927 = arith.mulf %926, %925 : vector<16x16xf32>
    %928 = arith.addf %922, %927 : vector<16x16xf32>
    %c56_572 = arith.constant 56 : index
    %929 = memref.load %arg6[%c56_572] : memref<72xf32, #tpu.memory_space<smem>>
    %c2_573 = arith.constant 2 : index
    %c2_574 = arith.constant 2 : index
    %c4_575 = arith.constant 4 : index
    %930 = vector.load %arg11[%c2_573, %c2_574, %c4_575] : memref<4x24x24xf32, #tpu.memory_space<vmem>>, vector<1x16x16xf32>
    %931 = vector.shape_cast %930 : vector<1x16x16xf32> to vector<16x16xf32>
    %932 = vector.broadcast %929 : f32 to vector<16x16xf32>
    %933 = arith.mulf %932, %931 : vector<16x16xf32>
    %934 = arith.addf %928, %933 : vector<16x16xf32>
    %c57_576 = arith.constant 57 : index
    %935 = memref.load %arg6[%c57_576] : memref<72xf32, #tpu.memory_space<smem>>
    %c2_577 = arith.constant 2 : index
    %c3_578 = arith.constant 3 : index
    %c4_579 = arith.constant 4 : index
    %936 = vector.load %arg11[%c2_577, %c3_578, %c4_579] : memref<4x24x24xf32, #tpu.memory_space<vmem>>, vector<1x16x16xf32>
    %937 = vector.shape_cast %936 : vector<1x16x16xf32> to vector<16x16xf32>
    %938 = vector.broadcast %935 : f32 to vector<16x16xf32>
    %939 = arith.mulf %938, %937 : vector<16x16xf32>
    %940 = arith.addf %934, %939 : vector<16x16xf32>
    %c58_580 = arith.constant 58 : index
    %941 = memref.load %arg6[%c58_580] : memref<72xf32, #tpu.memory_space<smem>>
    %c2_581 = arith.constant 2 : index
    %c4_582 = arith.constant 4 : index
    %c4_583 = arith.constant 4 : index
    %942 = vector.load %arg11[%c2_581, %c4_582, %c4_583] : memref<4x24x24xf32, #tpu.memory_space<vmem>>, vector<1x16x16xf32>
    %943 = vector.shape_cast %942 : vector<1x16x16xf32> to vector<16x16xf32>
    %944 = vector.broadcast %941 : f32 to vector<16x16xf32>
    %945 = arith.mulf %944, %943 : vector<16x16xf32>
    %946 = arith.addf %940, %945 : vector<16x16xf32>
    %c59_584 = arith.constant 59 : index
    %947 = memref.load %arg6[%c59_584] : memref<72xf32, #tpu.memory_space<smem>>
    %c2_585 = arith.constant 2 : index
    %c5_586 = arith.constant 5 : index
    %c4_587 = arith.constant 4 : index
    %948 = vector.load %arg11[%c2_585, %c5_586, %c4_587] : memref<4x24x24xf32, #tpu.memory_space<vmem>>, vector<1x16x16xf32>
    %949 = vector.shape_cast %948 : vector<1x16x16xf32> to vector<16x16xf32>
    %950 = vector.broadcast %947 : f32 to vector<16x16xf32>
    %951 = arith.mulf %950, %949 : vector<16x16xf32>
    %952 = arith.addf %946, %951 : vector<16x16xf32>
    %c60_588 = arith.constant 60 : index
    %953 = memref.load %arg6[%c60_588] : memref<72xf32, #tpu.memory_space<smem>>
    %c2_589 = arith.constant 2 : index
    %c6_590 = arith.constant 6 : index
    %c4_591 = arith.constant 4 : index
    %954 = vector.load %arg11[%c2_589, %c6_590, %c4_591] : memref<4x24x24xf32, #tpu.memory_space<vmem>>, vector<1x16x16xf32>
    %955 = vector.shape_cast %954 : vector<1x16x16xf32> to vector<16x16xf32>
    %956 = vector.broadcast %953 : f32 to vector<16x16xf32>
    %957 = arith.mulf %956, %955 : vector<16x16xf32>
    %958 = arith.addf %952, %957 : vector<16x16xf32>
    %c61_592 = arith.constant 61 : index
    %959 = memref.load %arg6[%c61_592] : memref<72xf32, #tpu.memory_space<smem>>
    %c2_593 = arith.constant 2 : index
    %c7_594 = arith.constant 7 : index
    %c4_595 = arith.constant 4 : index
    %960 = vector.load %arg11[%c2_593, %c7_594, %c4_595] : memref<4x24x24xf32, #tpu.memory_space<vmem>>, vector<1x16x16xf32>
    %961 = vector.shape_cast %960 : vector<1x16x16xf32> to vector<16x16xf32>
    %962 = vector.broadcast %959 : f32 to vector<16x16xf32>
    %963 = arith.mulf %962, %961 : vector<16x16xf32>
    %964 = arith.addf %958, %963 : vector<16x16xf32>
    %c62_596 = arith.constant 62 : index
    %965 = memref.load %arg6[%c62_596] : memref<72xf32, #tpu.memory_space<smem>>
    %c2_597 = arith.constant 2 : index
    %c8_598 = arith.constant 8 : index
    %c4_599 = arith.constant 4 : index
    %966 = vector.load %arg11[%c2_597, %c8_598, %c4_599] : memref<4x24x24xf32, #tpu.memory_space<vmem>>, vector<1x16x16xf32>
    %967 = vector.shape_cast %966 : vector<1x16x16xf32> to vector<16x16xf32>
    %968 = vector.broadcast %965 : f32 to vector<16x16xf32>
    %969 = arith.mulf %968, %967 : vector<16x16xf32>
    %970 = arith.addf %964, %969 : vector<16x16xf32>
    %c63_600 = arith.constant 63 : index
    %971 = memref.load %arg6[%c63_600] : memref<72xf32, #tpu.memory_space<smem>>
    %c3_601 = arith.constant 3 : index
    %c0_602 = arith.constant 0 : index
    %c4_603 = arith.constant 4 : index
    %972 = vector.load %arg11[%c3_601, %c0_602, %c4_603] : memref<4x24x24xf32, #tpu.memory_space<vmem>>, vector<1x16x16xf32>
    %973 = vector.shape_cast %972 : vector<1x16x16xf32> to vector<16x16xf32>
    %974 = vector.broadcast %971 : f32 to vector<16x16xf32>
    %975 = arith.mulf %974, %973 : vector<16x16xf32>
    %976 = arith.addf %970, %975 : vector<16x16xf32>
    %c64_604 = arith.constant 64 : index
    %977 = memref.load %arg6[%c64_604] : memref<72xf32, #tpu.memory_space<smem>>
    %c3_605 = arith.constant 3 : index
    %c1_606 = arith.constant 1 : index
    %c4_607 = arith.constant 4 : index
    %978 = vector.load %arg11[%c3_605, %c1_606, %c4_607] : memref<4x24x24xf32, #tpu.memory_space<vmem>>, vector<1x16x16xf32>
    %979 = vector.shape_cast %978 : vector<1x16x16xf32> to vector<16x16xf32>
    %980 = vector.broadcast %977 : f32 to vector<16x16xf32>
    %981 = arith.mulf %980, %979 : vector<16x16xf32>
    %982 = arith.addf %976, %981 : vector<16x16xf32>
    %c65_608 = arith.constant 65 : index
    %983 = memref.load %arg6[%c65_608] : memref<72xf32, #tpu.memory_space<smem>>
    %c3_609 = arith.constant 3 : index
    %c2_610 = arith.constant 2 : index
    %c4_611 = arith.constant 4 : index
    %984 = vector.load %arg11[%c3_609, %c2_610, %c4_611] : memref<4x24x24xf32, #tpu.memory_space<vmem>>, vector<1x16x16xf32>
    %985 = vector.shape_cast %984 : vector<1x16x16xf32> to vector<16x16xf32>
    %986 = vector.broadcast %983 : f32 to vector<16x16xf32>
    %987 = arith.mulf %986, %985 : vector<16x16xf32>
    %988 = arith.addf %982, %987 : vector<16x16xf32>
    %c66_612 = arith.constant 66 : index
    %989 = memref.load %arg6[%c66_612] : memref<72xf32, #tpu.memory_space<smem>>
    %c3_613 = arith.constant 3 : index
    %c3_614 = arith.constant 3 : index
    %c4_615 = arith.constant 4 : index
    %990 = vector.load %arg11[%c3_613, %c3_614, %c4_615] : memref<4x24x24xf32, #tpu.memory_space<vmem>>, vector<1x16x16xf32>
    %991 = vector.shape_cast %990 : vector<1x16x16xf32> to vector<16x16xf32>
    %992 = vector.broadcast %989 : f32 to vector<16x16xf32>
    %993 = arith.mulf %992, %991 : vector<16x16xf32>
    %994 = arith.addf %988, %993 : vector<16x16xf32>
    %c67_616 = arith.constant 67 : index
    %995 = memref.load %arg6[%c67_616] : memref<72xf32, #tpu.memory_space<smem>>
    %c3_617 = arith.constant 3 : index
    %c4_618 = arith.constant 4 : index
    %c4_619 = arith.constant 4 : index
    %996 = vector.load %arg11[%c3_617, %c4_618, %c4_619] : memref<4x24x24xf32, #tpu.memory_space<vmem>>, vector<1x16x16xf32>
    %997 = vector.shape_cast %996 : vector<1x16x16xf32> to vector<16x16xf32>
    %998 = vector.broadcast %995 : f32 to vector<16x16xf32>
    %999 = arith.mulf %998, %997 : vector<16x16xf32>
    %1000 = arith.addf %994, %999 : vector<16x16xf32>
    %c68_620 = arith.constant 68 : index
    %1001 = memref.load %arg6[%c68_620] : memref<72xf32, #tpu.memory_space<smem>>
    %c3_621 = arith.constant 3 : index
    %c5_622 = arith.constant 5 : index
    %c4_623 = arith.constant 4 : index
    %1002 = vector.load %arg11[%c3_621, %c5_622, %c4_623] : memref<4x24x24xf32, #tpu.memory_space<vmem>>, vector<1x16x16xf32>
    %1003 = vector.shape_cast %1002 : vector<1x16x16xf32> to vector<16x16xf32>
    %1004 = vector.broadcast %1001 : f32 to vector<16x16xf32>
    %1005 = arith.mulf %1004, %1003 : vector<16x16xf32>
    %1006 = arith.addf %1000, %1005 : vector<16x16xf32>
    %c69_624 = arith.constant 69 : index
    %1007 = memref.load %arg6[%c69_624] : memref<72xf32, #tpu.memory_space<smem>>
    %c3_625 = arith.constant 3 : index
    %c6_626 = arith.constant 6 : index
    %c4_627 = arith.constant 4 : index
    %1008 = vector.load %arg11[%c3_625, %c6_626, %c4_627] : memref<4x24x24xf32, #tpu.memory_space<vmem>>, vector<1x16x16xf32>
    %1009 = vector.shape_cast %1008 : vector<1x16x16xf32> to vector<16x16xf32>
    %1010 = vector.broadcast %1007 : f32 to vector<16x16xf32>
    %1011 = arith.mulf %1010, %1009 : vector<16x16xf32>
    %1012 = arith.addf %1006, %1011 : vector<16x16xf32>
    %c70_628 = arith.constant 70 : index
    %1013 = memref.load %arg6[%c70_628] : memref<72xf32, #tpu.memory_space<smem>>
    %c3_629 = arith.constant 3 : index
    %c7_630 = arith.constant 7 : index
    %c4_631 = arith.constant 4 : index
    %1014 = vector.load %arg11[%c3_629, %c7_630, %c4_631] : memref<4x24x24xf32, #tpu.memory_space<vmem>>, vector<1x16x16xf32>
    %1015 = vector.shape_cast %1014 : vector<1x16x16xf32> to vector<16x16xf32>
    %1016 = vector.broadcast %1013 : f32 to vector<16x16xf32>
    %1017 = arith.mulf %1016, %1015 : vector<16x16xf32>
    %1018 = arith.addf %1012, %1017 : vector<16x16xf32>
    %c71_632 = arith.constant 71 : index
    %1019 = memref.load %arg6[%c71_632] : memref<72xf32, #tpu.memory_space<smem>>
    %c3_633 = arith.constant 3 : index
    %c8_634 = arith.constant 8 : index
    %c4_635 = arith.constant 4 : index
    %1020 = vector.load %arg11[%c3_633, %c8_634, %c4_635] : memref<4x24x24xf32, #tpu.memory_space<vmem>>, vector<1x16x16xf32>
    %1021 = vector.shape_cast %1020 : vector<1x16x16xf32> to vector<16x16xf32>
    %1022 = vector.broadcast %1019 : f32 to vector<16x16xf32>
    %1023 = arith.mulf %1022, %1021 : vector<16x16xf32>
    %1024 = arith.addf %1018, %1023 : vector<16x16xf32>
    %c1_636 = arith.constant 1 : index
    %1025 = memref.load %arg7[%c1_636] : memref<2xf32, #tpu.memory_space<smem>>
    %1026 = vector.broadcast %1025 : f32 to vector<16x16xf32>
    %1027 = arith.addf %1024, %1026 : vector<16x16xf32>
    %cst_637 = arith.constant 0.000000e+00 : f32
    %1028 = vector.broadcast %cst_637 : f32 to vector<16x16xf32>
    %1029 = arith.maximumf %1027, %1028 : vector<16x16xf32>
    %c1_638 = arith.constant 1 : index
    %c0_639 = arith.constant 0 : index
    %c4_640 = arith.constant 4 : index
    %1030 = vector.load %arg13[%c1_638, %c0_639, %c4_640] : memref<2x16x24xf32, #tpu.memory_space<vmem>>, vector<1x16x16xf32>
    %1031 = vector.shape_cast %1030 : vector<1x16x16xf32> to vector<16x16xf32>
    %1032 = vector.shape_cast %1029 : vector<16x16xf32> to vector<1x16x16xf32>
    tpu.vector_store %arg13[%c1_638, %c0_639, %c4_640], %1032 {strides = array<i32>} : memref<2x16x24xf32, #tpu.memory_space<vmem>>, vector<1x16x16xf32>,
    %cst_641 = arith.constant 0.000000e+00 : f32
    %1033 = vector.broadcast %cst_641 : f32 to vector<16x16xf32>
    %c0_642 = arith.constant 0 : index
    %1034 = memref.load %arg8[%c0_642] : memref<18xf32, #tpu.memory_space<smem>>
    %c0_643 = arith.constant 0 : index
    %c0_644 = arith.constant 0 : index
    %c0_645 = arith.constant 0 : index
    %1035 = vector.load %arg13[%c0_643, %c0_644, %c0_645] : memref<2x16x24xf32, #tpu.memory_space<vmem>>, vector<1x16x16xf32>
    %1036 = vector.shape_cast %1035 : vector<1x16x16xf32> to vector<16x16xf32>
    %1037 = vector.broadcast %1034 : f32 to vector<16x16xf32>
    %1038 = arith.mulf %1037, %1036 : vector<16x16xf32>
    %1039 = arith.addf %1033, %1038 : vector<16x16xf32>
    %c1_646 = arith.constant 1 : index
    %1040 = memref.load %arg8[%c1_646] : memref<18xf32, #tpu.memory_space<smem>>
    %c0_647 = arith.constant 0 : index
    %c0_648 = arith.constant 0 : index
    %c1_649 = arith.constant 1 : index
    %1041 = vector.load %arg13[%c0_647, %c0_648, %c1_649] : memref<2x16x24xf32, #tpu.memory_space<vmem>>, vector<1x16x16xf32>
    %1042 = vector.shape_cast %1041 : vector<1x16x16xf32> to vector<16x16xf32>
    %1043 = vector.broadcast %1040 : f32 to vector<16x16xf32>
    %1044 = arith.mulf %1043, %1042 : vector<16x16xf32>
    %1045 = arith.addf %1039, %1044 : vector<16x16xf32>
    %c2_650 = arith.constant 2 : index
    %1046 = memref.load %arg8[%c2_650] : memref<18xf32, #tpu.memory_space<smem>>
    %c0_651 = arith.constant 0 : index
    %c0_652 = arith.constant 0 : index
    %c2_653 = arith.constant 2 : index
    %1047 = vector.load %arg13[%c0_651, %c0_652, %c2_653] : memref<2x16x24xf32, #tpu.memory_space<vmem>>, vector<1x16x16xf32>
    %1048 = vector.shape_cast %1047 : vector<1x16x16xf32> to vector<16x16xf32>
    %1049 = vector.broadcast %1046 : f32 to vector<16x16xf32>
    %1050 = arith.mulf %1049, %1048 : vector<16x16xf32>
    %1051 = arith.addf %1045, %1050 : vector<16x16xf32>
    %c3_654 = arith.constant 3 : index
    %1052 = memref.load %arg8[%c3_654] : memref<18xf32, #tpu.memory_space<smem>>
    %c0_655 = arith.constant 0 : index
    %c0_656 = arith.constant 0 : index
    %c3_657 = arith.constant 3 : index
    %1053 = vector.load %arg13[%c0_655, %c0_656, %c3_657] : memref<2x16x24xf32, #tpu.memory_space<vmem>>, vector<1x16x16xf32>
    %1054 = vector.shape_cast %1053 : vector<1x16x16xf32> to vector<16x16xf32>
    %1055 = vector.broadcast %1052 : f32 to vector<16x16xf32>
    %1056 = arith.mulf %1055, %1054 : vector<16x16xf32>
    %1057 = arith.addf %1051, %1056 : vector<16x16xf32>
    %c4_658 = arith.constant 4 : index
    %1058 = memref.load %arg8[%c4_658] : memref<18xf32, #tpu.memory_space<smem>>
    %c0_659 = arith.constant 0 : index
    %c0_660 = arith.constant 0 : index
    %c4_661 = arith.constant 4 : index
    %1059 = vector.load %arg13[%c0_659, %c0_660, %c4_661] : memref<2x16x24xf32, #tpu.memory_space<vmem>>, vector<1x16x16xf32>
    %1060 = vector.shape_cast %1059 : vector<1x16x16xf32> to vector<16x16xf32>
    %1061 = vector.broadcast %1058 : f32 to vector<16x16xf32>
    %1062 = arith.mulf %1061, %1060 : vector<16x16xf32>
    %1063 = arith.addf %1057, %1062 : vector<16x16xf32>
    %c5_662 = arith.constant 5 : index
    %1064 = memref.load %arg8[%c5_662] : memref<18xf32, #tpu.memory_space<smem>>
    %c0_663 = arith.constant 0 : index
    %c0_664 = arith.constant 0 : index
    %c5_665 = arith.constant 5 : index
    %1065 = vector.load %arg13[%c0_663, %c0_664, %c5_665] : memref<2x16x24xf32, #tpu.memory_space<vmem>>, vector<1x16x16xf32>
    %1066 = vector.shape_cast %1065 : vector<1x16x16xf32> to vector<16x16xf32>
    %1067 = vector.broadcast %1064 : f32 to vector<16x16xf32>
    %1068 = arith.mulf %1067, %1066 : vector<16x16xf32>
    %1069 = arith.addf %1063, %1068 : vector<16x16xf32>
    %c6_666 = arith.constant 6 : index
    %1070 = memref.load %arg8[%c6_666] : memref<18xf32, #tpu.memory_space<smem>>
    %c0_667 = arith.constant 0 : index
    %c0_668 = arith.constant 0 : index
    %c6_669 = arith.constant 6 : index
    %1071 = vector.load %arg13[%c0_667, %c0_668, %c6_669] : memref<2x16x24xf32, #tpu.memory_space<vmem>>, vector<1x16x16xf32>
    %1072 = vector.shape_cast %1071 : vector<1x16x16xf32> to vector<16x16xf32>
    %1073 = vector.broadcast %1070 : f32 to vector<16x16xf32>
    %1074 = arith.mulf %1073, %1072 : vector<16x16xf32>
    %1075 = arith.addf %1069, %1074 : vector<16x16xf32>
    %c7_670 = arith.constant 7 : index
    %1076 = memref.load %arg8[%c7_670] : memref<18xf32, #tpu.memory_space<smem>>
    %c0_671 = arith.constant 0 : index
    %c0_672 = arith.constant 0 : index
    %c7_673 = arith.constant 7 : index
    %1077 = vector.load %arg13[%c0_671, %c0_672, %c7_673] : memref<2x16x24xf32, #tpu.memory_space<vmem>>, vector<1x16x16xf32>
    %1078 = vector.shape_cast %1077 : vector<1x16x16xf32> to vector<16x16xf32>
    %1079 = vector.broadcast %1076 : f32 to vector<16x16xf32>
    %1080 = arith.mulf %1079, %1078 : vector<16x16xf32>
    %1081 = arith.addf %1075, %1080 : vector<16x16xf32>
    %c8_674 = arith.constant 8 : index
    %1082 = memref.load %arg8[%c8_674] : memref<18xf32, #tpu.memory_space<smem>>
    %c0_675 = arith.constant 0 : index
    %c0_676 = arith.constant 0 : index
    %c8_677 = arith.constant 8 : index
    %1083 = vector.load %arg13[%c0_675, %c0_676, %c8_677] : memref<2x16x24xf32, #tpu.memory_space<vmem>>, vector<1x16x16xf32>
    %1084 = vector.shape_cast %1083 : vector<1x16x16xf32> to vector<16x16xf32>
    %1085 = vector.broadcast %1082 : f32 to vector<16x16xf32>
    %1086 = arith.mulf %1085, %1084 : vector<16x16xf32>
    %1087 = arith.addf %1081, %1086 : vector<16x16xf32>
    %c9_678 = arith.constant 9 : index
    %1088 = memref.load %arg8[%c9_678] : memref<18xf32, #tpu.memory_space<smem>>
    %c1_679 = arith.constant 1 : index
    %c0_680 = arith.constant 0 : index
    %c0_681 = arith.constant 0 : index
    %1089 = vector.load %arg13[%c1_679, %c0_680, %c0_681] : memref<2x16x24xf32, #tpu.memory_space<vmem>>, vector<1x16x16xf32>
    %1090 = vector.shape_cast %1089 : vector<1x16x16xf32> to vector<16x16xf32>
    %1091 = vector.broadcast %1088 : f32 to vector<16x16xf32>
    %1092 = arith.mulf %1091, %1090 : vector<16x16xf32>
    %1093 = arith.addf %1087, %1092 : vector<16x16xf32>
    %c10_682 = arith.constant 10 : index
    %1094 = memref.load %arg8[%c10_682] : memref<18xf32, #tpu.memory_space<smem>>
    %c1_683 = arith.constant 1 : index
    %c0_684 = arith.constant 0 : index
    %c1_685 = arith.constant 1 : index
    %1095 = vector.load %arg13[%c1_683, %c0_684, %c1_685] : memref<2x16x24xf32, #tpu.memory_space<vmem>>, vector<1x16x16xf32>
    %1096 = vector.shape_cast %1095 : vector<1x16x16xf32> to vector<16x16xf32>
    %1097 = vector.broadcast %1094 : f32 to vector<16x16xf32>
    %1098 = arith.mulf %1097, %1096 : vector<16x16xf32>
    %1099 = arith.addf %1093, %1098 : vector<16x16xf32>
    %c11_686 = arith.constant 11 : index
    %1100 = memref.load %arg8[%c11_686] : memref<18xf32, #tpu.memory_space<smem>>
    %c1_687 = arith.constant 1 : index
    %c0_688 = arith.constant 0 : index
    %c2_689 = arith.constant 2 : index
    %1101 = vector.load %arg13[%c1_687, %c0_688, %c2_689] : memref<2x16x24xf32, #tpu.memory_space<vmem>>, vector<1x16x16xf32>
    %1102 = vector.shape_cast %1101 : vector<1x16x16xf32> to vector<16x16xf32>
    %1103 = vector.broadcast %1100 : f32 to vector<16x16xf32>
    %1104 = arith.mulf %1103, %1102 : vector<16x16xf32>
    %1105 = arith.addf %1099, %1104 : vector<16x16xf32>
    %c12_690 = arith.constant 12 : index
    %1106 = memref.load %arg8[%c12_690] : memref<18xf32, #tpu.memory_space<smem>>
    %c1_691 = arith.constant 1 : index
    %c0_692 = arith.constant 0 : index
    %c3_693 = arith.constant 3 : index
    %1107 = vector.load %arg13[%c1_691, %c0_692, %c3_693] : memref<2x16x24xf32, #tpu.memory_space<vmem>>, vector<1x16x16xf32>
    %1108 = vector.shape_cast %1107 : vector<1x16x16xf32> to vector<16x16xf32>
    %1109 = vector.broadcast %1106 : f32 to vector<16x16xf32>
    %1110 = arith.mulf %1109, %1108 : vector<16x16xf32>
    %1111 = arith.addf %1105, %1110 : vector<16x16xf32>
    %c13_694 = arith.constant 13 : index
    %1112 = memref.load %arg8[%c13_694] : memref<18xf32, #tpu.memory_space<smem>>
    %c1_695 = arith.constant 1 : index
    %c0_696 = arith.constant 0 : index
    %c4_697 = arith.constant 4 : index
    %1113 = vector.load %arg13[%c1_695, %c0_696, %c4_697] : memref<2x16x24xf32, #tpu.memory_space<vmem>>, vector<1x16x16xf32>
    %1114 = vector.shape_cast %1113 : vector<1x16x16xf32> to vector<16x16xf32>
    %1115 = vector.broadcast %1112 : f32 to vector<16x16xf32>
    %1116 = arith.mulf %1115, %1114 : vector<16x16xf32>
    %1117 = arith.addf %1111, %1116 : vector<16x16xf32>
    %c14_698 = arith.constant 14 : index
    %1118 = memref.load %arg8[%c14_698] : memref<18xf32, #tpu.memory_space<smem>>
    %c1_699 = arith.constant 1 : index
    %c0_700 = arith.constant 0 : index
    %c5_701 = arith.constant 5 : index
    %1119 = vector.load %arg13[%c1_699, %c0_700, %c5_701] : memref<2x16x24xf32, #tpu.memory_space<vmem>>, vector<1x16x16xf32>
    %1120 = vector.shape_cast %1119 : vector<1x16x16xf32> to vector<16x16xf32>
    %1121 = vector.broadcast %1118 : f32 to vector<16x16xf32>
    %1122 = arith.mulf %1121, %1120 : vector<16x16xf32>
    %1123 = arith.addf %1117, %1122 : vector<16x16xf32>
    %c15_702 = arith.constant 15 : index
    %1124 = memref.load %arg8[%c15_702] : memref<18xf32, #tpu.memory_space<smem>>
    %c1_703 = arith.constant 1 : index
    %c0_704 = arith.constant 0 : index
    %c6_705 = arith.constant 6 : index
    %1125 = vector.load %arg13[%c1_703, %c0_704, %c6_705] : memref<2x16x24xf32, #tpu.memory_space<vmem>>, vector<1x16x16xf32>
    %1126 = vector.shape_cast %1125 : vector<1x16x16xf32> to vector<16x16xf32>
    %1127 = vector.broadcast %1124 : f32 to vector<16x16xf32>
    %1128 = arith.mulf %1127, %1126 : vector<16x16xf32>
    %1129 = arith.addf %1123, %1128 : vector<16x16xf32>
    %c16_706 = arith.constant 16 : index
    %1130 = memref.load %arg8[%c16_706] : memref<18xf32, #tpu.memory_space<smem>>
    %c1_707 = arith.constant 1 : index
    %c0_708 = arith.constant 0 : index
    %c7_709 = arith.constant 7 : index
    %1131 = vector.load %arg13[%c1_707, %c0_708, %c7_709] : memref<2x16x24xf32, #tpu.memory_space<vmem>>, vector<1x16x16xf32>
    %1132 = vector.shape_cast %1131 : vector<1x16x16xf32> to vector<16x16xf32>
    %1133 = vector.broadcast %1130 : f32 to vector<16x16xf32>
    %1134 = arith.mulf %1133, %1132 : vector<16x16xf32>
    %1135 = arith.addf %1129, %1134 : vector<16x16xf32>
    %c17_710 = arith.constant 17 : index
    %1136 = memref.load %arg8[%c17_710] : memref<18xf32, #tpu.memory_space<smem>>
    %c1_711 = arith.constant 1 : index
    %c0_712 = arith.constant 0 : index
    %c8_713 = arith.constant 8 : index
    %1137 = vector.load %arg13[%c1_711, %c0_712, %c8_713] : memref<2x16x24xf32, #tpu.memory_space<vmem>>, vector<1x16x16xf32>
    %1138 = vector.shape_cast %1137 : vector<1x16x16xf32> to vector<16x16xf32>
    %1139 = vector.broadcast %1136 : f32 to vector<16x16xf32>
    %1140 = arith.mulf %1139, %1138 : vector<16x16xf32>
    %1141 = arith.addf %1135, %1140 : vector<16x16xf32>
    %c0_714 = arith.constant 0 : index
    %1142 = memref.load %arg9[%c0_714] : memref<1xf32, #tpu.memory_space<smem>>
    %1143 = vector.broadcast %1142 : f32 to vector<16x16xf32>
    %1144 = arith.addf %1141, %1143 : vector<16x16xf32>
    %cst_715 = arith.constant 0.000000e+00 : f32
    %1145 = vector.broadcast %cst_715 : f32 to vector<16x16xf32>
    %1146 = arith.maximumf %1144, %1145 : vector<16x16xf32>
    %1147 = arith.addf %582, %1146 : vector<16x16xf32>
    %cst_716 = arith.constant 0.000000e+00 : f32
    %1148 = vector.broadcast %cst_716 : f32 to vector<16x16xf32>
    %1149 = arith.subf %1148, %1147 : vector<16x16xf32>
    %1150 = math.exp %1149 : vector<16x16xf32>
    %cst_717 = arith.constant 1.000000e+00 : f32
    %1151 = vector.broadcast %cst_717 : f32 to vector<16x16xf32>
    %1152 = arith.addf %1151, %1150 : vector<16x16xf32>
    %cst_718 = arith.constant 1.000000e+00 : f32
    %1153 = vector.broadcast %cst_718 : f32 to vector<16x16xf32>
    %1154 = arith.divf %1153, %1152 : vector<16x16xf32>
    %c0_719 = arith.constant 0 : index
    %c0_720 = arith.constant 0 : index
    %c0_721 = arith.constant 0 : index
    %c0_722 = arith.constant 0 : index
    %1155 = vector.load %arg10[%c0_719, %c0_720, %c0_721, %c0_722] : memref<1x1x16x16xf32, #tpu.memory_space<vmem>>, vector<1x1x16x16xf32>
    %1156 = vector.shape_cast %1155 : vector<1x1x16x16xf32> to vector<16x16xf32>
    %1157 = vector.shape_cast %1154 : vector<16x16xf32> to vector<1x1x16x16xf32>
    tpu.vector_store %arg10[%c0_719, %c0_720, %c0_721, %c0_722], %1157 {strides = array<i32>} : memref<1x1x16x16xf32, #tpu.memory_space<vmem>>, vector<1x1x16x16xf32>,
    return
  }
  func.func @transform_0(%arg0: i32) -> (i32, i32, i32, i32) {
    %c0_i32 = arith.constant 0 : i32
    %c0_i32_0 = arith.constant 0 : i32
    %c0_i32_1 = arith.constant 0 : i32
    %c0_i32_2 = arith.constant 0 : i32
    return %arg0, %c0_i32, %c0_i32_0, %c0_i32_1 : i32, i32, i32, i32
  }
  func.func @transform_1(%arg0: i32) -> i32 {
    %c0_i32 = arith.constant 0 : i32
    %c0_i32_0 = arith.constant 0 : i32
    return %c0_i32 : i32
  }
  func.func @transform_2(%arg0: i32) -> i32 {
    %c0_i32 = arith.constant 0 : i32
    %c0_i32_0 = arith.constant 0 : i32
    return %c0_i32 : i32
  }
  func.func @transform_3(%arg0: i32) -> i32 {
    %c0_i32 = arith.constant 0 : i32
    %c0_i32_0 = arith.constant 0 : i32
    return %c0_i32 : i32
  }
  func.func @transform_4(%arg0: i32) -> i32 {
    %c0_i32 = arith.constant 0 : i32
    %c0_i32_0 = arith.constant 0 : i32
    return %c0_i32 : i32
  }
  func.func @transform_5(%arg0: i32) -> i32 {
    %c0_i32 = arith.constant 0 : i32
    %c0_i32_0 = arith.constant 0 : i32
    return %c0_i32 : i32
  }
  func.func @transform_6(%arg0: i32) -> i32 {
    %c0_i32 = arith.constant 0 : i32
    %c0_i32_0 = arith.constant 0 : i32
    return %c0_i32 : i32
  }
  func.func @transform_7(%arg0: i32) -> i32 {
    %c0_i32 = arith.constant 0 : i32
    %c0_i32_0 = arith.constant 0 : i32
    return %c0_i32 : i32
  }
  func.func @transform_8(%arg0: i32) -> i32 {
    %c0_i32 = arith.constant 0 : i32
    %c0_i32_0 = arith.constant 0 : i32
    return %c0_i32 : i32
  }
  func.func @transform_9(%arg0: i32) -> (i32, i32, i32, i32) {
    %c0_i32 = arith.constant 0 : i32
    %c0_i32_0 = arith.constant 0 : i32
    %c0_i32_1 = arith.constant 0 : i32
    %c0_i32_2 = arith.constant 0 : i32
    return %arg0, %c0_i32, %c0_i32_0, %c0_i32_1 : i32, i32, i32, i32
  }
}

</mosaic_0001>

<llo_original>
// kernel: tpu_custom_call.1
$region0: #{tpu_custom_call.1}
  #allocation0 [shape = 'u32[]', space=smem, size = 0x4, offset = 0x4, fixed_abs, tag = 'smem constant byte address 0x4 - core index']
  #allocation1 [shape = 'u32[144,128]{1,0:T(1,128)}', space=vmem, size = 0x12000, scoped, tag = 'internal scratch']
  #allocation2 [shape = 'f32[4,24,24]{2,1,0:T(8,128)}', space=vmem, size = 0xc000, scoped, tag = 'scratch operand']
  #allocation3 [shape = 'f32[2,24,16]{2,1,0:T(8,128)}', space=vmem, size = 0x6000, scoped, tag = 'scratch operand']
  #allocation4 [shape = 'f32[2,16,24]{2,1,0:T(8,128)}', space=vmem, size = 0x4000, scoped, tag = 'scratch operand']
  #allocation5 [shape = 'f32[1]{0:T(128)S(6)}', space=smem, size = 0x200, scoped, tag = 'scoped memory for tpu_custom_call.1']
  #allocation6 [shape = 'f32[1]{0:T(128)S(6)}', space=smem, size = 0x200, scoped, tag = 'scoped memory for tpu_custom_call.1']
  %s0 = inlined_call_operand.hbm [shape: f32[2,4,16,16], index: 0, kind: input, shape index: {}]
  %s1 = inlined_call_operand.vmem [shape: f32[72], index: 1, kind: input, shape index: {}]
  %s2 = inlined_call_operand.vmem [shape: f32[2], index: 2, kind: input, shape index: {}]
  %s3 = inlined_call_operand.vmem [shape: f32[18], index: 3, kind: input, shape index: {}]
  %s4 = inlined_call_operand.<no memory space> [shape: f32[1], index: 4, kind: input, shape index: {}]
  %s5 = inlined_call_operand.vmem [shape: f32[72], index: 5, kind: input, shape index: {}]
  %s6 = inlined_call_operand.vmem [shape: f32[2], index: 6, kind: input, shape index: {}]
  %s7 = inlined_call_operand.vmem [shape: f32[18], index: 7, kind: input, shape index: {}]
  %s8 = inlined_call_operand.<no memory space> [shape: f32[1], index: 8, kind: input, shape index: {}]
  %s9 = inlined_call_operand.hbm [shape: f32[2,1,16,16], index: 9, kind: output, shape index: {}]
  %s10 = sld [smem:[#allocation0]]
  $region97: #{tpu_custom_call.1} parent=0
    _
  %s12 = ssub.s32 1, %s10
  %s13 = scalar_select 0, %s12, %s10
  %14 = sst [smem:[#allocation5]] %s4
  %15 = sst [smem:[#allocation6]] %s8
  $region1: #{tpu_custom_call.1} parent=0
    #allocation7 [shape = 'u8[65536]{0}', space=vmem, size = 0x10000, scoped, tag = 'input window, operand 0']
    #allocation8 [shape = 's32[2]{0}', space=sflag, size = 0x8, scoped, tag = 'scoped memory for tpu_custom_call.1']
    #allocation9 [shape = 's32[2]{0}', space=sflag, size = 0x8, scoped, tag = 'scoped memory for tpu_custom_call.1']
    #allocation10 [shape = 's32[2]{0}', space=sflag, size = 0x8, scoped, tag = 'scoped memory for tpu_custom_call.1']
    #allocation11 [shape = 'u8[512]{0}', space=smem, size = 0x200, scoped, tag = 'input window, operand 1, single buffered']
    #allocation12 [shape = 'u8[512]{0}', space=smem, size = 0x200, scoped, tag = 'input window, operand 2, single buffered']
    #allocation13 [shape = 's32[1]{0}', space=sflag, size = 0x4, scoped, tag = 'scoped memory for tpu_custom_call.1']
    #allocation14 [shape = 'u8[512]{0}', space=smem, size = 0x200, scoped, tag = 'input window, operand 3, single buffered']
    #allocation15 [shape = 'u8[512]{0}', space=smem, size = 0x200, scoped, tag = 'input window, operand 5, single buffered']
    #allocation16 [shape = 's32[1]{0}', space=sflag, size = 0x4, scoped, tag = 'scoped memory for tpu_custom_call.1']
    #allocation17 [shape = 'u8[512]{0}', space=smem, size = 0x200, scoped, tag = 'input window, operand 6, single buffered']
    #allocation18 [shape = 'u8[512]{0}', space=smem, size = 0x200, scoped, tag = 'input window, operand 7, single buffered']
    #allocation19 [shape = 's32[1]{0}', space=sflag, size = 0x4, scoped, tag = 'scoped memory for tpu_custom_call.1']
    #allocation20 [shape = 'u8[16384]{0}', space=vmem, size = 0x4000, scoped, tag = 'output window, operand 0']
    %16 = vsyncpa [#allocation8], 0
    %s17 = scalar_lea.sflag [#allocation8], 1
    %18 = vsyncpa %s17, 0
    %19 = vsyncpa [#allocation10], 0
    %20 = vsyncpa [#allocation13], 0
    %21 = vsyncpa [#allocation16], 0
    %22 = vsyncpa [#allocation19], 0
    %23 = vsyncpa [#allocation9], 0
    %s24 = scalar_lea.sflag [#allocation9], 1
    %25 = vsyncpa %s24, 0
    loop: start=0, step=1, limit=4
    $region2: #{tpu_custom_call.1} parent=1 // loop_pre_header
      _
    $region3: #{tpu_custom_call.1} parent=1 // loop_header
      %s27 = sphi 0, %s31
      %p28 = scmp.ge.s32.totalorder %s27, 4
      %s37 = sphi 0, %s39
      %s40 = sphi 0, %s37
      %s41 = sphi 0, %s40
      %s57 = sphi 0, %s41
      %s61 = sphi 0, %s61
      %s63 = sphi 0, %s61
      %s64 = sphi 0, %s63
      %s78 = sphi 0, %s64
      %s82 = sphi 0, %s82
      %s84 = sphi 0, %s82
      %s85 = sphi 0, %s84
      %s99 = sphi 0, %s85
      %s103 = sphi 0, %s103
      %s105 = sphi 0, %s103
      %s106 = sphi 0, %s105
      %s120 = sphi 0, %s106
      %s124 = sphi 0, %s124
      %s126 = sphi 0, %s124
      %s127 = sphi 0, %s126
      %s141 = sphi 0, %s127
      %s145 = sphi 0, %s145
      %s147 = sphi 0, %s145
      %s148 = sphi 0, %s147
      %s162 = sphi 0, %s148
      %s166 = sphi 0, %s166
      %s168 = sphi 0, %s166
      %s169 = sphi 0, %s168
      %s183 = sphi 0, %s169
      %s187 = sphi 0, %s187
      %s189 = sphi 0, %s187
      %s190 = sphi 0, %s189
      %s204 = sphi 0, %s190
      %s208 = sphi 0, %s208
      %s210 = sphi 0, %s208
      %s211 = sphi 0, %s210
      %s225 = sphi 0, %s211
      %s231 = sphi 0, %s233
      %s234 = sphi 0, %s231
      %s235 = sphi 0, %s234
      %s251 = sphi 0, %s235
    $region4: #{tpu_custom_call.1} parent=1 // loop_header_branch
      %30 = sbr.rel (%p28) target = $region8
    $region5: #{tpu_custom_call.1} parent=1 // loop_body
      %s32 = ssub.s32 %s27, 1
      %s33 = ssub.s32 %s27, 2
      %s34 = sadd.s32 %s27, 1
      %s35 = ssub.s32 %s27, %s34
      %p36 = scmp.eq.s32.totalorder %s35, 0
      %s38 = sadd.s32 %s37, 1
      %s39 = scalar_select %p36, %s37, %s38
      %p42 = pneg %p36
      %p43 = scmp.eq.s32.totalorder %s27, 1
      %p44 = por %p42, %p43
      %p45 = scmp.ne.s32.totalorder %s37, %s40
      %p46 = scmp.eq.s32.totalorder %s27, 0
      %p47 = por %p45, %p46
      %p48 = scmp.ne.s32.totalorder %s37, %s40
      %p49 = scmp.eq.s32.totalorder %s32, 1
      %p50 = por %p48, %p49
      %p51 = scmp.ne.s32.totalorder %s40, %s41
      %p52 = scmp.eq.s32.totalorder %s32, 0
      %p53 = por %p51, %p52
      %p54 = scmp.ne.s32.totalorder %s40, %s41
      %p55 = scmp.eq.s32.totalorder %s33, 1
      %p56 = por %p54, %p55
      %p58 = scmp.ne.s32.totalorder %s41, %s57
      %p59 = scmp.eq.s32.totalorder %s33, 0
      %p60 = por %p58, %p59
      %s62 = sadd.s32 %s61, 1
      %p65 = scmp.eq.s32.totalorder %s27, 1
      %p66 = scmp.ne.s32.totalorder %s61, %s63
      %p67 = scmp.eq.s32.totalorder %s27, 0
      %p68 = por %p66, %p67
      %p69 = scmp.ne.s32.totalorder %s61, %s63
      %p70 = scmp.eq.s32.totalorder %s32, 1
      %p71 = por %p69, %p70
      %p72 = scmp.ne.s32.totalorder %s63, %s64
      %p73 = scmp.eq.s32.totalorder %s32, 0
      %p74 = por %p72, %p73
      %p75 = scmp.ne.s32.totalorder %s63, %s64
      %p76 = scmp.eq.s32.totalorder %s33, 1
      %p77 = por %p75, %p76
      %p79 = scmp.ne.s32.totalorder %s64, %s78
      %p80 = scmp.eq.s32.totalorder %s33, 0
      %p81 = por %p79, %p80
      %s83 = sadd.s32 %s82, 1
      %p86 = scmp.eq.s32.totalorder %s27, 1
      %p87 = scmp.ne.s32.totalorder %s82, %s84
      %p88 = scmp.eq.s32.totalorder %s27, 0
      %p89 = por %p87, %p88
      %p90 = scmp.ne.s32.totalorder %s82, %s84
      %p91 = scmp.eq.s32.totalorder %s32, 1
      %p92 = por %p90, %p91
      %p93 = scmp.ne.s32.totalorder %s84, %s85
      %p94 = scmp.eq.s32.totalorder %s32, 0
      %p95 = por %p93, %p94
      %p96 = scmp.ne.s32.totalorder %s84, %s85
      %p97 = scmp.eq.s32.totalorder %s33, 1
      %p98 = por %p96, %p97
      %p100 = scmp.ne.s32.totalorder %s85, %s99
      %p101 = scmp.eq.s32.totalorder %s33, 0
      %p102 = por %p100, %p101
      %s104 = sadd.s32 %s103, 1
      %p107 = scmp.eq.s32.totalorder %s27, 1
      %p108 = scmp.ne.s32.totalorder %s103, %s105
      %p109 = scmp.eq.s32.totalorder %s27, 0
      %p110 = por %p108, %p109
      %p111 = scmp.ne.s32.totalorder %s103, %s105
      %p112 = scmp.eq.s32.totalorder %s32, 1
      %p113 = por %p111, %p112
      %p114 = scmp.ne.s32.totalorder %s105, %s106
      %p115 = scmp.eq.s32.totalorder %s32, 0
      %p116 = por %p114, %p115
      %p117 = scmp.ne.s32.totalorder %s105, %s106
      %p118 = scmp.eq.s32.totalorder %s33, 1
      %p119 = por %p117, %p118
      %p121 = scmp.ne.s32.totalorder %s106, %s120
      %p122 = scmp.eq.s32.totalorder %s33, 0
      %p123 = por %p121, %p122
      %s125 = sadd.s32 %s124, 1
      %p128 = scmp.eq.s32.totalorder %s27, 1
      %p129 = scmp.ne.s32.totalorder %s124, %s126
      %p130 = scmp.eq.s32.totalorder %s27, 0
      %p131 = por %p129, %p130
      %p132 = scmp.ne.s32.totalorder %s124, %s126
      %p133 = scmp.eq.s32.totalorder %s32, 1
      %p134 = por %p132, %p133
      %p135 = scmp.ne.s32.totalorder %s126, %s127
      %p136 = scmp.eq.s32.totalorder %s32, 0
      %p137 = por %p135, %p136
      %p138 = scmp.ne.s32.totalorder %s126, %s127
      %p139 = scmp.eq.s32.totalorder %s33, 1
      %p140 = por %p138, %p139
      %p142 = scmp.ne.s32.totalorder %s127, %s141
      %p143 = scmp.eq.s32.totalorder %s33, 0
      %p144 = por %p142, %p143
      %s146 = sadd.s32 %s145, 1
      %p149 = scmp.eq.s32.totalorder %s27, 1
      %p150 = scmp.ne.s32.totalorder %s145, %s147
      %p151 = scmp.eq.s32.totalorder %s27, 0
      %p152 = por %p150, %p151
      %p153 = scmp.ne.s32.totalorder %s145, %s147
      %p154 = scmp.eq.s32.totalorder %s32, 1
      %p155 = por %p153, %p154
      %p156 = scmp.ne.s32.totalorder %s147, %s148
      %p157 = scmp.eq.s32.totalorder %s32, 0
      %p158 = por %p156, %p157
      %p159 = scmp.ne.s32.totalorder %s147, %s148
      %p160 = scmp.eq.s32.totalorder %s33, 1
      %p161 = por %p159, %p160
      %p163 = scmp.ne.s32.totalorder %s148, %s162
      %p164 = scmp.eq.s32.totalorder %s33, 0
      %p165 = por %p163, %p164
      %s167 = sadd.s32 %s166, 1
      %p170 = scmp.eq.s32.totalorder %s27, 1
      %p171 = scmp.ne.s32.totalorder %s166, %s168
      %p172 = scmp.eq.s32.totalorder %s27, 0
      %p173 = por %p171, %p172
      %p174 = scmp.ne.s32.totalorder %s166, %s168
      %p175 = scmp.eq.s32.totalorder %s32, 1
      %p176 = por %p174, %p175
      %p177 = scmp.ne.s32.totalorder %s168, %s169
      %p178 = scmp.eq.s32.totalorder %s32, 0
      %p179 = por %p177, %p178
      %p180 = scmp.ne.s32.totalorder %s168, %s169
      %p181 = scmp.eq.s32.totalorder %s33, 1
      %p182 = por %p180, %p181
      %p184 = scmp.ne.s32.totalorder %s169, %s183
      %p185 = scmp.eq.s32.totalorder %s33, 0
      %p186 = por %p184, %p185
      %s188 = sadd.s32 %s187, 1
      %p191 = scmp.eq.s32.totalorder %s27, 1
      %p192 = scmp.ne.s32.totalorder %s187, %s189
      %p193 = scmp.eq.s32.totalorder %s27, 0
      %p194 = por %p192, %p193
      %p195 = scmp.ne.s32.totalorder %s187, %s189
      %p196 = scmp.eq.s32.totalorder %s32, 1
      %p197 = por %p195, %p196
      %p198 = scmp.ne.s32.totalorder %s189, %s190
      %p199 = scmp.eq.s32.totalorder %s32, 0
      %p200 = por %p198, %p199
      %p201 = scmp.ne.s32.totalorder %s189, %s190
      %p202 = scmp.eq.s32.totalorder %s33, 1
      %p203 = por %p201, %p202
      %p205 = scmp.ne.s32.totalorder %s190, %s204
      %p206 = scmp.eq.s32.totalorder %s33, 0
      %p207 = por %p205, %p206
      %s209 = sadd.s32 %s208, 1
      %p212 = scmp.eq.s32.totalorder %s27, 1
      %p213 = scmp.ne.s32.totalorder %s208, %s210
      %p214 = scmp.eq.s32.totalorder %s27, 0
      %p215 = por %p213, %p214
      %p216 = scmp.ne.s32.totalorder %s208, %s210
      %p217 = scmp.eq.s32.totalorder %s32, 1
      %p218 = por %p216, %p217
      %p219 = scmp.ne.s32.totalorder %s210, %s211
      %p220 = scmp.eq.s32.totalorder %s32, 0
      %p221 = por %p219, %p220
      %p222 = scmp.ne.s32.totalorder %s210, %s211
      %p223 = scmp.eq.s32.totalorder %s33, 1
      %p224 = por %p222, %p223
      %p226 = scmp.ne.s32.totalorder %s211, %s225
      %p227 = scmp.eq.s32.totalorder %s33, 0
      %p228 = por %p226, %p227
      %s229 = ssub.s32 %s27, %s34
      %p230 = scmp.eq.s32.totalorder %s229, 0
      %s232 = sadd.s32 %s231, 1
      %s233 = scalar_select %p230, %s231, %s232
      %p236 = pneg %p230
      %p237 = scmp.eq.s32.totalorder %s27, 1
      %p238 = por %p236, %p237
      %p239 = scmp.ne.s32.totalorder %s231, %s234
      %p240 = scmp.eq.s32.totalorder %s27, 0
      %p241 = por %p239, %p240
      %p242 = scmp.ne.s32.totalorder %s231, %s234
      %p243 = scmp.eq.s32.totalorder %s32, 1
      %p244 = por %p242, %p243
      %p245 = scmp.ne.s32.totalorder %s234, %s235
      %p246 = scmp.eq.s32.totalorder %s32, 0
      %p247 = por %p245, %p246
      %p248 = scmp.ne.s32.totalorder %s234, %s235
      %p249 = scmp.eq.s32.totalorder %s33, 1
      %p250 = por %p248, %p249
      %p252 = scmp.ne.s32.totalorder %s235, %s251
      %p253 = scmp.eq.s32.totalorder %s33, 0
      %p254 = por %p252, %p253
      %p255 = scmp.le.s32.totalorder 1, %s27
      %p256 = scmp.lt.s32.totalorder %s27, 3
      %p257 = pnand %p255, %p256
      %p258 = pneg %p257
      // Predicated region
      $region9: #{tpu_custom_call.1} parent=5 // pred_check
        _
      $region10: #{tpu_custom_call.1} parent=5 // pred_check_branch
        %260 = sbr.rel (%p257) target = $region12
      $region11: #{tpu_custom_call.1} parent=5 // pred_region
        %s261 = ssub.s32 %s27, 1
        // Predicated region
        $region13: #{tpu_custom_call.1} parent=11 // pred_check
          %p262 = pneg %p74
        $region14: #{tpu_custom_call.1} parent=11 // pred_check_branch
          %264 = sbr.rel (%p262) target = $region16
        $region15: #{tpu_custom_call.1} parent=11 // pred_region
          %s266 = ssub.s32 16, 16
          %267 = vsyncadd [#allocation10], %s266
          %s269 = sshll.u32 %s1, 4
          %s270 = int_to_ptr.vmem [resolvable:$true] %s269
          %272 = dma.vmem_to_smem %s270, 16, [#allocation11], [#allocation10]
        $region16: #{tpu_custom_call.1} parent=11 // pred_fallthru
          _
        // Predicated region
        $region17: #{tpu_custom_call.1} parent=11 // pred_check
          %p273 = pneg %p95
        $region18: #{tpu_custom_call.1} parent=11 // pred_check_branch
          %275 = sbr.rel (%p273) target = $region20
        $region19: #{tpu_custom_call.1} parent=11 // pred_region
          %s277 = ssub.s32 16, 16
          %278 = vsyncadd [#allocation13], %s277
          %s280 = sshll.u32 %s2, 4
          %s281 = int_to_ptr.vmem [resolvable:$true] %s280
          %283 = dma.vmem_to_smem %s281, 16, [#allocation12], [#allocation13]
        $region20: #{tpu_custom_call.1} parent=11 // pred_fallthru
          _
        // Predicated region
        $region21: #{tpu_custom_call.1} parent=11 // pred_check
          %p284 = pneg %p116
        $region22: #{tpu_custom_call.1} parent=11 // pred_check_branch
          %286 = sbr.rel (%p284) target = $region24
        $region23: #{tpu_custom_call.1} parent=11 // pred_region
          %s288 = ssub.s32 16, 16
          %289 = vsyncadd [#allocation13], %s288
          %s291 = sshll.u32 %s3, 4
          %s292 = int_to_ptr.vmem [resolvable:$true] %s291
          %294 = dma.vmem_to_smem %s292, 16, [#allocation14], [#allocation13]
        $region24: #{tpu_custom_call.1} parent=11 // pred_fallthru
          _
        // Predicated region
        $region25: #{tpu_custom_call.1} parent=11 // pred_check
          %p295 = pneg %p137
        $region26: #{tpu_custom_call.1} parent=11 // pred_check_branch
          %297 = sbr.rel (%p295) target = $region28
        $region27: #{tpu_custom_call.1} parent=11 // pred_region
          _
        $region28: #{tpu_custom_call.1} parent=11 // pred_fallthru
          _
        // Predicated region
        $region29: #{tpu_custom_call.1} parent=11 // pred_check
          %p298 = pneg %p158
        $region30: #{tpu_custom_call.1} parent=11 // pred_check_branch
          %300 = sbr.rel (%p298) target = $region32
        $region31: #{tpu_custom_call.1} parent=11 // pred_region
          %s302 = ssub.s32 16, 16
          %303 = vsyncadd [#allocation16], %s302
          %s305 = sshll.u32 %s5, 4
          %s306 = int_to_ptr.vmem [resolvable:$true] %s305
          %308 = dma.vmem_to_smem %s306, 16, [#allocation15], [#allocation16]
        $region32: #{tpu_custom_call.1} parent=11 // pred_fallthru
          _
        // Predicated region
        $region33: #{tpu_custom_call.1} parent=11 // pred_check
          %p309 = pneg %p179
        $region34: #{tpu_custom_call.1} parent=11 // pred_check_branch
          %311 = sbr.rel (%p309) target = $region36
        $region35: #{tpu_custom_call.1} parent=11 // pred_region
          %s313 = ssub.s32 16, 16
          %314 = vsyncadd [#allocation16], %s313
          %s316 = sshll.u32 %s6, 4
          %s317 = int_to_ptr.vmem [resolvable:$true] %s316
          %319 = dma.vmem_to_smem %s317, 16, [#allocation17], [#allocation16]
        $region36: #{tpu_custom_call.1} parent=11 // pred_fallthru
          _
        // Predicated region
        $region37: #{tpu_custom_call.1} parent=11 // pred_check
          %p320 = pneg %p200
        $region38: #{tpu_custom_call.1} parent=11 // pred_check_branch
          %322 = sbr.rel (%p320) target = $region40
        $region39: #{tpu_custom_call.1} parent=11 // pred_region
          %s324 = ssub.s32 16, 16
          %325 = vsyncadd [#allocation19], %s324
          %s327 = sshll.u32 %s7, 4
          %s328 = int_to_ptr.vmem [resolvable:$true] %s327
          %330 = dma.vmem_to_smem %s328, 16, [#allocation18], [#allocation19]
        $region40: #{tpu_custom_call.1} parent=11 // pred_fallthru
          _
        // Predicated region
        $region41: #{tpu_custom_call.1} parent=11 // pred_check
          %p331 = pneg %p221
        $region42: #{tpu_custom_call.1} parent=11 // pred_check_branch
          %333 = sbr.rel (%p331) target = $region44
        $region43: #{tpu_custom_call.1} parent=11 // pred_region
          _
        $region44: #{tpu_custom_call.1} parent=11 // pred_fallthru
          _
      $region12: #{tpu_custom_call.1} parent=5 // pred_fallthru
        _
      %p334 = scmp.lt.s32.totalorder %s27, 2
      // Predicated region
      $region45: #{tpu_custom_call.1} parent=5 // pred_check
        %p335 = pneg %p334
      $region46: #{tpu_custom_call.1} parent=5 // pred_check_branch
        %337 = sbr.rel (%p335) target = $region48
      $region47: #{tpu_custom_call.1} parent=5 // pred_region
        // Predicated region
        $region49: #{tpu_custom_call.1} parent=47 // pred_check
          %p338 = pneg %p47
        $region50: #{tpu_custom_call.1} parent=47 // pred_check_branch
          %340 = sbr.rel (%p338) target = $region52
        $region51: #{tpu_custom_call.1} parent=47 // pred_region
          %s341 = sand.u32 %s37, 1
          %s342 = scalar_lea.sflag [#allocation8], %s341
          %s343 = sand.u32 %s37, 1
          %s344 = smul.addr %s343, 64
          %s345 = scalar_lea.vmem [#allocation7], %s344
          %s347 = ssub.s32 1024, 1024
          %348 = vsyncadd %s342, %s347
          %s349 = smul.addr %s27, 8
          %s350 = smul.addr %s349, 128
          %s351 = scalar_lea.hbm %s0, %s350
          %s352 = sshll.u32 %s345, 4
          %s353 = int_to_ptr.vmem [resolvable:$true] %s352
          %358 = dma.hbm_to_vmem [thread:$0]  %s351, 1024, %s353, %s342, 128, 128, 8
        $region52: #{tpu_custom_call.1} parent=47 // pred_fallthru
          _
      $region48: #{tpu_custom_call.1} parent=5 // pred_fallthru
        _
      %p359 = scmp.le.s32.totalorder 1, %s27
      %p360 = scmp.lt.s32.totalorder %s27, 3
      %p361 = pnand %p359, %p360
      %p362 = pneg %p361
      // Predicated region
      $region53: #{tpu_custom_call.1} parent=5 // pred_check
        _
      $region54: #{tpu_custom_call.1} parent=5 // pred_check_branch
        %364 = sbr.rel (%p361) target = $region56
      $region55: #{tpu_custom_call.1} parent=5 // pred_region
        %s365 = ssub.s32 %s27, 1
        %s366 = sand.u32 %s40, 1
        %s367 = scalar_lea.sflag [#allocation8], %s366
        %s368 = sand.u32 %s40, 1
        %s369 = smul.addr %s368, 64
        %s370 = scalar_lea.vmem [#allocation7], %s369
        // Predicated region
        $region57: #{tpu_custom_call.1} parent=55 // pred_check
          %p371 = pneg %p53
        $region58: #{tpu_custom_call.1} parent=55 // pred_check_branch
          %373 = sbr.rel (%p371) target = $region60
        $region59: #{tpu_custom_call.1} parent=55 // pred_region
          %374 = dma.done %s367, 1024
        $region60: #{tpu_custom_call.1} parent=55 // pred_fallthru
          _
        // Predicated region
        $region61: #{tpu_custom_call.1} parent=55 // pred_check
          %p375 = pneg %p74
        $region62: #{tpu_custom_call.1} parent=55 // pred_check_branch
          %377 = sbr.rel (%p375) target = $region64
        $region63: #{tpu_custom_call.1} parent=55 // pred_region
          %378 = dma.done [#allocation10], 16
        $region64: #{tpu_custom_call.1} parent=55 // pred_fallthru
          _
        // Predicated region
        $region65: #{tpu_custom_call.1} parent=55 // pred_check
          %p379 = pneg %p95
        $region66: #{tpu_custom_call.1} parent=55 // pred_check_branch
          %381 = sbr.rel (%p379) target = $region68
        $region67: #{tpu_custom_call.1} parent=55 // pred_region
          %382 = dma.done [#allocation13], 16
        $region68: #{tpu_custom_call.1} parent=55 // pred_fallthru
          _
        // Predicated region
        $region69: #{tpu_custom_call.1} parent=55 // pred_check
          %p383 = pneg %p116
        $region70: #{tpu_custom_call.1} parent=55 // pred_check_branch
          %385 = sbr.rel (%p383) target = $region72
        $region71: #{tpu_custom_call.1} parent=55 // pred_region
          %386 = dma.done [#allocation13], 16
        $region72: #{tpu_custom_call.1} parent=55 // pred_fallthru
          _
        // Predicated region
        $region73: #{tpu_custom_call.1} parent=55 // pred_check
          %p387 = pneg %p158
        $region74: #{tpu_custom_call.1} parent=55 // pred_check_branch
          %389 = sbr.rel (%p387) target = $region76
        $region75: #{tpu_custom_call.1} parent=55 // pred_region
          %390 = dma.done [#allocation16], 16
        $region76: #{tpu_custom_call.1} parent=55 // pred_fallthru
          _
        // Predicated region
        $region77: #{tpu_custom_call.1} parent=55 // pred_check
          %p391 = pneg %p179
        $region78: #{tpu_custom_call.1} parent=55 // pred_check_branch
          %393 = sbr.rel (%p391) target = $region80
        $region79: #{tpu_custom_call.1} parent=55 // pred_region
          %394 = dma.done [#allocation16], 16
        $region80: #{tpu_custom_call.1} parent=55 // pred_fallthru
          _
        // Predicated region
        $region81: #{tpu_custom_call.1} parent=55 // pred_check
          %p395 = pneg %p200
        $region82: #{tpu_custom_call.1} parent=55 // pred_check_branch
          %397 = sbr.rel (%p395) target = $region84
        $region83: #{tpu_custom_call.1} parent=55 // pred_region
          %398 = dma.done [#allocation19], 16
        $region84: #{tpu_custom_call.1} parent=55 // pred_fallthru
          _
        %399 = sfence
        %s400 = sand.u32 %s40, 1
        %s401 = scalar_lea.sflag [#allocation8], %s400
        %s402 = sand.u32 %s40, 1
        %s403 = smul.addr %s402, 64
        %s404 = scalar_lea.vmem [#allocation7], %s403
        %p405 = pneg %p53
        %p406 = pneg %p50
        %p407 = pneg %p74
        %p408 = pneg %p71
        %p409 = pneg %p95
        %p410 = pneg %p92
        %p411 = pneg %p116
        %p412 = pneg %p113
        %p413 = pneg %p137
        %p414 = pneg %p134
        %p415 = pneg %p158
        %p416 = pneg %p155
        %p417 = pneg %p179
        %p418 = pneg %p176
        %p419 = pneg %p200
        %p420 = pneg %p197
        %p421 = pneg %p221
        %p422 = pneg %p218
        %p423 = pneg %p247
        %p424 = pneg %p244
        %s425 = sand.u32 %s234, 1
        %s426 = scalar_lea.sflag [#allocation9], %s425
        %s427 = sand.u32 %s234, 1
        %s428 = smul.addr %s427, 16
        %s429 = scalar_lea.vmem [#allocation20], %s428
        %vm430 = vcmask 191488
        %431 = vst.msk [vmem:[#allocation2] sm:$0xf] %vm430, 0.0
        %432 = vst.msk [vmem:[#allocation2 + $0x18] sm:$0xf] %vm430, 0.0
        %433 = vst.msk [vmem:[#allocation2 + $0x30] sm:$0xf] %vm430, 0.0
        %434 = vst.msk [vmem:[#allocation2 + $0x48] sm:$0xf] %vm430, 0.0
        %435 = vst.msk [vmem:[#allocation2 + $0x14] sm:$0xf] %vm430, 0.0
        %436 = vst.msk [vmem:[#allocation2 + $0x2c] sm:$0xf] %vm430, 0.0
        %437 = vst.msk [vmem:[#allocation2 + $0x44] sm:$0xf] %vm430, 0.0
        %438 = vst.msk [vmem:[#allocation2 + $0x5c] sm:$0xf] %vm430, 0.0
        %vm439 = vcmask 31744
        %440 = vst.msk [vmem:[#allocation2] sm:$0xff] %vm439, 0.0
        %441 = vst.msk [vmem:[#allocation2 + $0x8] sm:$0xff] %vm439, 0.0
        %442 = vst.msk [vmem:[#allocation2 + $0x10] sm:$0xff] %vm439, 0.0
        %443 = vst.msk [vmem:[#allocation2 + $0x18] sm:$0xff] %vm439, 0.0
        %444 = vst.msk [vmem:[#allocation2 + $0x20] sm:$0xff] %vm439, 0.0
        %445 = vst.msk [vmem:[#allocation2 + $0x28] sm:$0xff] %vm439, 0.0
        %446 = vst.msk [vmem:[#allocation2 + $0x30] sm:$0xff] %vm439, 0.0
        %447 = vst.msk [vmem:[#allocation2 + $0x38] sm:$0xff] %vm439, 0.0
        %448 = vst.msk [vmem:[#allocation2 + $0x40] sm:$0xff] %vm439, 0.0
        %449 = vst.msk [vmem:[#allocation2 + $0x48] sm:$0xff] %vm439, 0.0
        %450 = vst.msk [vmem:[#allocation2 + $0x50] sm:$0xff] %vm439, 0.0
        %451 = vst.msk [vmem:[#allocation2 + $0x58] sm:$0xff] %vm439, 0.0
        %vm452 = vcmask 195744
        %453 = vst.msk [vmem:[#allocation2] sm:$0xff] %vm452, 0.0
        %454 = vst.msk [vmem:[#allocation2 + $0x8] sm:$0xff] %vm452, 0.0
        %455 = vst.msk [vmem:[#allocation2 + $0x10] sm:$0xff] %vm452, 0.0
        %456 = vst.msk [vmem:[#allocation2 + $0x18] sm:$0xff] %vm452, 0.0
        %457 = vst.msk [vmem:[#allocation2 + $0x20] sm:$0xff] %vm452, 0.0
        %458 = vst.msk [vmem:[#allocation2 + $0x28] sm:$0xff] %vm452, 0.0
        %459 = vst.msk [vmem:[#allocation2 + $0x30] sm:$0xff] %vm452, 0.0
        %460 = vst.msk [vmem:[#allocation2 + $0x38] sm:$0xff] %vm452, 0.0
        %461 = vst.msk [vmem:[#allocation2 + $0x40] sm:$0xff] %vm452, 0.0
        %462 = vst.msk [vmem:[#allocation2 + $0x48] sm:$0xff] %vm452, 0.0
        %463 = vst.msk [vmem:[#allocation2 + $0x50] sm:$0xff] %vm452, 0.0
        %464 = vst.msk [vmem:[#allocation2 + $0x58] sm:$0xff] %vm452, 0.0
        %v465 = vld [vmem:[%s370] sm:$0xff]
        %v466 = vld [vmem:[%s370 + $0x8] sm:$0xff]
        %v467 = vld [vmem:[%s370 + $0x10] sm:$0xff]
        %v468 = vld [vmem:[%s370 + $0x18] sm:$0xff]
        %v469 = vld [vmem:[%s370 + $0x20] sm:$0xff]
        %v470 = vld [vmem:[%s370 + $0x28] sm:$0xff]
        %v471 = vld [vmem:[%s370 + $0x30] sm:$0xff]
        %v472 = vld [vmem:[%s370 + $0x38] sm:$0xff]
        %481 = vrot.lane.b32.xlu0 %v465, 4
        %v482 = vpop.permute.xlu0 %481
        %483 = vrot.lane.b32.xlu0 %v466, 4
        %v484 = vpop.permute.xlu0 %483
        %485 = vrot.lane.b32.xlu0 %v467, 4
        %v486 = vpop.permute.xlu0 %485
        %487 = vrot.lane.b32.xlu0 %v468, 4
        %v488 = vpop.permute.xlu0 %487
        %489 = vrot.lane.b32.xlu0 %v469, 4
        %v490 = vpop.permute.xlu0 %489
        %491 = vrot.lane.b32.xlu0 %v470, 4
        %v492 = vpop.permute.xlu0 %491
        %493 = vrot.lane.b32.xlu0 %v471, 4
        %v494 = vpop.permute.xlu0 %493
        %495 = vrot.lane.b32.xlu0 %v472, 4
        %v496 = vpop.permute.xlu0 %495
        %vm505 = vcmask 162848
        %506 = vst.msk [vmem:[#allocation2 + $0x4] sm:$0xff] %vm505, %v482
        %507 = vst.msk [vmem:[#allocation2 + $0xc] sm:$0xff] %vm505, %v484
        %508 = vst.msk [vmem:[#allocation2 + $0x1c] sm:$0xff] %vm505, %v486
        %509 = vst.msk [vmem:[#allocation2 + $0x24] sm:$0xff] %vm505, %v488
        %510 = vst.msk [vmem:[#allocation2 + $0x34] sm:$0xff] %vm505, %v490
        %511 = vst.msk [vmem:[#allocation2 + $0x3c] sm:$0xff] %vm505, %v492
        %512 = vst.msk [vmem:[#allocation2 + $0x4c] sm:$0xff] %vm505, %v494
        %513 = vst.msk [vmem:[#allocation2 + $0x54] sm:$0xff] %vm505, %v496
        %vm514 = vcmask 125952
        %515 = vst.msk [vmem:[#allocation3] sm:$0xf] %vm514, 0.0
        %516 = vst.msk [vmem:[#allocation3 + $0x18] sm:$0xf] %vm514, 0.0
        %517 = vst.msk [vmem:[#allocation3 + $0x14] sm:$0xf] %vm514, 0.0
        %518 = vst.msk [vmem:[#allocation3 + $0x2c] sm:$0xf] %vm514, 0.0
        %519 = vst.msk [vmem:[#allocation4] sm:$0xff] %vm439, 0.0
        %520 = vst.msk [vmem:[#allocation4 + $0x8] sm:$0xff] %vm439, 0.0
        %521 = vst.msk [vmem:[#allocation4 + $0x10] sm:$0xff] %vm439, 0.0
        %522 = vst.msk [vmem:[#allocation4 + $0x18] sm:$0xff] %vm439, 0.0
        %523 = vst.msk [vmem:[#allocation4] sm:$0xff] %vm452, 0.0
        %524 = vst.msk [vmem:[#allocation4 + $0x8] sm:$0xff] %vm452, 0.0
        %525 = vst.msk [vmem:[#allocation4 + $0x10] sm:$0xff] %vm452, 0.0
        %526 = vst.msk [vmem:[#allocation4 + $0x18] sm:$0xff] %vm452, 0.0
        %s527 = sld [smem:[#allocation11]]
        %v528 = vld [vmem:[#allocation2 + $0x4] sm:$0xff]
        %v529 = vld [vmem:[#allocation2 + $0xc] sm:$0xff]
        %v530 = vstv %s527
        %v531 = vmul.f32 %v530, %v528
        %v532 = vmul.f32 %v530, %v529
        %v533 = vadd.f32 %v531, 0.0
        %v534 = vadd.f32 %v532, 0.0
        %s535 = sld [smem:[#allocation11 + $0x1]]
        %v536 = vstv %s535
        %v537 = vmul.f32 %v536, %v528
        %v538 = vmul.f32 %v536, %v529
        %541 = vrot.lane.b32.xlu0 %v537, 127
        %v542 = vpop.permute.xlu0 %541
        %543 = vrot.lane.b32.xlu0 %v538, 127
        %v544 = vpop.permute.xlu0 %543
        %v547 = vadd.f32 %v533, %v542
        %v548 = vadd.f32 %v534, %v544
        %s549 = sld [smem:[#allocation11 + $0x2]]
        %v550 = vstv %s549
        %v551 = vmul.f32 %v550, %v528
        %v552 = vmul.f32 %v550, %v529
        %555 = vrot.lane.b32.xlu0 %v551, 126
        %v556 = vpop.permute.xlu0 %555
        %557 = vrot.lane.b32.xlu0 %v552, 126
        %v558 = vpop.permute.xlu0 %557
        %v561 = vadd.f32 %v547, %v556
        %v562 = vadd.f32 %v548, %v558
        %s563 = sld [smem:[#allocation11 + $0x3]]
        %v564 = vstv %s563
        %v565 = vmul.f32 %v564, %v528
        %v566 = vmul.f32 %v564, %v529
        %569 = vrot.lane.b32.xlu0 %v565, 125
        %v570 = vpop.permute.xlu0 %569
        %571 = vrot.lane.b32.xlu0 %v566, 125
        %v572 = vpop.permute.xlu0 %571
        %v575 = vadd.f32 %v561, %v570
        %v576 = vadd.f32 %v562, %v572
        %s577 = sld [smem:[#allocation11 + $0x4]]
        %v578 = vstv %s577
        %v579 = vmul.f32 %v578, %v528
        %v580 = vmul.f32 %v578, %v529
        %583 = vrot.lane.b32.xlu0 %v579, 124
        %v584 = vpop.permute.xlu0 %583
        %585 = vrot.lane.b32.xlu0 %v580, 124
        %v586 = vpop.permute.xlu0 %585
        %v589 = vadd.f32 %v575, %v584
        %v590 = vadd.f32 %v576, %v586
        %s591 = sld [smem:[#allocation11 + $0x5]]
        %v592 = vstv %s591
        %v593 = vmul.f32 %v592, %v528
        %v594 = vmul.f32 %v592, %v529
        %597 = vrot.lane.b32.xlu0 %v593, 123
        %v598 = vpop.permute.xlu0 %597
        %599 = vrot.lane.b32.xlu0 %v594, 123
        %v600 = vpop.permute.xlu0 %599
        %v603 = vadd.f32 %v589, %v598
        %v604 = vadd.f32 %v590, %v600
        %s605 = sld [smem:[#allocation11 + $0x6]]
        %v606 = vstv %s605
        %v607 = vmul.f32 %v606, %v528
        %v608 = vmul.f32 %v606, %v529
        %611 = vrot.lane.b32.xlu0 %v607, 122
        %v612 = vpop.permute.xlu0 %611
        %613 = vrot.lane.b32.xlu0 %v608, 122
        %v614 = vpop.permute.xlu0 %613
        %v617 = vadd.f32 %v603, %v612
        %v618 = vadd.f32 %v604, %v614
        %s619 = sld [smem:[#allocation11 + $0x7]]
        %v620 = vstv %s619
        %v621 = vmul.f32 %v620, %v528
        %v622 = vmul.f32 %v620, %v529
        %625 = vrot.lane.b32.xlu0 %v621, 121
        %v626 = vpop.permute.xlu0 %625
        %627 = vrot.lane.b32.xlu0 %v622, 121
        %v628 = vpop.permute.xlu0 %627
        %v631 = vadd.f32 %v617, %v626
        %v632 = vadd.f32 %v618, %v628
        %s633 = sld [smem:[#allocation11 + $0x8]]
        %v634 = vstv %s633
        %v635 = vmul.f32 %v634, %v528
        %v636 = vmul.f32 %v634, %v529
        %639 = vrot.lane.b32.xlu0 %v635, 120
        %v640 = vpop.permute.xlu0 %639
        %641 = vrot.lane.b32.xlu0 %v636, 120
        %v642 = vpop.permute.xlu0 %641
        %v645 = vadd.f32 %v631, %v640
        %v646 = vadd.f32 %v632, %v642
        %s647 = sld [smem:[#allocation11 + $0x9]]
        %s648 = scalar_lea.vmem [#allocation2], 24
        %v649 = vld [vmem:[%s648 + $0x4] sm:$0xff]
        %v650 = vld [vmem:[%s648 + $0xc] sm:$0xff]
        %v651 = vstv %s647
        %v652 = vmul.f32 %v651, %v649
        %v653 = vmul.f32 %v651, %v650
        %v654 = vadd.f32 %v645, %v652
        %v655 = vadd.f32 %v646, %v653
        %s656 = sld [smem:[#allocation11 + $0xa]]
        %v657 = vstv %s656
        %v658 = vmul.f32 %v657, %v649
        %v659 = vmul.f32 %v657, %v650
        %662 = vrot.lane.b32.xlu0 %v658, 127
        %v663 = vpop.permute.xlu0 %662
        %664 = vrot.lane.b32.xlu0 %v659, 127
        %v665 = vpop.permute.xlu0 %664
        %v668 = vadd.f32 %v654, %v663
        %v669 = vadd.f32 %v655, %v665
        %s670 = sld [smem:[#allocation11 + $0xb]]
        %v671 = vstv %s670
        %v672 = vmul.f32 %v671, %v649
        %v673 = vmul.f32 %v671, %v650
        %676 = vrot.lane.b32.xlu0 %v672, 126
        %v677 = vpop.permute.xlu0 %676
        %678 = vrot.lane.b32.xlu0 %v673, 126
        %v679 = vpop.permute.xlu0 %678
        %v682 = vadd.f32 %v668, %v677
        %v683 = vadd.f32 %v669, %v679
        %s684 = sld [smem:[#allocation11 + $0xc]]
        %v685 = vstv %s684
        %v686 = vmul.f32 %v685, %v649
        %v687 = vmul.f32 %v685, %v650
        %690 = vrot.lane.b32.xlu0 %v686, 125
        %v691 = vpop.permute.xlu0 %690
        %692 = vrot.lane.b32.xlu0 %v687, 125
        %v693 = vpop.permute.xlu0 %692
        %v696 = vadd.f32 %v682, %v691
        %v697 = vadd.f32 %v683, %v693
        %s698 = sld [smem:[#allocation11 + $0xd]]
        %v699 = vstv %s698
        %v700 = vmul.f32 %v699, %v649
        %v701 = vmul.f32 %v699, %v650
        %704 = vrot.lane.b32.xlu0 %v700, 124
        %v705 = vpop.permute.xlu0 %704
        %706 = vrot.lane.b32.xlu0 %v701, 124
        %v707 = vpop.permute.xlu0 %706
        %v710 = vadd.f32 %v696, %v705
        %v711 = vadd.f32 %v697, %v707
        %s712 = sld [smem:[#allocation11 + $0xe]]
        %v713 = vstv %s712
        %v714 = vmul.f32 %v713, %v649
        %v715 = vmul.f32 %v713, %v650
        %718 = vrot.lane.b32.xlu0 %v714, 123
        %v719 = vpop.permute.xlu0 %718
        %720 = vrot.lane.b32.xlu0 %v715, 123
        %v721 = vpop.permute.xlu0 %720
        %v724 = vadd.f32 %v710, %v719
        %v725 = vadd.f32 %v711, %v721
        %s726 = sld [smem:[#allocation11 + $0xf]]
        %v727 = vstv %s726
        %v728 = vmul.f32 %v727, %v649
        %v729 = vmul.f32 %v727, %v650
        %732 = vrot.lane.b32.xlu0 %v728, 122
        %v733 = vpop.permute.xlu0 %732
        %734 = vrot.lane.b32.xlu0 %v729, 122
        %v735 = vpop.permute.xlu0 %734
        %v738 = vadd.f32 %v724, %v733
        %v739 = vadd.f32 %v725, %v735
        %s740 = sld [smem:[#allocation11 + $0x10]]
        %v741 = vstv %s740
        %v742 = vmul.f32 %v741, %v649
        %v743 = vmul.f32 %v741, %v650
        %746 = vrot.lane.b32.xlu0 %v742, 121
        %v747 = vpop.permute.xlu0 %746
        %748 = vrot.lane.b32.xlu0 %v743, 121
        %v749 = vpop.permute.xlu0 %748
        %v752 = vadd.f32 %v738, %v747
        %v753 = vadd.f32 %v739, %v749
        %s754 = sld [smem:[#allocation11 + $0x11]]
        %v755 = vstv %s754
        %v756 = vmul.f32 %v755, %v649
        %v757 = vmul.f32 %v755, %v650
        %760 = vrot.lane.b32.xlu0 %v756, 120
        %v761 = vpop.permute.xlu0 %760
        %762 = vrot.lane.b32.xlu0 %v757, 120
        %v763 = vpop.permute.xlu0 %762
        %v766 = vadd.f32 %v752, %v761
        %v767 = vadd.f32 %v753, %v763
        %s768 = sld [smem:[#allocation11 + $0x12]]
        %s769 = scalar_lea.vmem [#allocation2], 48
        %v770 = vld [vmem:[%s769 + $0x4] sm:$0xff]
        %v771 = vld [vmem:[%s769 + $0xc] sm:$0xff]
        %v772 = vstv %s768
        %v773 = vmul.f32 %v772, %v770
        %v774 = vmul.f32 %v772, %v771
        %v775 = vadd.f32 %v766, %v773
        %v776 = vadd.f32 %v767, %v774
        %s777 = sld [smem:[#allocation11 + $0x13]]
        %v778 = vstv %s777
        %v779 = vmul.f32 %v778, %v770
        %v780 = vmul.f32 %v778, %v771
        %783 = vrot.lane.b32.xlu0 %v779, 127
        %v784 = vpop.permute.xlu0 %783
        %785 = vrot.lane.b32.xlu0 %v780, 127
        %v786 = vpop.permute.xlu0 %785
        %v789 = vadd.f32 %v775, %v784
        %v790 = vadd.f32 %v776, %v786
        %s791 = sld [smem:[#allocation11 + $0x14]]
        %v792 = vstv %s791
        %v793 = vmul.f32 %v792, %v770
        %v794 = vmul.f32 %v792, %v771
        %797 = vrot.lane.b32.xlu0 %v793, 126
        %v798 = vpop.permute.xlu0 %797
        %799 = vrot.lane.b32.xlu0 %v794, 126
        %v800 = vpop.permute.xlu0 %799
        %v803 = vadd.f32 %v789, %v798
        %v804 = vadd.f32 %v790, %v800
        %s805 = sld [smem:[#allocation11 + $0x15]]
        %v806 = vstv %s805
        %v807 = vmul.f32 %v806, %v770
        %v808 = vmul.f32 %v806, %v771
        %811 = vrot.lane.b32.xlu0 %v807, 125
        %v812 = vpop.permute.xlu0 %811
        %813 = vrot.lane.b32.xlu0 %v808, 125
        %v814 = vpop.permute.xlu0 %813
        %v817 = vadd.f32 %v803, %v812
        %v818 = vadd.f32 %v804, %v814
        %s819 = sld [smem:[#allocation11 + $0x16]]
        %v820 = vstv %s819
        %v821 = vmul.f32 %v820, %v770
        %v822 = vmul.f32 %v820, %v771
        %825 = vrot.lane.b32.xlu0 %v821, 124
        %v826 = vpop.permute.xlu0 %825
        %827 = vrot.lane.b32.xlu0 %v822, 124
        %v828 = vpop.permute.xlu0 %827
        %v831 = vadd.f32 %v817, %v826
        %v832 = vadd.f32 %v818, %v828
        %s833 = sld [smem:[#allocation11 + $0x17]]
        %v834 = vstv %s833
        %v835 = vmul.f32 %v834, %v770
        %v836 = vmul.f32 %v834, %v771
        %839 = vrot.lane.b32.xlu0 %v835, 123
        %v840 = vpop.permute.xlu0 %839
        %841 = vrot.lane.b32.xlu0 %v836, 123
        %v842 = vpop.permute.xlu0 %841
        %v845 = vadd.f32 %v831, %v840
        %v846 = vadd.f32 %v832, %v842
        %s847 = sld [smem:[#allocation11 + $0x18]]
        %v848 = vstv %s847
        %v849 = vmul.f32 %v848, %v770
        %v850 = vmul.f32 %v848, %v771
        %853 = vrot.lane.b32.xlu0 %v849, 122
        %v854 = vpop.permute.xlu0 %853
        %855 = vrot.lane.b32.xlu0 %v850, 122
        %v856 = vpop.permute.xlu0 %855
        %v859 = vadd.f32 %v845, %v854
        %v860 = vadd.f32 %v846, %v856
        %s861 = sld [smem:[#allocation11 + $0x19]]
        %v862 = vstv %s861
        %v863 = vmul.f32 %v862, %v770
        %v864 = vmul.f32 %v862, %v771
        %867 = vrot.lane.b32.xlu0 %v863, 121
        %v868 = vpop.permute.xlu0 %867
        %869 = vrot.lane.b32.xlu0 %v864, 121
        %v870 = vpop.permute.xlu0 %869
        %v873 = vadd.f32 %v859, %v868
        %v874 = vadd.f32 %v860, %v870
        %s875 = sld [smem:[#allocation11 + $0x1a]]
        %v876 = vstv %s875
        %v877 = vmul.f32 %v876, %v770
        %v878 = vmul.f32 %v876, %v771
        %881 = vrot.lane.b32.xlu0 %v877, 120
        %v882 = vpop.permute.xlu0 %881
        %883 = vrot.lane.b32.xlu0 %v878, 120
        %v884 = vpop.permute.xlu0 %883
        %v887 = vadd.f32 %v873, %v882
        %v888 = vadd.f32 %v874, %v884
        %s889 = sld [smem:[#allocation11 + $0x1b]]
        %s890 = scalar_lea.vmem [#allocation2], 72
        %v891 = vld [vmem:[%s890 + $0x4] sm:$0xff]
        %v892 = vld [vmem:[%s890 + $0xc] sm:$0xff]
        %v893 = vstv %s889
        %v894 = vmul.f32 %v893, %v891
        %v895 = vmul.f32 %v893, %v892
        %v896 = vadd.f32 %v887, %v894
        %v897 = vadd.f32 %v888, %v895
        %s898 = sld [smem:[#allocation11 + $0x1c]]
        %v899 = vstv %s898
        %v900 = vmul.f32 %v899, %v891
        %v901 = vmul.f32 %v899, %v892
        %904 = vrot.lane.b32.xlu0 %v900, 127
        %v905 = vpop.permute.xlu0 %904
        %906 = vrot.lane.b32.xlu0 %v901, 127
        %v907 = vpop.permute.xlu0 %906
        %v910 = vadd.f32 %v896, %v905
        %v911 = vadd.f32 %v897, %v907
        %s912 = sld [smem:[#allocation11 + $0x1d]]
        %v913 = vstv %s912
        %v914 = vmul.f32 %v913, %v891
        %v915 = vmul.f32 %v913, %v892
        %918 = vrot.lane.b32.xlu0 %v914, 126
        %v919 = vpop.permute.xlu0 %918
        %920 = vrot.lane.b32.xlu0 %v915, 126
        %v921 = vpop.permute.xlu0 %920
        %v924 = vadd.f32 %v910, %v919
        %v925 = vadd.f32 %v911, %v921
        %s926 = sld [smem:[#allocation11 + $0x1e]]
        %v927 = vstv %s926
        %v928 = vmul.f32 %v927, %v891
        %v929 = vmul.f32 %v927, %v892
        %932 = vrot.lane.b32.xlu0 %v928, 125
        %v933 = vpop.permute.xlu0 %932
        %934 = vrot.lane.b32.xlu0 %v929, 125
        %v935 = vpop.permute.xlu0 %934
        %v938 = vadd.f32 %v924, %v933
        %v939 = vadd.f32 %v925, %v935
        %s940 = sld [smem:[#allocation11 + $0x1f]]
        %v941 = vstv %s940
        %v942 = vmul.f32 %v941, %v891
        %v943 = vmul.f32 %v941, %v892
        %946 = vrot.lane.b32.xlu0 %v942, 124
        %v947 = vpop.permute.xlu0 %946
        %948 = vrot.lane.b32.xlu0 %v943, 124
        %v949 = vpop.permute.xlu0 %948
        %v952 = vadd.f32 %v938, %v947
        %v953 = vadd.f32 %v939, %v949
        %s954 = sld [smem:[#allocation11 + $0x20]]
        %v955 = vstv %s954
        %v956 = vmul.f32 %v955, %v891
        %v957 = vmul.f32 %v955, %v892
        %960 = vrot.lane.b32.xlu0 %v956, 123
        %v961 = vpop.permute.xlu0 %960
        %962 = vrot.lane.b32.xlu0 %v957, 123
        %v963 = vpop.permute.xlu0 %962
        %v966 = vadd.f32 %v952, %v961
        %v967 = vadd.f32 %v953, %v963
        %s968 = sld [smem:[#allocation11 + $0x21]]
        %v969 = vstv %s968
        %v970 = vmul.f32 %v969, %v891
        %v971 = vmul.f32 %v969, %v892
        %974 = vrot.lane.b32.xlu0 %v970, 122
        %v975 = vpop.permute.xlu0 %974
        %976 = vrot.lane.b32.xlu0 %v971, 122
        %v977 = vpop.permute.xlu0 %976
        %v980 = vadd.f32 %v966, %v975
        %v981 = vadd.f32 %v967, %v977
        %s982 = sld [smem:[#allocation11 + $0x22]]
        %v983 = vstv %s982
        %v984 = vmul.f32 %v983, %v891
        %v985 = vmul.f32 %v983, %v892
        %988 = vrot.lane.b32.xlu0 %v984, 121
        %v989 = vpop.permute.xlu0 %988
        %990 = vrot.lane.b32.xlu0 %v985, 121
        %v991 = vpop.permute.xlu0 %990
        %v994 = vadd.f32 %v980, %v989
        %v995 = vadd.f32 %v981, %v991
        %s996 = sld [smem:[#allocation11 + $0x23]]
        %v997 = vstv %s996
        %v998 = vmul.f32 %v997, %v891
        %v999 = vmul.f32 %v997, %v892
        %1002 = vrot.lane.b32.xlu0 %v998, 120
        %v1003 = vpop.permute.xlu0 %1002
        %1004 = vrot.lane.b32.xlu0 %v999, 120
        %v1005 = vpop.permute.xlu0 %1004
        %v1008 = vadd.f32 %v994, %v1003
        %v1009 = vadd.f32 %v995, %v1005
        %s1010 = sld [smem:[#allocation12]]
        %v1011 = vstv %s1010
        %v1012 = vadd.f32 %v1008, %v1011
        %v1013 = vadd.f32 %v1009, %v1011
        %v1014 = vmax.f32 %v1012, 0.0
        %v1015 = vmax.f32 %v1013, 0.0
        %vm1016 = vcmask 130048
        %1017 = vst.msk [vmem:[#allocation3 + $0x4] sm:$0xff] %vm1016, %v1014
        %1018 = vst.msk [vmem:[#allocation3 + $0xc] sm:$0xff] %vm1016, %v1015
        %s1019 = sld [smem:[#allocation11 + $0x24]]
        %v1020 = vld [vmem:[#allocation2 + $0x4] sm:$0xff]
        %v1021 = vld [vmem:[#allocation2 + $0xc] sm:$0xff]
        %v1022 = vstv %s1019
        %v1023 = vmul.f32 %v1022, %v1020
        %v1024 = vmul.f32 %v1022, %v1021
        %v1025 = vadd.f32 %v1023, 0.0
        %v1026 = vadd.f32 %v1024, 0.0
        %s1027 = sld [smem:[#allocation11 + $0x25]]
        %v1028 = vstv %s1027
        %v1029 = vmul.f32 %v1028, %v1020
        %v1030 = vmul.f32 %v1028, %v1021
        %1033 = vrot.lane.b32.xlu0 %v1029, 127
        %v1034 = vpop.permute.xlu0 %1033
        %1035 = vrot.lane.b32.xlu0 %v1030, 127
        %v1036 = vpop.permute.xlu0 %1035
        %v1039 = vadd.f32 %v1025, %v1034
        %v1040 = vadd.f32 %v1026, %v1036
        %s1041 = sld [smem:[#allocation11 + $0x26]]
        %v1042 = vstv %s1041
        %v1043 = vmul.f32 %v1042, %v1020
        %v1044 = vmul.f32 %v1042, %v1021
        %1047 = vrot.lane.b32.xlu0 %v1043, 126
        %v1048 = vpop.permute.xlu0 %1047
        %1049 = vrot.lane.b32.xlu0 %v1044, 126
        %v1050 = vpop.permute.xlu0 %1049
        %v1053 = vadd.f32 %v1039, %v1048
        %v1054 = vadd.f32 %v1040, %v1050
        %s1055 = sld [smem:[#allocation11 + $0x27]]
        %v1056 = vstv %s1055
        %v1057 = vmul.f32 %v1056, %v1020
        %v1058 = vmul.f32 %v1056, %v1021
        %1061 = vrot.lane.b32.xlu0 %v1057, 125
        %v1062 = vpop.permute.xlu0 %1061
        %1063 = vrot.lane.b32.xlu0 %v1058, 125
        %v1064 = vpop.permute.xlu0 %1063
        %v1067 = vadd.f32 %v1053, %v1062
        %v1068 = vadd.f32 %v1054, %v1064
        %s1069 = sld [smem:[#allocation11 + $0x28]]
        %v1070 = vstv %s1069
        %v1071 = vmul.f32 %v1070, %v1020
        %v1072 = vmul.f32 %v1070, %v1021
        %1075 = vrot.lane.b32.xlu0 %v1071, 124
        %v1076 = vpop.permute.xlu0 %1075
        %1077 = vrot.lane.b32.xlu0 %v1072, 124
        %v1078 = vpop.permute.xlu0 %1077
        %v1081 = vadd.f32 %v1067, %v1076
        %v1082 = vadd.f32 %v1068, %v1078
        %s1083 = sld [smem:[#allocation11 + $0x29]]
        %v1084 = vstv %s1083
        %v1085 = vmul.f32 %v1084, %v1020
        %v1086 = vmul.f32 %v1084, %v1021
        %1089 = vrot.lane.b32.xlu0 %v1085, 123
        %v1090 = vpop.permute.xlu0 %1089
        %1091 = vrot.lane.b32.xlu0 %v1086, 123
        %v1092 = vpop.permute.xlu0 %1091
        %v1095 = vadd.f32 %v1081, %v1090
        %v1096 = vadd.f32 %v1082, %v1092
        %s1097 = sld [smem:[#allocation11 + $0x2a]]
        %v1098 = vstv %s1097
        %v1099 = vmul.f32 %v1098, %v1020
        %v1100 = vmul.f32 %v1098, %v1021
        %1103 = vrot.lane.b32.xlu0 %v1099, 122
        %v1104 = vpop.permute.xlu0 %1103
        %1105 = vrot.lane.b32.xlu0 %v1100, 122
        %v1106 = vpop.permute.xlu0 %1105
        %v1109 = vadd.f32 %v1095, %v1104
        %v1110 = vadd.f32 %v1096, %v1106
        %s1111 = sld [smem:[#allocation11 + $0x2b]]
        %v1112 = vstv %s1111
        %v1113 = vmul.f32 %v1112, %v1020
        %v1114 = vmul.f32 %v1112, %v1021
        %1117 = vrot.lane.b32.xlu0 %v1113, 121
        %v1118 = vpop.permute.xlu0 %1117
        %1119 = vrot.lane.b32.xlu0 %v1114, 121
        %v1120 = vpop.permute.xlu0 %1119
        %v1123 = vadd.f32 %v1109, %v1118
        %v1124 = vadd.f32 %v1110, %v1120
        %s1125 = sld [smem:[#allocation11 + $0x2c]]
        %v1126 = vstv %s1125
        %v1127 = vmul.f32 %v1126, %v1020
        %v1128 = vmul.f32 %v1126, %v1021
        %1131 = vrot.lane.b32.xlu0 %v1127, 120
        %v1132 = vpop.permute.xlu0 %1131
        %1133 = vrot.lane.b32.xlu0 %v1128, 120
        %v1134 = vpop.permute.xlu0 %1133
        %v1137 = vadd.f32 %v1123, %v1132
        %v1138 = vadd.f32 %v1124, %v1134
        %s1139 = sld [smem:[#allocation11 + $0x2d]]
        %v1140 = vld [vmem:[%s648 + $0x4] sm:$0xff]
        %v1141 = vld [vmem:[%s648 + $0xc] sm:$0xff]
        %v1142 = vstv %s1139
        %v1143 = vmul.f32 %v1142, %v1140
        %v1144 = vmul.f32 %v1142, %v1141
        %v1145 = vadd.f32 %v1137, %v1143
        %v1146 = vadd.f32 %v1138, %v1144
        %s1147 = sld [smem:[#allocation11 + $0x2e]]
        %v1148 = vstv %s1147
        %v1149 = vmul.f32 %v1148, %v1140
        %v1150 = vmul.f32 %v1148, %v1141
        %1153 = vrot.lane.b32.xlu0 %v1149, 127
        %v1154 = vpop.permute.xlu0 %1153
        %1155 = vrot.lane.b32.xlu0 %v1150, 127
        %v1156 = vpop.permute.xlu0 %1155
        %v1159 = vadd.f32 %v1145, %v1154
        %v1160 = vadd.f32 %v1146, %v1156
        %s1161 = sld [smem:[#allocation11 + $0x2f]]
        %v1162 = vstv %s1161
        %v1163 = vmul.f32 %v1162, %v1140
        %v1164 = vmul.f32 %v1162, %v1141
        %1167 = vrot.lane.b32.xlu0 %v1163, 126
        %v1168 = vpop.permute.xlu0 %1167
        %1169 = vrot.lane.b32.xlu0 %v1164, 126
        %v1170 = vpop.permute.xlu0 %1169
        %v1173 = vadd.f32 %v1159, %v1168
        %v1174 = vadd.f32 %v1160, %v1170
        %s1175 = sld [smem:[#allocation11 + $0x30]]
        %v1176 = vstv %s1175
        %v1177 = vmul.f32 %v1176, %v1140
        %v1178 = vmul.f32 %v1176, %v1141
        %1181 = vrot.lane.b32.xlu0 %v1177, 125
        %v1182 = vpop.permute.xlu0 %1181
        %1183 = vrot.lane.b32.xlu0 %v1178, 125
        %v1184 = vpop.permute.xlu0 %1183
        %v1187 = vadd.f32 %v1173, %v1182
        %v1188 = vadd.f32 %v1174, %v1184
        %s1189 = sld [smem:[#allocation11 + $0x31]]
        %v1190 = vstv %s1189
        %v1191 = vmul.f32 %v1190, %v1140
        %v1192 = vmul.f32 %v1190, %v1141
        %1195 = vrot.lane.b32.xlu0 %v1191, 124
        %v1196 = vpop.permute.xlu0 %1195
        %1197 = vrot.lane.b32.xlu0 %v1192, 124
        %v1198 = vpop.permute.xlu0 %1197
        %v1201 = vadd.f32 %v1187, %v1196
        %v1202 = vadd.f32 %v1188, %v1198
        %s1203 = sld [smem:[#allocation11 + $0x32]]
        %v1204 = vstv %s1203
        %v1205 = vmul.f32 %v1204, %v1140
        %v1206 = vmul.f32 %v1204, %v1141
        %1209 = vrot.lane.b32.xlu0 %v1205, 123
        %v1210 = vpop.permute.xlu0 %1209
        %1211 = vrot.lane.b32.xlu0 %v1206, 123
        %v1212 = vpop.permute.xlu0 %1211
        %v1215 = vadd.f32 %v1201, %v1210
        %v1216 = vadd.f32 %v1202, %v1212
        %s1217 = sld [smem:[#allocation11 + $0x33]]
        %v1218 = vstv %s1217
        %v1219 = vmul.f32 %v1218, %v1140
        %v1220 = vmul.f32 %v1218, %v1141
        %1223 = vrot.lane.b32.xlu0 %v1219, 122
        %v1224 = vpop.permute.xlu0 %1223
        %1225 = vrot.lane.b32.xlu0 %v1220, 122
        %v1226 = vpop.permute.xlu0 %1225
        %v1229 = vadd.f32 %v1215, %v1224
        %v1230 = vadd.f32 %v1216, %v1226
        %s1231 = sld [smem:[#allocation11 + $0x34]]
        %v1232 = vstv %s1231
        %v1233 = vmul.f32 %v1232, %v1140
        %v1234 = vmul.f32 %v1232, %v1141
        %1237 = vrot.lane.b32.xlu0 %v1233, 121
        %v1238 = vpop.permute.xlu0 %1237
        %1239 = vrot.lane.b32.xlu0 %v1234, 121
        %v1240 = vpop.permute.xlu0 %1239
        %v1243 = vadd.f32 %v1229, %v1238
        %v1244 = vadd.f32 %v1230, %v1240
        %s1245 = sld [smem:[#allocation11 + $0x35]]
        %v1246 = vstv %s1245
        %v1247 = vmul.f32 %v1246, %v1140
        %v1248 = vmul.f32 %v1246, %v1141
        %1251 = vrot.lane.b32.xlu0 %v1247, 120
        %v1252 = vpop.permute.xlu0 %1251
        %1253 = vrot.lane.b32.xlu0 %v1248, 120
        %v1254 = vpop.permute.xlu0 %1253
        %v1257 = vadd.f32 %v1243, %v1252
        %v1258 = vadd.f32 %v1244, %v1254
        %s1259 = sld [smem:[#allocation11 + $0x36]]
        %v1260 = vld [vmem:[%s769 + $0x4] sm:$0xff]
        %v1261 = vld [vmem:[%s769 + $0xc] sm:$0xff]
        %v1262 = vstv %s1259
        %v1263 = vmul.f32 %v1262, %v1260
        %v1264 = vmul.f32 %v1262, %v1261
        %v1265 = vadd.f32 %v1257, %v1263
        %v1266 = vadd.f32 %v1258, %v1264
        %s1267 = sld [smem:[#allocation11 + $0x37]]
        %v1268 = vstv %s1267
        %v1269 = vmul.f32 %v1268, %v1260
        %v1270 = vmul.f32 %v1268, %v1261
        %1273 = vrot.lane.b32.xlu0 %v1269, 127
        %v1274 = vpop.permute.xlu0 %1273
        %1275 = vrot.lane.b32.xlu0 %v1270, 127
        %v1276 = vpop.permute.xlu0 %1275
        %v1279 = vadd.f32 %v1265, %v1274
        %v1280 = vadd.f32 %v1266, %v1276
        %s1281 = sld [smem:[#allocation11 + $0x38]]
        %v1282 = vstv %s1281
        %v1283 = vmul.f32 %v1282, %v1260
        %v1284 = vmul.f32 %v1282, %v1261
        %1287 = vrot.lane.b32.xlu0 %v1283, 126
        %v1288 = vpop.permute.xlu0 %1287
        %1289 = vrot.lane.b32.xlu0 %v1284, 126
        %v1290 = vpop.permute.xlu0 %1289
        %v1293 = vadd.f32 %v1279, %v1288
        %v1294 = vadd.f32 %v1280, %v1290
        %s1295 = sld [smem:[#allocation11 + $0x39]]
        %v1296 = vstv %s1295
        %v1297 = vmul.f32 %v1296, %v1260
        %v1298 = vmul.f32 %v1296, %v1261
        %1301 = vrot.lane.b32.xlu0 %v1297, 125
        %v1302 = vpop.permute.xlu0 %1301
        %1303 = vrot.lane.b32.xlu0 %v1298, 125
        %v1304 = vpop.permute.xlu0 %1303
        %v1307 = vadd.f32 %v1293, %v1302
        %v1308 = vadd.f32 %v1294, %v1304
        %s1309 = sld [smem:[#allocation11 + $0x3a]]
        %v1310 = vstv %s1309
        %v1311 = vmul.f32 %v1310, %v1260
        %v1312 = vmul.f32 %v1310, %v1261
        %1315 = vrot.lane.b32.xlu0 %v1311, 124
        %v1316 = vpop.permute.xlu0 %1315
        %1317 = vrot.lane.b32.xlu0 %v1312, 124
        %v1318 = vpop.permute.xlu0 %1317
        %v1321 = vadd.f32 %v1307, %v1316
        %v1322 = vadd.f32 %v1308, %v1318
        %s1323 = sld [smem:[#allocation11 + $0x3b]]
        %v1324 = vstv %s1323
        %v1325 = vmul.f32 %v1324, %v1260
        %v1326 = vmul.f32 %v1324, %v1261
        %1329 = vrot.lane.b32.xlu0 %v1325, 123
        %v1330 = vpop.permute.xlu0 %1329
        %1331 = vrot.lane.b32.xlu0 %v1326, 123
        %v1332 = vpop.permute.xlu0 %1331
        %v1335 = vadd.f32 %v1321, %v1330
        %v1336 = vadd.f32 %v1322, %v1332
        %s1337 = sld [smem:[#allocation11 + $0x3c]]
        %v1338 = vstv %s1337
        %v1339 = vmul.f32 %v1338, %v1260
        %v1340 = vmul.f32 %v1338, %v1261
        %1343 = vrot.lane.b32.xlu0 %v1339, 122
        %v1344 = vpop.permute.xlu0 %1343
        %1345 = vrot.lane.b32.xlu0 %v1340, 122
        %v1346 = vpop.permute.xlu0 %1345
        %v1349 = vadd.f32 %v1335, %v1344
        %v1350 = vadd.f32 %v1336, %v1346
        %s1351 = sld [smem:[#allocation11 + $0x3d]]
        %v1352 = vstv %s1351
        %v1353 = vmul.f32 %v1352, %v1260
        %v1354 = vmul.f32 %v1352, %v1261
        %1357 = vrot.lane.b32.xlu0 %v1353, 121
        %v1358 = vpop.permute.xlu0 %1357
        %1359 = vrot.lane.b32.xlu0 %v1354, 121
        %v1360 = vpop.permute.xlu0 %1359
        %v1363 = vadd.f32 %v1349, %v1358
        %v1364 = vadd.f32 %v1350, %v1360
        %s1365 = sld [smem:[#allocation11 + $0x3e]]
        %v1366 = vstv %s1365
        %v1367 = vmul.f32 %v1366, %v1260
        %v1368 = vmul.f32 %v1366, %v1261
        %1371 = vrot.lane.b32.xlu0 %v1367, 120
        %v1372 = vpop.permute.xlu0 %1371
        %1373 = vrot.lane.b32.xlu0 %v1368, 120
        %v1374 = vpop.permute.xlu0 %1373
        %v1377 = vadd.f32 %v1363, %v1372
        %v1378 = vadd.f32 %v1364, %v1374
        %s1379 = sld [smem:[#allocation11 + $0x3f]]
        %v1380 = vld [vmem:[%s890 + $0x4] sm:$0xff]
        %v1381 = vld [vmem:[%s890 + $0xc] sm:$0xff]
        %v1382 = vstv %s1379
        %v1383 = vmul.f32 %v1382, %v1380
        %v1384 = vmul.f32 %v1382, %v1381
        %v1385 = vadd.f32 %v1377, %v1383
        %v1386 = vadd.f32 %v1378, %v1384
        %s1387 = sld [smem:[#allocation11 + $0x40]]
        %v1388 = vstv %s1387
        %v1389 = vmul.f32 %v1388, %v1380
        %v1390 = vmul.f32 %v1388, %v1381
        %1393 = vrot.lane.b32.xlu0 %v1389, 127
        %v1394 = vpop.permute.xlu0 %1393
        %1395 = vrot.lane.b32.xlu0 %v1390, 127
        %v1396 = vpop.permute.xlu0 %1395
        %v1399 = vadd.f32 %v1385, %v1394
        %v1400 = vadd.f32 %v1386, %v1396
        %s1401 = sld [smem:[#allocation11 + $0x41]]
        %v1402 = vstv %s1401
        %v1403 = vmul.f32 %v1402, %v1380
        %v1404 = vmul.f32 %v1402, %v1381
        %1407 = vrot.lane.b32.xlu0 %v1403, 126
        %v1408 = vpop.permute.xlu0 %1407
        %1409 = vrot.lane.b32.xlu0 %v1404, 126
        %v1410 = vpop.permute.xlu0 %1409
        %v1413 = vadd.f32 %v1399, %v1408
        %v1414 = vadd.f32 %v1400, %v1410
        %s1415 = sld [smem:[#allocation11 + $0x42]]
        %v1416 = vstv %s1415
        %v1417 = vmul.f32 %v1416, %v1380
        %v1418 = vmul.f32 %v1416, %v1381
        %1421 = vrot.lane.b32.xlu0 %v1417, 125
        %v1422 = vpop.permute.xlu0 %1421
        %1423 = vrot.lane.b32.xlu0 %v1418, 125
        %v1424 = vpop.permute.xlu0 %1423
        %v1427 = vadd.f32 %v1413, %v1422
        %v1428 = vadd.f32 %v1414, %v1424
        %s1429 = sld [smem:[#allocation11 + $0x43]]
        %v1430 = vstv %s1429
        %v1431 = vmul.f32 %v1430, %v1380
        %v1432 = vmul.f32 %v1430, %v1381
        %1435 = vrot.lane.b32.xlu0 %v1431, 124
        %v1436 = vpop.permute.xlu0 %1435
        %1437 = vrot.lane.b32.xlu0 %v1432, 124
        %v1438 = vpop.permute.xlu0 %1437
        %v1441 = vadd.f32 %v1427, %v1436
        %v1442 = vadd.f32 %v1428, %v1438
        %s1443 = sld [smem:[#allocation11 + $0x44]]
        %v1444 = vstv %s1443
        %v1445 = vmul.f32 %v1444, %v1380
        %v1446 = vmul.f32 %v1444, %v1381
        %1449 = vrot.lane.b32.xlu0 %v1445, 123
        %v1450 = vpop.permute.xlu0 %1449
        %1451 = vrot.lane.b32.xlu0 %v1446, 123
        %v1452 = vpop.permute.xlu0 %1451
        %v1455 = vadd.f32 %v1441, %v1450
        %v1456 = vadd.f32 %v1442, %v1452
        %s1457 = sld [smem:[#allocation11 + $0x45]]
        %v1458 = vstv %s1457
        %v1459 = vmul.f32 %v1458, %v1380
        %v1460 = vmul.f32 %v1458, %v1381
        %1463 = vrot.lane.b32.xlu0 %v1459, 122
        %v1464 = vpop.permute.xlu0 %1463
        %1465 = vrot.lane.b32.xlu0 %v1460, 122
        %v1466 = vpop.permute.xlu0 %1465
        %v1469 = vadd.f32 %v1455, %v1464
        %v1470 = vadd.f32 %v1456, %v1466
        %s1471 = sld [smem:[#allocation11 + $0x46]]
        %v1472 = vstv %s1471
        %v1473 = vmul.f32 %v1472, %v1380
        %v1474 = vmul.f32 %v1472, %v1381
        %1477 = vrot.lane.b32.xlu0 %v1473, 121
        %v1478 = vpop.permute.xlu0 %1477
        %1479 = vrot.lane.b32.xlu0 %v1474, 121
        %v1480 = vpop.permute.xlu0 %1479
        %v1483 = vadd.f32 %v1469, %v1478
        %v1484 = vadd.f32 %v1470, %v1480
        %s1485 = sld [smem:[#allocation11 + $0x47]]
        %v1486 = vstv %s1485
        %v1487 = vmul.f32 %v1486, %v1380
        %v1488 = vmul.f32 %v1486, %v1381
        %1491 = vrot.lane.b32.xlu0 %v1487, 120
        %v1492 = vpop.permute.xlu0 %1491
        %1493 = vrot.lane.b32.xlu0 %v1488, 120
        %v1494 = vpop.permute.xlu0 %1493
        %v1497 = vadd.f32 %v1483, %v1492
        %v1498 = vadd.f32 %v1484, %v1494
        %s1499 = sld [smem:[#allocation12 + $0x1]]
        %v1500 = vstv %s1499
        %v1501 = vadd.f32 %v1497, %v1500
        %v1502 = vadd.f32 %v1498, %v1500
        %v1503 = vmax.f32 %v1501, 0.0
        %v1504 = vmax.f32 %v1502, 0.0
        %s1505 = scalar_lea.vmem [#allocation3], 24
        %1506 = vst.msk [vmem:[%s1505 + $0x4] sm:$0xff] %vm1016, %v1503
        %1507 = vst.msk [vmem:[%s1505 + $0xc] sm:$0xff] %vm1016, %v1504
        %s1508 = sld [smem:[#allocation14]]
        %v1509 = vld [vmem:[#allocation3] sm:$0xff]
        %v1510 = vld [vmem:[#allocation3 + $0x8] sm:$0xff]
        %v1511 = vstv %s1508
        %v1512 = vmul.f32 %v1511, %v1509
        %v1513 = vmul.f32 %v1511, %v1510
        %v1514 = vadd.f32 %v1512, 0.0
        %v1515 = vadd.f32 %v1513, 0.0
        %s1516 = sld [smem:[#allocation14 + $0x1]]
        %v1517 = vld [vmem:[#allocation3 + $0x1] sm:$0xff]
        %v1518 = vld [vmem:[#allocation3 + $0x9] sm:$0xff]
        %v1519 = vstv %s1516
        %v1520 = vmul.f32 %v1519, %v1517
        %v1521 = vmul.f32 %v1519, %v1518
        %v1522 = vadd.f32 %v1514, %v1520
        %v1523 = vadd.f32 %v1515, %v1521
        %s1524 = sld [smem:[#allocation14 + $0x2]]
        %v1525 = vld [vmem:[#allocation3 + $0x2] sm:$0xff]
        %v1526 = vld [vmem:[#allocation3 + $0xa] sm:$0xff]
        %v1527 = vstv %s1524
        %v1528 = vmul.f32 %v1527, %v1525
        %v1529 = vmul.f32 %v1527, %v1526
        %v1530 = vadd.f32 %v1522, %v1528
        %v1531 = vadd.f32 %v1523, %v1529
        %s1532 = sld [smem:[#allocation14 + $0x3]]
        %v1533 = vld [vmem:[#allocation3 + $0x3] sm:$0xff]
        %v1534 = vld [vmem:[#allocation3 + $0xb] sm:$0xff]
        %v1535 = vstv %s1532
        %v1536 = vmul.f32 %v1535, %v1533
        %v1537 = vmul.f32 %v1535, %v1534
        %v1538 = vadd.f32 %v1530, %v1536
        %v1539 = vadd.f32 %v1531, %v1537
        %s1540 = sld [smem:[#allocation14 + $0x4]]
        %v1541 = vld [vmem:[#allocation3 + $0x4] sm:$0xff]
        %v1542 = vld [vmem:[#allocation3 + $0xc] sm:$0xff]
        %v1543 = vstv %s1540
        %v1544 = vmul.f32 %v1543, %v1541
        %v1545 = vmul.f32 %v1543, %v1542
        %v1546 = vadd.f32 %v1538, %v1544
        %v1547 = vadd.f32 %v1539, %v1545
        %s1548 = sld [smem:[#allocation14 + $0x5]]
        %v1549 = vld [vmem:[#allocation3 + $0x5] sm:$0xff]
        %v1550 = vld [vmem:[#allocation3 + $0xd] sm:$0xff]
        %v1551 = vstv %s1548
        %v1552 = vmul.f32 %v1551, %v1549
        %v1553 = vmul.f32 %v1551, %v1550
        %v1554 = vadd.f32 %v1546, %v1552
        %v1555 = vadd.f32 %v1547, %v1553
        %s1556 = sld [smem:[#allocation14 + $0x6]]
        %v1557 = vld [vmem:[#allocation3 + $0x6] sm:$0xff]
        %v1558 = vld [vmem:[#allocation3 + $0xe] sm:$0xff]
        %v1559 = vstv %s1556
        %v1560 = vmul.f32 %v1559, %v1557
        %v1561 = vmul.f32 %v1559, %v1558
        %v1562 = vadd.f32 %v1554, %v1560
        %v1563 = vadd.f32 %v1555, %v1561
        %s1564 = sld [smem:[#allocation14 + $0x7]]
        %v1565 = vld [vmem:[#allocation3 + $0x7] sm:$0xff]
        %v1566 = vld [vmem:[#allocation3 + $0xf] sm:$0xff]
        %v1567 = vstv %s1564
        %v1568 = vmul.f32 %v1567, %v1565
        %v1569 = vmul.f32 %v1567, %v1566
        %v1570 = vadd.f32 %v1562, %v1568
        %v1571 = vadd.f32 %v1563, %v1569
        %s1572 = sld [smem:[#allocation14 + $0x8]]
        %v1573 = vld [vmem:[#allocation3 + $0x8] sm:$0xff]
        %v1574 = vld [vmem:[#allocation3 + $0x10] sm:$0xff]
        %v1575 = vstv %s1572
        %v1576 = vmul.f32 %v1575, %v1573
        %v1577 = vmul.f32 %v1575, %v1574
        %v1578 = vadd.f32 %v1570, %v1576
        %v1579 = vadd.f32 %v1571, %v1577
        %s1580 = sld [smem:[#allocation14 + $0x9]]
        %v1581 = vld [vmem:[%s1505] sm:$0xff]
        %v1582 = vld [vmem:[%s1505 + $0x8] sm:$0xff]
        %v1583 = vstv %s1580
        %v1584 = vmul.f32 %v1583, %v1581
        %v1585 = vmul.f32 %v1583, %v1582
        %v1586 = vadd.f32 %v1578, %v1584
        %v1587 = vadd.f32 %v1579, %v1585
        %s1588 = sld [smem:[#allocation14 + $0xa]]
        %v1589 = vld [vmem:[%s1505 + $0x1] sm:$0xff]
        %v1590 = vld [vmem:[%s1505 + $0x9] sm:$0xff]
        %v1591 = vstv %s1588
        %v1592 = vmul.f32 %v1591, %v1589
        %v1593 = vmul.f32 %v1591, %v1590
        %v1594 = vadd.f32 %v1586, %v1592
        %v1595 = vadd.f32 %v1587, %v1593
        %s1596 = sld [smem:[#allocation14 + $0xb]]
        %v1597 = vld [vmem:[%s1505 + $0x2] sm:$0xff]
        %v1598 = vld [vmem:[%s1505 + $0xa] sm:$0xff]
        %v1599 = vstv %s1596
        %v1600 = vmul.f32 %v1599, %v1597
        %v1601 = vmul.f32 %v1599, %v1598
        %v1602 = vadd.f32 %v1594, %v1600
        %v1603 = vadd.f32 %v1595, %v1601
        %s1604 = sld [smem:[#allocation14 + $0xc]]
        %v1605 = vld [vmem:[%s1505 + $0x3] sm:$0xff]
        %v1606 = vld [vmem:[%s1505 + $0xb] sm:$0xff]
        %v1607 = vstv %s1604
        %v1608 = vmul.f32 %v1607, %v1605
        %v1609 = vmul.f32 %v1607, %v1606
        %v1610 = vadd.f32 %v1602, %v1608
        %v1611 = vadd.f32 %v1603, %v1609
        %s1612 = sld [smem:[#allocation14 + $0xd]]
        %v1613 = vld [vmem:[%s1505 + $0x4] sm:$0xff]
        %v1614 = vld [vmem:[%s1505 + $0xc] sm:$0xff]
        %v1615 = vstv %s1612
        %v1616 = vmul.f32 %v1615, %v1613
        %v1617 = vmul.f32 %v1615, %v1614
        %v1618 = vadd.f32 %v1610, %v1616
        %v1619 = vadd.f32 %v1611, %v1617
        %s1620 = sld [smem:[#allocation14 + $0xe]]
        %v1621 = vld [vmem:[%s1505 + $0x5] sm:$0xff]
        %v1622 = vld [vmem:[%s1505 + $0xd] sm:$0xff]
        %v1623 = vstv %s1620
        %v1624 = vmul.f32 %v1623, %v1621
        %v1625 = vmul.f32 %v1623, %v1622
        %v1626 = vadd.f32 %v1618, %v1624
        %v1627 = vadd.f32 %v1619, %v1625
        %s1628 = sld [smem:[#allocation14 + $0xf]]
        %v1629 = vld [vmem:[%s1505 + $0x6] sm:$0xff]
        %v1630 = vld [vmem:[%s1505 + $0xe] sm:$0xff]
        %v1631 = vstv %s1628
        %v1632 = vmul.f32 %v1631, %v1629
        %v1633 = vmul.f32 %v1631, %v1630
        %v1634 = vadd.f32 %v1626, %v1632
        %v1635 = vadd.f32 %v1627, %v1633
        %s1636 = sld [smem:[#allocation14 + $0x10]]
        %v1637 = vld [vmem:[%s1505 + $0x7] sm:$0xff]
        %v1638 = vld [vmem:[%s1505 + $0xf] sm:$0xff]
        %v1639 = vstv %s1636
        %v1640 = vmul.f32 %v1639, %v1637
        %v1641 = vmul.f32 %v1639, %v1638
        %v1642 = vadd.f32 %v1634, %v1640
        %v1643 = vadd.f32 %v1635, %v1641
        %s1644 = sld [smem:[#allocation14 + $0x11]]
        %v1645 = vld [vmem:[%s1505 + $0x8] sm:$0xff]
        %v1646 = vld [vmem:[%s1505 + $0x10] sm:$0xff]
        %v1647 = vstv %s1644
        %v1648 = vmul.f32 %v1647, %v1645
        %v1649 = vmul.f32 %v1647, %v1646
        %v1650 = vadd.f32 %v1642, %v1648
        %v1651 = vadd.f32 %v1643, %v1649
        %s1652 = sld [smem:[#allocation5]]
        %v1653 = vstv %s1652
        %v1654 = vadd.f32 %v1650, %v1653
        %v1655 = vadd.f32 %v1651, %v1653
        %v1656 = vmax.f32 %v1654, 0.0
        %v1657 = vmax.f32 %v1655, 0.0
        %s1658 = sld [smem:[#allocation15]]
        %v1659 = vld [vmem:[#allocation2] sm:$0xff]
        %v1660 = vld [vmem:[#allocation2 + $0x8] sm:$0xff]
        %v1661 = vstv %s1658
        %v1662 = vmul.f32 %v1661, %v1659
        %v1663 = vmul.f32 %v1661, %v1660
        %v1664 = vadd.f32 %v1662, 0.0
        %v1665 = vadd.f32 %v1663, 0.0
        %s1666 = sld [smem:[#allocation15 + $0x1]]
        %v1667 = vld [vmem:[#allocation2 + $0x1] sm:$0xff]
        %v1668 = vld [vmem:[#allocation2 + $0x9] sm:$0xff]
        %v1669 = vstv %s1666
        %v1670 = vmul.f32 %v1669, %v1667
        %v1671 = vmul.f32 %v1669, %v1668
        %v1672 = vadd.f32 %v1664, %v1670
        %v1673 = vadd.f32 %v1665, %v1671
        %s1674 = sld [smem:[#allocation15 + $0x2]]
        %v1675 = vld [vmem:[#allocation2 + $0x2] sm:$0xff]
        %v1676 = vld [vmem:[#allocation2 + $0xa] sm:$0xff]
        %v1677 = vstv %s1674
        %v1678 = vmul.f32 %v1677, %v1675
        %v1679 = vmul.f32 %v1677, %v1676
        %v1680 = vadd.f32 %v1672, %v1678
        %v1681 = vadd.f32 %v1673, %v1679
        %s1682 = sld [smem:[#allocation15 + $0x3]]
        %v1683 = vld [vmem:[#allocation2 + $0x3] sm:$0xff]
        %v1684 = vld [vmem:[#allocation2 + $0xb] sm:$0xff]
        %v1685 = vstv %s1682
        %v1686 = vmul.f32 %v1685, %v1683
        %v1687 = vmul.f32 %v1685, %v1684
        %v1688 = vadd.f32 %v1680, %v1686
        %v1689 = vadd.f32 %v1681, %v1687
        %s1690 = sld [smem:[#allocation15 + $0x4]]
        %v1691 = vld [vmem:[#allocation2 + $0x4] sm:$0xff]
        %v1692 = vld [vmem:[#allocation2 + $0xc] sm:$0xff]
        %v1693 = vstv %s1690
        %v1694 = vmul.f32 %v1693, %v1691
        %v1695 = vmul.f32 %v1693, %v1692
        %v1696 = vadd.f32 %v1688, %v1694
        %v1697 = vadd.f32 %v1689, %v1695
        %s1698 = sld [smem:[#allocation15 + $0x5]]
        %v1699 = vld [vmem:[#allocation2 + $0x5] sm:$0xff]
        %v1700 = vld [vmem:[#allocation2 + $0xd] sm:$0xff]
        %v1701 = vstv %s1698
        %v1702 = vmul.f32 %v1701, %v1699
        %v1703 = vmul.f32 %v1701, %v1700
        %v1704 = vadd.f32 %v1696, %v1702
        %v1705 = vadd.f32 %v1697, %v1703
        %s1706 = sld [smem:[#allocation15 + $0x6]]
        %v1707 = vld [vmem:[#allocation2 + $0x6] sm:$0xff]
        %v1708 = vld [vmem:[#allocation2 + $0xe] sm:$0xff]
        %v1709 = vstv %s1706
        %v1710 = vmul.f32 %v1709, %v1707
        %v1711 = vmul.f32 %v1709, %v1708
        %v1712 = vadd.f32 %v1704, %v1710
        %v1713 = vadd.f32 %v1705, %v1711
        %s1714 = sld [smem:[#allocation15 + $0x7]]
        %v1715 = vld [vmem:[#allocation2 + $0x7] sm:$0xff]
        %v1716 = vld [vmem:[#allocation2 + $0xf] sm:$0xff]
        %v1717 = vstv %s1714
        %v1718 = vmul.f32 %v1717, %v1715
        %v1719 = vmul.f32 %v1717, %v1716
        %v1720 = vadd.f32 %v1712, %v1718
        %v1721 = vadd.f32 %v1713, %v1719
        %s1722 = sld [smem:[#allocation15 + $0x8]]
        %v1723 = vld [vmem:[#allocation2 + $0x8] sm:$0xff]
        %v1724 = vld [vmem:[#allocation2 + $0x10] sm:$0xff]
        %v1725 = vstv %s1722
        %v1726 = vmul.f32 %v1725, %v1723
        %v1727 = vmul.f32 %v1725, %v1724
        %v1728 = vadd.f32 %v1720, %v1726
        %v1729 = vadd.f32 %v1721, %v1727
        %s1730 = sld [smem:[#allocation15 + $0x9]]
        %v1731 = vld [vmem:[%s648] sm:$0xff]
        %v1732 = vld [vmem:[%s648 + $0x8] sm:$0xff]
        %v1733 = vstv %s1730
        %v1734 = vmul.f32 %v1733, %v1731
        %v1735 = vmul.f32 %v1733, %v1732
        %v1736 = vadd.f32 %v1728, %v1734
        %v1737 = vadd.f32 %v1729, %v1735
        %s1738 = sld [smem:[#allocation15 + $0xa]]
        %v1739 = vld [vmem:[%s648 + $0x1] sm:$0xff]
        %v1740 = vld [vmem:[%s648 + $0x9] sm:$0xff]
        %v1741 = vstv %s1738
        %v1742 = vmul.f32 %v1741, %v1739
        %v1743 = vmul.f32 %v1741, %v1740
        %v1744 = vadd.f32 %v1736, %v1742
        %v1745 = vadd.f32 %v1737, %v1743
        %s1746 = sld [smem:[#allocation15 + $0xb]]
        %v1747 = vld [vmem:[%s648 + $0x2] sm:$0xff]
        %v1748 = vld [vmem:[%s648 + $0xa] sm:$0xff]
        %v1749 = vstv %s1746
        %v1750 = vmul.f32 %v1749, %v1747
        %v1751 = vmul.f32 %v1749, %v1748
        %v1752 = vadd.f32 %v1744, %v1750
        %v1753 = vadd.f32 %v1745, %v1751
        %s1754 = sld [smem:[#allocation15 + $0xc]]
        %v1755 = vld [vmem:[%s648 + $0x3] sm:$0xff]
        %v1756 = vld [vmem:[%s648 + $0xb] sm:$0xff]
        %v1757 = vstv %s1754
        %v1758 = vmul.f32 %v1757, %v1755
        %v1759 = vmul.f32 %v1757, %v1756
        %v1760 = vadd.f32 %v1752, %v1758
        %v1761 = vadd.f32 %v1753, %v1759
        %s1762 = sld [smem:[#allocation15 + $0xd]]
        %v1763 = vld [vmem:[%s648 + $0x4] sm:$0xff]
        %v1764 = vld [vmem:[%s648 + $0xc] sm:$0xff]
        %v1765 = vstv %s1762
        %v1766 = vmul.f32 %v1765, %v1763
        %v1767 = vmul.f32 %v1765, %v1764
        %v1768 = vadd.f32 %v1760, %v1766
        %v1769 = vadd.f32 %v1761, %v1767
        %s1770 = sld [smem:[#allocation15 + $0xe]]
        %v1771 = vld [vmem:[%s648 + $0x5] sm:$0xff]
        %v1772 = vld [vmem:[%s648 + $0xd] sm:$0xff]
        %v1773 = vstv %s1770
        %v1774 = vmul.f32 %v1773, %v1771
        %v1775 = vmul.f32 %v1773, %v1772
        %v1776 = vadd.f32 %v1768, %v1774
        %v1777 = vadd.f32 %v1769, %v1775
        %s1778 = sld [smem:[#allocation15 + $0xf]]
        %v1779 = vld [vmem:[%s648 + $0x6] sm:$0xff]
        %v1780 = vld [vmem:[%s648 + $0xe] sm:$0xff]
        %v1781 = vstv %s1778
        %v1782 = vmul.f32 %v1781, %v1779
        %v1783 = vmul.f32 %v1781, %v1780
        %v1784 = vadd.f32 %v1776, %v1782
        %v1785 = vadd.f32 %v1777, %v1783
        %s1786 = sld [smem:[#allocation15 + $0x10]]
        %v1787 = vld [vmem:[%s648 + $0x7] sm:$0xff]
        %v1788 = vld [vmem:[%s648 + $0xf] sm:$0xff]
        %v1789 = vstv %s1786
        %v1790 = vmul.f32 %v1789, %v1787
        %v1791 = vmul.f32 %v1789, %v1788
        %v1792 = vadd.f32 %v1784, %v1790
        %v1793 = vadd.f32 %v1785, %v1791
        %s1794 = sld [smem:[#allocation15 + $0x11]]
        %v1795 = vld [vmem:[%s648 + $0x8] sm:$0xff]
        %v1796 = vld [vmem:[%s648 + $0x10] sm:$0xff]
        %v1797 = vstv %s1794
        %v1798 = vmul.f32 %v1797, %v1795
        %v1799 = vmul.f32 %v1797, %v1796
        %v1800 = vadd.f32 %v1792, %v1798
        %v1801 = vadd.f32 %v1793, %v1799
        %s1802 = sld [smem:[#allocation15 + $0x12]]
        %v1803 = vld [vmem:[%s769] sm:$0xff]
        %v1804 = vld [vmem:[%s769 + $0x8] sm:$0xff]
        %v1805 = vstv %s1802
        %v1806 = vmul.f32 %v1805, %v1803
        %v1807 = vmul.f32 %v1805, %v1804
        %v1808 = vadd.f32 %v1800, %v1806
        %v1809 = vadd.f32 %v1801, %v1807
        %s1810 = sld [smem:[#allocation15 + $0x13]]
        %v1811 = vld [vmem:[%s769 + $0x1] sm:$0xff]
        %v1812 = vld [vmem:[%s769 + $0x9] sm:$0xff]
        %v1813 = vstv %s1810
        %v1814 = vmul.f32 %v1813, %v1811
        %v1815 = vmul.f32 %v1813, %v1812
        %v1816 = vadd.f32 %v1808, %v1814
        %v1817 = vadd.f32 %v1809, %v1815
        %s1818 = sld [smem:[#allocation15 + $0x14]]
        %v1819 = vld [vmem:[%s769 + $0x2] sm:$0xff]
        %v1820 = vld [vmem:[%s769 + $0xa] sm:$0xff]
        %v1821 = vstv %s1818
        %v1822 = vmul.f32 %v1821, %v1819
        %v1823 = vmul.f32 %v1821, %v1820
        %v1824 = vadd.f32 %v1816, %v1822
        %v1825 = vadd.f32 %v1817, %v1823
        %s1826 = sld [smem:[#allocation15 + $0x15]]
        %v1827 = vld [vmem:[%s769 + $0x3] sm:$0xff]
        %v1828 = vld [vmem:[%s769 + $0xb] sm:$0xff]
        %v1829 = vstv %s1826
        %v1830 = vmul.f32 %v1829, %v1827
        %v1831 = vmul.f32 %v1829, %v1828
        %v1832 = vadd.f32 %v1824, %v1830
        %v1833 = vadd.f32 %v1825, %v1831
        %s1834 = sld [smem:[#allocation15 + $0x16]]
        %v1835 = vld [vmem:[%s769 + $0x4] sm:$0xff]
        %v1836 = vld [vmem:[%s769 + $0xc] sm:$0xff]
        %v1837 = vstv %s1834
        %v1838 = vmul.f32 %v1837, %v1835
        %v1839 = vmul.f32 %v1837, %v1836
        %v1840 = vadd.f32 %v1832, %v1838
        %v1841 = vadd.f32 %v1833, %v1839
        %s1842 = sld [smem:[#allocation15 + $0x17]]
        %v1843 = vld [vmem:[%s769 + $0x5] sm:$0xff]
        %v1844 = vld [vmem:[%s769 + $0xd] sm:$0xff]
        %v1845 = vstv %s1842
        %v1846 = vmul.f32 %v1845, %v1843
        %v1847 = vmul.f32 %v1845, %v1844
        %v1848 = vadd.f32 %v1840, %v1846
        %v1849 = vadd.f32 %v1841, %v1847
        %s1850 = sld [smem:[#allocation15 + $0x18]]
        %v1851 = vld [vmem:[%s769 + $0x6] sm:$0xff]
        %v1852 = vld [vmem:[%s769 + $0xe] sm:$0xff]
        %v1853 = vstv %s1850
        %v1854 = vmul.f32 %v1853, %v1851
        %v1855 = vmul.f32 %v1853, %v1852
        %v1856 = vadd.f32 %v1848, %v1854
        %v1857 = vadd.f32 %v1849, %v1855
        %s1858 = sld [smem:[#allocation15 + $0x19]]
        %v1859 = vld [vmem:[%s769 + $0x7] sm:$0xff]
        %v1860 = vld [vmem:[%s769 + $0xf] sm:$0xff]
        %v1861 = vstv %s1858
        %v1862 = vmul.f32 %v1861, %v1859
        %v1863 = vmul.f32 %v1861, %v1860
        %v1864 = vadd.f32 %v1856, %v1862
        %v1865 = vadd.f32 %v1857, %v1863
        %s1866 = sld [smem:[#allocation15 + $0x1a]]
        %v1867 = vld [vmem:[%s769 + $0x8] sm:$0xff]
        %v1868 = vld [vmem:[%s769 + $0x10] sm:$0xff]
        %v1869 = vstv %s1866
        %v1870 = vmul.f32 %v1869, %v1867
        %v1871 = vmul.f32 %v1869, %v1868
        %v1872 = vadd.f32 %v1864, %v1870
        %v1873 = vadd.f32 %v1865, %v1871
        %s1874 = sld [smem:[#allocation15 + $0x1b]]
        %v1875 = vld [vmem:[%s890] sm:$0xff]
        %v1876 = vld [vmem:[%s890 + $0x8] sm:$0xff]
        %v1877 = vstv %s1874
        %v1878 = vmul.f32 %v1877, %v1875
        %v1879 = vmul.f32 %v1877, %v1876
        %v1880 = vadd.f32 %v1872, %v1878
        %v1881 = vadd.f32 %v1873, %v1879
        %s1882 = sld [smem:[#allocation15 + $0x1c]]
        %v1883 = vld [vmem:[%s890 + $0x1] sm:$0xff]
        %v1884 = vld [vmem:[%s890 + $0x9] sm:$0xff]
        %v1885 = vstv %s1882
        %v1886 = vmul.f32 %v1885, %v1883
        %v1887 = vmul.f32 %v1885, %v1884
        %v1888 = vadd.f32 %v1880, %v1886
        %v1889 = vadd.f32 %v1881, %v1887
        %s1890 = sld [smem:[#allocation15 + $0x1d]]
        %v1891 = vld [vmem:[%s890 + $0x2] sm:$0xff]
        %v1892 = vld [vmem:[%s890 + $0xa] sm:$0xff]
        %v1893 = vstv %s1890
        %v1894 = vmul.f32 %v1893, %v1891
        %v1895 = vmul.f32 %v1893, %v1892
        %v1896 = vadd.f32 %v1888, %v1894
        %v1897 = vadd.f32 %v1889, %v1895
        %s1898 = sld [smem:[#allocation15 + $0x1e]]
        %v1899 = vld [vmem:[%s890 + $0x3] sm:$0xff]
        %v1900 = vld [vmem:[%s890 + $0xb] sm:$0xff]
        %v1901 = vstv %s1898
        %v1902 = vmul.f32 %v1901, %v1899
        %v1903 = vmul.f32 %v1901, %v1900
        %v1904 = vadd.f32 %v1896, %v1902
        %v1905 = vadd.f32 %v1897, %v1903
        %s1906 = sld [smem:[#allocation15 + $0x1f]]
        %v1907 = vld [vmem:[%s890 + $0x4] sm:$0xff]
        %v1908 = vld [vmem:[%s890 + $0xc] sm:$0xff]
        %v1909 = vstv %s1906
        %v1910 = vmul.f32 %v1909, %v1907
        %v1911 = vmul.f32 %v1909, %v1908
        %v1912 = vadd.f32 %v1904, %v1910
        %v1913 = vadd.f32 %v1905, %v1911
        %s1914 = sld [smem:[#allocation15 + $0x20]]
        %v1915 = vld [vmem:[%s890 + $0x5] sm:$0xff]
        %v1916 = vld [vmem:[%s890 + $0xd] sm:$0xff]
        %v1917 = vstv %s1914
        %v1918 = vmul.f32 %v1917, %v1915
        %v1919 = vmul.f32 %v1917, %v1916
        %v1920 = vadd.f32 %v1912, %v1918
        %v1921 = vadd.f32 %v1913, %v1919
        %s1922 = sld [smem:[#allocation15 + $0x21]]
        %v1923 = vld [vmem:[%s890 + $0x6] sm:$0xff]
        %v1924 = vld [vmem:[%s890 + $0xe] sm:$0xff]
        %v1925 = vstv %s1922
        %v1926 = vmul.f32 %v1925, %v1923
        %v1927 = vmul.f32 %v1925, %v1924
        %v1928 = vadd.f32 %v1920, %v1926
        %v1929 = vadd.f32 %v1921, %v1927
        %s1930 = sld [smem:[#allocation15 + $0x22]]
        %v1931 = vld [vmem:[%s890 + $0x7] sm:$0xff]
        %v1932 = vld [vmem:[%s890 + $0xf] sm:$0xff]
        %v1933 = vstv %s1930
        %v1934 = vmul.f32 %v1933, %v1931
        %v1935 = vmul.f32 %v1933, %v1932
        %v1936 = vadd.f32 %v1928, %v1934
        %v1937 = vadd.f32 %v1929, %v1935
        %s1938 = sld [smem:[#allocation15 + $0x23]]
        %v1939 = vld [vmem:[%s890 + $0x8] sm:$0xff]
        %v1940 = vld [vmem:[%s890 + $0x10] sm:$0xff]
        %v1941 = vstv %s1938
        %v1942 = vmul.f32 %v1941, %v1939
        %v1943 = vmul.f32 %v1941, %v1940
        %v1944 = vadd.f32 %v1936, %v1942
        %v1945 = vadd.f32 %v1937, %v1943
        %s1946 = sld [smem:[#allocation17]]
        %v1947 = vstv %s1946
        %v1948 = vadd.f32 %v1944, %v1947
        %v1949 = vadd.f32 %v1945, %v1947
        %v1950 = vmax.f32 %v1948, 0.0
        %v1951 = vmax.f32 %v1949, 0.0
        %1952 = vst.msk [vmem:[#allocation4] sm:$0xff] %vm505, %v1950
        %1953 = vst.msk [vmem:[#allocation4 + $0x8] sm:$0xff] %vm505, %v1951
        %s1954 = sld [smem:[#allocation15 + $0x24]]
        %v1955 = vld [vmem:[#allocation2] sm:$0xff]
        %v1956 = vld [vmem:[#allocation2 + $0x8] sm:$0xff]
        %v1957 = vstv %s1954
        %v1958 = vmul.f32 %v1957, %v1955
        %v1959 = vmul.f32 %v1957, %v1956
        %v1960 = vadd.f32 %v1958, 0.0
        %v1961 = vadd.f32 %v1959, 0.0
        %s1962 = sld [smem:[#allocation15 + $0x25]]
        %v1963 = vld [vmem:[#allocation2 + $0x1] sm:$0xff]
        %v1964 = vld [vmem:[#allocation2 + $0x9] sm:$0xff]
        %v1965 = vstv %s1962
        %v1966 = vmul.f32 %v1965, %v1963
        %v1967 = vmul.f32 %v1965, %v1964
        %v1968 = vadd.f32 %v1960, %v1966
        %v1969 = vadd.f32 %v1961, %v1967
        %s1970 = sld [smem:[#allocation15 + $0x26]]
        %v1971 = vld [vmem:[#allocation2 + $0x2] sm:$0xff]
        %v1972 = vld [vmem:[#allocation2 + $0xa] sm:$0xff]
        %v1973 = vstv %s1970
        %v1974 = vmul.f32 %v1973, %v1971
        %v1975 = vmul.f32 %v1973, %v1972
        %v1976 = vadd.f32 %v1968, %v1974
        %v1977 = vadd.f32 %v1969, %v1975
        %s1978 = sld [smem:[#allocation15 + $0x27]]
        %v1979 = vld [vmem:[#allocation2 + $0x3] sm:$0xff]
        %v1980 = vld [vmem:[#allocation2 + $0xb] sm:$0xff]
        %v1981 = vstv %s1978
        %v1982 = vmul.f32 %v1981, %v1979
        %v1983 = vmul.f32 %v1981, %v1980
        %v1984 = vadd.f32 %v1976, %v1982
        %v1985 = vadd.f32 %v1977, %v1983
        %s1986 = sld [smem:[#allocation15 + $0x28]]
        %v1987 = vld [vmem:[#allocation2 + $0x4] sm:$0xff]
        %v1988 = vld [vmem:[#allocation2 + $0xc] sm:$0xff]
        %v1989 = vstv %s1986
        %v1990 = vmul.f32 %v1989, %v1987
        %v1991 = vmul.f32 %v1989, %v1988
        %v1992 = vadd.f32 %v1984, %v1990
        %v1993 = vadd.f32 %v1985, %v1991
        %s1994 = sld [smem:[#allocation15 + $0x29]]
        %v1995 = vld [vmem:[#allocation2 + $0x5] sm:$0xff]
        %v1996 = vld [vmem:[#allocation2 + $0xd] sm:$0xff]
        %v1997 = vstv %s1994
        %v1998 = vmul.f32 %v1997, %v1995
        %v1999 = vmul.f32 %v1997, %v1996
        %v2000 = vadd.f32 %v1992, %v1998
        %v2001 = vadd.f32 %v1993, %v1999
        %s2002 = sld [smem:[#allocation15 + $0x2a]]
        %v2003 = vld [vmem:[#allocation2 + $0x6] sm:$0xff]
        %v2004 = vld [vmem:[#allocation2 + $0xe] sm:$0xff]
        %v2005 = vstv %s2002
        %v2006 = vmul.f32 %v2005, %v2003
        %v2007 = vmul.f32 %v2005, %v2004
        %v2008 = vadd.f32 %v2000, %v2006
        %v2009 = vadd.f32 %v2001, %v2007
        %s2010 = sld [smem:[#allocation15 + $0x2b]]
        %v2011 = vld [vmem:[#allocation2 + $0x7] sm:$0xff]
        %v2012 = vld [vmem:[#allocation2 + $0xf] sm:$0xff]
        %v2013 = vstv %s2010
        %v2014 = vmul.f32 %v2013, %v2011
        %v2015 = vmul.f32 %v2013, %v2012
        %v2016 = vadd.f32 %v2008, %v2014
        %v2017 = vadd.f32 %v2009, %v2015
        %s2018 = sld [smem:[#allocation15 + $0x2c]]
        %v2019 = vld [vmem:[#allocation2 + $0x8] sm:$0xff]
        %v2020 = vld [vmem:[#allocation2 + $0x10] sm:$0xff]
        %v2021 = vstv %s2018
        %v2022 = vmul.f32 %v2021, %v2019
        %v2023 = vmul.f32 %v2021, %v2020
        %v2024 = vadd.f32 %v2016, %v2022
        %v2025 = vadd.f32 %v2017, %v2023
        %s2026 = sld [smem:[#allocation15 + $0x2d]]
        %v2027 = vld [vmem:[%s648] sm:$0xff]
        %v2028 = vld [vmem:[%s648 + $0x8] sm:$0xff]
        %v2029 = vstv %s2026
        %v2030 = vmul.f32 %v2029, %v2027
        %v2031 = vmul.f32 %v2029, %v2028
        %v2032 = vadd.f32 %v2024, %v2030
        %v2033 = vadd.f32 %v2025, %v2031
        %s2034 = sld [smem:[#allocation15 + $0x2e]]
        %v2035 = vld [vmem:[%s648 + $0x1] sm:$0xff]
        %v2036 = vld [vmem:[%s648 + $0x9] sm:$0xff]
        %v2037 = vstv %s2034
        %v2038 = vmul.f32 %v2037, %v2035
        %v2039 = vmul.f32 %v2037, %v2036
        %v2040 = vadd.f32 %v2032, %v2038
        %v2041 = vadd.f32 %v2033, %v2039
        %s2042 = sld [smem:[#allocation15 + $0x2f]]
        %v2043 = vld [vmem:[%s648 + $0x2] sm:$0xff]
        %v2044 = vld [vmem:[%s648 + $0xa] sm:$0xff]
        %v2045 = vstv %s2042
        %v2046 = vmul.f32 %v2045, %v2043
        %v2047 = vmul.f32 %v2045, %v2044
        %v2048 = vadd.f32 %v2040, %v2046
        %v2049 = vadd.f32 %v2041, %v2047
        %s2050 = sld [smem:[#allocation15 + $0x30]]
        %v2051 = vld [vmem:[%s648 + $0x3] sm:$0xff]
        %v2052 = vld [vmem:[%s648 + $0xb] sm:$0xff]
        %v2053 = vstv %s2050
        %v2054 = vmul.f32 %v2053, %v2051
        %v2055 = vmul.f32 %v2053, %v2052
        %v2056 = vadd.f32 %v2048, %v2054
        %v2057 = vadd.f32 %v2049, %v2055
        %s2058 = sld [smem:[#allocation15 + $0x31]]
        %v2059 = vld [vmem:[%s648 + $0x4] sm:$0xff]
        %v2060 = vld [vmem:[%s648 + $0xc] sm:$0xff]
        %v2061 = vstv %s2058
        %v2062 = vmul.f32 %v2061, %v2059
        %v2063 = vmul.f32 %v2061, %v2060
        %v2064 = vadd.f32 %v2056, %v2062
        %v2065 = vadd.f32 %v2057, %v2063
        %s2066 = sld [smem:[#allocation15 + $0x32]]
        %v2067 = vld [vmem:[%s648 + $0x5] sm:$0xff]
        %v2068 = vld [vmem:[%s648 + $0xd] sm:$0xff]
        %v2069 = vstv %s2066
        %v2070 = vmul.f32 %v2069, %v2067
        %v2071 = vmul.f32 %v2069, %v2068
        %v2072 = vadd.f32 %v2064, %v2070
        %v2073 = vadd.f32 %v2065, %v2071
        %s2074 = sld [smem:[#allocation15 + $0x33]]
        %v2075 = vld [vmem:[%s648 + $0x6] sm:$0xff]
        %v2076 = vld [vmem:[%s648 + $0xe] sm:$0xff]
        %v2077 = vstv %s2074
        %v2078 = vmul.f32 %v2077, %v2075
        %v2079 = vmul.f32 %v2077, %v2076
        %v2080 = vadd.f32 %v2072, %v2078
        %v2081 = vadd.f32 %v2073, %v2079
        %s2082 = sld [smem:[#allocation15 + $0x34]]
        %v2083 = vld [vmem:[%s648 + $0x7] sm:$0xff]
        %v2084 = vld [vmem:[%s648 + $0xf] sm:$0xff]
        %v2085 = vstv %s2082
        %v2086 = vmul.f32 %v2085, %v2083
        %v2087 = vmul.f32 %v2085, %v2084
        %v2088 = vadd.f32 %v2080, %v2086
        %v2089 = vadd.f32 %v2081, %v2087
        %s2090 = sld [smem:[#allocation15 + $0x35]]
        %v2091 = vld [vmem:[%s648 + $0x8] sm:$0xff]
        %v2092 = vld [vmem:[%s648 + $0x10] sm:$0xff]
        %v2093 = vstv %s2090
        %v2094 = vmul.f32 %v2093, %v2091
        %v2095 = vmul.f32 %v2093, %v2092
        %v2096 = vadd.f32 %v2088, %v2094
        %v2097 = vadd.f32 %v2089, %v2095
        %s2098 = sld [smem:[#allocation15 + $0x36]]
        %v2099 = vld [vmem:[%s769] sm:$0xff]
        %v2100 = vld [vmem:[%s769 + $0x8] sm:$0xff]
        %v2101 = vstv %s2098
        %v2102 = vmul.f32 %v2101, %v2099
        %v2103 = vmul.f32 %v2101, %v2100
        %v2104 = vadd.f32 %v2096, %v2102
        %v2105 = vadd.f32 %v2097, %v2103
        %s2106 = sld [smem:[#allocation15 + $0x37]]
        %v2107 = vld [vmem:[%s769 + $0x1] sm:$0xff]
        %v2108 = vld [vmem:[%s769 + $0x9] sm:$0xff]
        %v2109 = vstv %s2106
        %v2110 = vmul.f32 %v2109, %v2107
        %v2111 = vmul.f32 %v2109, %v2108
        %v2112 = vadd.f32 %v2104, %v2110
        %v2113 = vadd.f32 %v2105, %v2111
        %s2114 = sld [smem:[#allocation15 + $0x38]]
        %v2115 = vld [vmem:[%s769 + $0x2] sm:$0xff]
        %v2116 = vld [vmem:[%s769 + $0xa] sm:$0xff]
        %v2117 = vstv %s2114
        %v2118 = vmul.f32 %v2117, %v2115
        %v2119 = vmul.f32 %v2117, %v2116
        %v2120 = vadd.f32 %v2112, %v2118
        %v2121 = vadd.f32 %v2113, %v2119
        %s2122 = sld [smem:[#allocation15 + $0x39]]
        %v2123 = vld [vmem:[%s769 + $0x3] sm:$0xff]
        %v2124 = vld [vmem:[%s769 + $0xb] sm:$0xff]
        %v2125 = vstv %s2122
        %v2126 = vmul.f32 %v2125, %v2123
        %v2127 = vmul.f32 %v2125, %v2124
        %v2128 = vadd.f32 %v2120, %v2126
        %v2129 = vadd.f32 %v2121, %v2127
        %s2130 = sld [smem:[#allocation15 + $0x3a]]
        %v2131 = vld [vmem:[%s769 + $0x4] sm:$0xff]
        %v2132 = vld [vmem:[%s769 + $0xc] sm:$0xff]
        %v2133 = vstv %s2130
        %v2134 = vmul.f32 %v2133, %v2131
        %v2135 = vmul.f32 %v2133, %v2132
        %v2136 = vadd.f32 %v2128, %v2134
        %v2137 = vadd.f32 %v2129, %v2135
        %s2138 = sld [smem:[#allocation15 + $0x3b]]
        %v2139 = vld [vmem:[%s769 + $0x5] sm:$0xff]
        %v2140 = vld [vmem:[%s769 + $0xd] sm:$0xff]
        %v2141 = vstv %s2138
        %v2142 = vmul.f32 %v2141, %v2139
        %v2143 = vmul.f32 %v2141, %v2140
        %v2144 = vadd.f32 %v2136, %v2142
        %v2145 = vadd.f32 %v2137, %v2143
        %s2146 = sld [smem:[#allocation15 + $0x3c]]
        %v2147 = vld [vmem:[%s769 + $0x6] sm:$0xff]
        %v2148 = vld [vmem:[%s769 + $0xe] sm:$0xff]
        %v2149 = vstv %s2146
        %v2150 = vmul.f32 %v2149, %v2147
        %v2151 = vmul.f32 %v2149, %v2148
        %v2152 = vadd.f32 %v2144, %v2150
        %v2153 = vadd.f32 %v2145, %v2151
        %s2154 = sld [smem:[#allocation15 + $0x3d]]
        %v2155 = vld [vmem:[%s769 + $0x7] sm:$0xff]
        %v2156 = vld [vmem:[%s769 + $0xf] sm:$0xff]
        %v2157 = vstv %s2154
        %v2158 = vmul.f32 %v2157, %v2155
        %v2159 = vmul.f32 %v2157, %v2156
        %v2160 = vadd.f32 %v2152, %v2158
        %v2161 = vadd.f32 %v2153, %v2159
        %s2162 = sld [smem:[#allocation15 + $0x3e]]
        %v2163 = vld [vmem:[%s769 + $0x8] sm:$0xff]
        %v2164 = vld [vmem:[%s769 + $0x10] sm:$0xff]
        %v2165 = vstv %s2162
        %v2166 = vmul.f32 %v2165, %v2163
        %v2167 = vmul.f32 %v2165, %v2164
        %v2168 = vadd.f32 %v2160, %v2166
        %v2169 = vadd.f32 %v2161, %v2167
        %s2170 = sld [smem:[#allocation15 + $0x3f]]
        %v2171 = vld [vmem:[%s890] sm:$0xff]
        %v2172 = vld [vmem:[%s890 + $0x8] sm:$0xff]
        %v2173 = vstv %s2170
        %v2174 = vmul.f32 %v2173, %v2171
        %v2175 = vmul.f32 %v2173, %v2172
        %v2176 = vadd.f32 %v2168, %v2174
        %v2177 = vadd.f32 %v2169, %v2175
        %s2178 = sld [smem:[#allocation15 + $0x40]]
        %v2179 = vld [vmem:[%s890 + $0x1] sm:$0xff]
        %v2180 = vld [vmem:[%s890 + $0x9] sm:$0xff]
        %v2181 = vstv %s2178
        %v2182 = vmul.f32 %v2181, %v2179
        %v2183 = vmul.f32 %v2181, %v2180
        %v2184 = vadd.f32 %v2176, %v2182
        %v2185 = vadd.f32 %v2177, %v2183
        %s2186 = sld [smem:[#allocation15 + $0x41]]
        %v2187 = vld [vmem:[%s890 + $0x2] sm:$0xff]
        %v2188 = vld [vmem:[%s890 + $0xa] sm:$0xff]
        %v2189 = vstv %s2186
        %v2190 = vmul.f32 %v2189, %v2187
        %v2191 = vmul.f32 %v2189, %v2188
        %v2192 = vadd.f32 %v2184, %v2190
        %v2193 = vadd.f32 %v2185, %v2191
        %s2194 = sld [smem:[#allocation15 + $0x42]]
        %v2195 = vld [vmem:[%s890 + $0x3] sm:$0xff]
        %v2196 = vld [vmem:[%s890 + $0xb] sm:$0xff]
        %v2197 = vstv %s2194
        %v2198 = vmul.f32 %v2197, %v2195
        %v2199 = vmul.f32 %v2197, %v2196
        %v2200 = vadd.f32 %v2192, %v2198
        %v2201 = vadd.f32 %v2193, %v2199
        %s2202 = sld [smem:[#allocation15 + $0x43]]
        %v2203 = vld [vmem:[%s890 + $0x4] sm:$0xff]
        %v2204 = vld [vmem:[%s890 + $0xc] sm:$0xff]
        %v2205 = vstv %s2202
        %v2206 = vmul.f32 %v2205, %v2203
        %v2207 = vmul.f32 %v2205, %v2204
        %v2208 = vadd.f32 %v2200, %v2206
        %v2209 = vadd.f32 %v2201, %v2207
        %s2210 = sld [smem:[#allocation15 + $0x44]]
        %v2211 = vld [vmem:[%s890 + $0x5] sm:$0xff]
        %v2212 = vld [vmem:[%s890 + $0xd] sm:$0xff]
        %v2213 = vstv %s2210
        %v2214 = vmul.f32 %v2213, %v2211
        %v2215 = vmul.f32 %v2213, %v2212
        %v2216 = vadd.f32 %v2208, %v2214
        %v2217 = vadd.f32 %v2209, %v2215
        %s2218 = sld [smem:[#allocation15 + $0x45]]
        %v2219 = vld [vmem:[%s890 + $0x6] sm:$0xff]
        %v2220 = vld [vmem:[%s890 + $0xe] sm:$0xff]
        %v2221 = vstv %s2218
        %v2222 = vmul.f32 %v2221, %v2219
        %v2223 = vmul.f32 %v2221, %v2220
        %v2224 = vadd.f32 %v2216, %v2222
        %v2225 = vadd.f32 %v2217, %v2223
        %s2226 = sld [smem:[#allocation15 + $0x46]]
        %v2227 = vld [vmem:[%s890 + $0x7] sm:$0xff]
        %v2228 = vld [vmem:[%s890 + $0xf] sm:$0xff]
        %v2229 = vstv %s2226
        %v2230 = vmul.f32 %v2229, %v2227
        %v2231 = vmul.f32 %v2229, %v2228
        %v2232 = vadd.f32 %v2224, %v2230
        %v2233 = vadd.f32 %v2225, %v2231
        %s2234 = sld [smem:[#allocation15 + $0x47]]
        %v2235 = vld [vmem:[%s890 + $0x8] sm:$0xff]
        %v2236 = vld [vmem:[%s890 + $0x10] sm:$0xff]
        %v2237 = vstv %s2234
        %v2238 = vmul.f32 %v2237, %v2235
        %v2239 = vmul.f32 %v2237, %v2236
        %v2240 = vadd.f32 %v2232, %v2238
        %v2241 = vadd.f32 %v2233, %v2239
        %s2242 = sld [smem:[#allocation17 + $0x1]]
        %v2243 = vstv %s2242
        %v2244 = vadd.f32 %v2240, %v2243
        %v2245 = vadd.f32 %v2241, %v2243
        %v2246 = vmax.f32 %v2244, 0.0
        %v2247 = vmax.f32 %v2245, 0.0
        %s2248 = scalar_lea.vmem [#allocation4], 16
        %2249 = vst.msk [vmem:[%s2248] sm:$0xff] %vm505, %v2246
        %2250 = vst.msk [vmem:[%s2248 + $0x8] sm:$0xff] %vm505, %v2247
        %s2251 = sld [smem:[#allocation18]]
        %v2252 = vld [vmem:[#allocation4] sm:$0xff]
        %v2253 = vld [vmem:[#allocation4 + $0x8] sm:$0xff]
        %v2254 = vstv %s2251
        %v2255 = vmul.f32 %v2254, %v2252
        %v2256 = vmul.f32 %v2254, %v2253
        %v2257 = vadd.f32 %v2255, 0.0
        %v2258 = vadd.f32 %v2256, 0.0
        %s2259 = sld [smem:[#allocation18 + $0x1]]
        %v2260 = vstv %s2259
        %v2261 = vmul.f32 %v2260, %v2252
        %v2262 = vmul.f32 %v2260, %v2253
        %2265 = vrot.lane.b32.xlu0 %v2261, 127
        %v2266 = vpop.permute.xlu0 %2265
        %2267 = vrot.lane.b32.xlu0 %v2262, 127
        %v2268 = vpop.permute.xlu0 %2267
        %v2271 = vadd.f32 %v2257, %v2266
        %v2272 = vadd.f32 %v2258, %v2268
        %s2273 = sld [smem:[#allocation18 + $0x2]]
        %v2274 = vstv %s2273
        %v2275 = vmul.f32 %v2274, %v2252
        %v2276 = vmul.f32 %v2274, %v2253
        %2279 = vrot.lane.b32.xlu0 %v2275, 126
        %v2280 = vpop.permute.xlu0 %2279
        %2281 = vrot.lane.b32.xlu0 %v2276, 126
        %v2282 = vpop.permute.xlu0 %2281
        %v2285 = vadd.f32 %v2271, %v2280
        %v2286 = vadd.f32 %v2272, %v2282
        %s2287 = sld [smem:[#allocation18 + $0x3]]
        %v2288 = vstv %s2287
        %v2289 = vmul.f32 %v2288, %v2252
        %v2290 = vmul.f32 %v2288, %v2253
        %2293 = vrot.lane.b32.xlu0 %v2289, 125
        %v2294 = vpop.permute.xlu0 %2293
        %2295 = vrot.lane.b32.xlu0 %v2290, 125
        %v2296 = vpop.permute.xlu0 %2295
        %v2299 = vadd.f32 %v2285, %v2294
        %v2300 = vadd.f32 %v2286, %v2296
        %s2301 = sld [smem:[#allocation18 + $0x4]]
        %v2302 = vstv %s2301
        %v2303 = vmul.f32 %v2302, %v2252
        %v2304 = vmul.f32 %v2302, %v2253
        %2307 = vrot.lane.b32.xlu0 %v2303, 124
        %v2308 = vpop.permute.xlu0 %2307
        %2309 = vrot.lane.b32.xlu0 %v2304, 124
        %v2310 = vpop.permute.xlu0 %2309
        %v2313 = vadd.f32 %v2299, %v2308
        %v2314 = vadd.f32 %v2300, %v2310
        %s2315 = sld [smem:[#allocation18 + $0x5]]
        %v2316 = vstv %s2315
        %v2317 = vmul.f32 %v2316, %v2252
        %v2318 = vmul.f32 %v2316, %v2253
        %2321 = vrot.lane.b32.xlu0 %v2317, 123
        %v2322 = vpop.permute.xlu0 %2321
        %2323 = vrot.lane.b32.xlu0 %v2318, 123
        %v2324 = vpop.permute.xlu0 %2323
        %v2327 = vadd.f32 %v2313, %v2322
        %v2328 = vadd.f32 %v2314, %v2324
        %s2329 = sld [smem:[#allocation18 + $0x6]]
        %v2330 = vstv %s2329
        %v2331 = vmul.f32 %v2330, %v2252
        %v2332 = vmul.f32 %v2330, %v2253
        %2335 = vrot.lane.b32.xlu0 %v2331, 122
        %v2336 = vpop.permute.xlu0 %2335
        %2337 = vrot.lane.b32.xlu0 %v2332, 122
        %v2338 = vpop.permute.xlu0 %2337
        %v2341 = vadd.f32 %v2327, %v2336
        %v2342 = vadd.f32 %v2328, %v2338
        %s2343 = sld [smem:[#allocation18 + $0x7]]
        %v2344 = vstv %s2343
        %v2345 = vmul.f32 %v2344, %v2252
        %v2346 = vmul.f32 %v2344, %v2253
        %2349 = vrot.lane.b32.xlu0 %v2345, 121
        %v2350 = vpop.permute.xlu0 %2349
        %2351 = vrot.lane.b32.xlu0 %v2346, 121
        %v2352 = vpop.permute.xlu0 %2351
        %v2355 = vadd.f32 %v2341, %v2350
        %v2356 = vadd.f32 %v2342, %v2352
        %s2357 = sld [smem:[#allocation18 + $0x8]]
        %v2358 = vstv %s2357
        %v2359 = vmul.f32 %v2358, %v2252
        %v2360 = vmul.f32 %v2358, %v2253
        %2363 = vrot.lane.b32.xlu0 %v2359, 120
        %v2364 = vpop.permute.xlu0 %2363
        %2365 = vrot.lane.b32.xlu0 %v2360, 120
        %v2366 = vpop.permute.xlu0 %2365
        %v2369 = vadd.f32 %v2355, %v2364
        %v2370 = vadd.f32 %v2356, %v2366
        %s2371 = sld [smem:[#allocation18 + $0x9]]
        %v2372 = vld [vmem:[%s2248] sm:$0xff]
        %v2373 = vld [vmem:[%s2248 + $0x8] sm:$0xff]
        %v2374 = vstv %s2371
        %v2375 = vmul.f32 %v2374, %v2372
        %v2376 = vmul.f32 %v2374, %v2373
        %v2377 = vadd.f32 %v2369, %v2375
        %v2378 = vadd.f32 %v2370, %v2376
        %s2379 = sld [smem:[#allocation18 + $0xa]]
        %v2380 = vstv %s2379
        %v2381 = vmul.f32 %v2380, %v2372
        %v2382 = vmul.f32 %v2380, %v2373
        %2385 = vrot.lane.b32.xlu0 %v2381, 127
        %v2386 = vpop.permute.xlu0 %2385
        %2387 = vrot.lane.b32.xlu0 %v2382, 127
        %v2388 = vpop.permute.xlu0 %2387
        %v2391 = vadd.f32 %v2377, %v2386
        %v2392 = vadd.f32 %v2378, %v2388
        %s2393 = sld [smem:[#allocation18 + $0xb]]
        %v2394 = vstv %s2393
        %v2395 = vmul.f32 %v2394, %v2372
        %v2396 = vmul.f32 %v2394, %v2373
        %2399 = vrot.lane.b32.xlu0 %v2395, 126
        %v2400 = vpop.permute.xlu0 %2399
        %2401 = vrot.lane.b32.xlu0 %v2396, 126
        %v2402 = vpop.permute.xlu0 %2401
        %v2405 = vadd.f32 %v2391, %v2400
        %v2406 = vadd.f32 %v2392, %v2402
        %s2407 = sld [smem:[#allocation18 + $0xc]]
        %v2408 = vstv %s2407
        %v2409 = vmul.f32 %v2408, %v2372
        %v2410 = vmul.f32 %v2408, %v2373
        %2413 = vrot.lane.b32.xlu0 %v2409, 125
        %v2414 = vpop.permute.xlu0 %2413
        %2415 = vrot.lane.b32.xlu0 %v2410, 125
        %v2416 = vpop.permute.xlu0 %2415
        %v2419 = vadd.f32 %v2405, %v2414
        %v2420 = vadd.f32 %v2406, %v2416
        %s2421 = sld [smem:[#allocation18 + $0xd]]
        %v2422 = vstv %s2421
        %v2423 = vmul.f32 %v2422, %v2372
        %v2424 = vmul.f32 %v2422, %v2373
        %2427 = vrot.lane.b32.xlu0 %v2423, 124
        %v2428 = vpop.permute.xlu0 %2427
        %2429 = vrot.lane.b32.xlu0 %v2424, 124
        %v2430 = vpop.permute.xlu0 %2429
        %v2433 = vadd.f32 %v2419, %v2428
        %v2434 = vadd.f32 %v2420, %v2430
        %s2435 = sld [smem:[#allocation18 + $0xe]]
        %v2436 = vstv %s2435
        %v2437 = vmul.f32 %v2436, %v2372
        %v2438 = vmul.f32 %v2436, %v2373
        %2441 = vrot.lane.b32.xlu0 %v2437, 123
        %v2442 = vpop.permute.xlu0 %2441
        %2443 = vrot.lane.b32.xlu0 %v2438, 123
        %v2444 = vpop.permute.xlu0 %2443
        %v2447 = vadd.f32 %v2433, %v2442
        %v2448 = vadd.f32 %v2434, %v2444
        %s2449 = sld [smem:[#allocation18 + $0xf]]
        %v2450 = vstv %s2449
        %v2451 = vmul.f32 %v2450, %v2372
        %v2452 = vmul.f32 %v2450, %v2373
        %2455 = vrot.lane.b32.xlu0 %v2451, 122
        %v2456 = vpop.permute.xlu0 %2455
        %2457 = vrot.lane.b32.xlu0 %v2452, 122
        %v2458 = vpop.permute.xlu0 %2457
        %v2461 = vadd.f32 %v2447, %v2456
        %v2462 = vadd.f32 %v2448, %v2458
        %s2463 = sld [smem:[#allocation18 + $0x10]]
        %v2464 = vstv %s2463
        %v2465 = vmul.f32 %v2464, %v2372
        %v2466 = vmul.f32 %v2464, %v2373
        %2469 = vrot.lane.b32.xlu0 %v2465, 121
        %v2470 = vpop.permute.xlu0 %2469
        %2471 = vrot.lane.b32.xlu0 %v2466, 121
        %v2472 = vpop.permute.xlu0 %2471
        %v2475 = vadd.f32 %v2461, %v2470
        %v2476 = vadd.f32 %v2462, %v2472
        %s2477 = sld [smem:[#allocation18 + $0x11]]
        %v2478 = vstv %s2477
        %v2479 = vmul.f32 %v2478, %v2372
        %v2480 = vmul.f32 %v2478, %v2373
        %2483 = vrot.lane.b32.xlu0 %v2479, 120
        %v2484 = vpop.permute.xlu0 %2483
        %2485 = vrot.lane.b32.xlu0 %v2480, 120
        %v2486 = vpop.permute.xlu0 %2485
        %v2489 = vadd.f32 %v2475, %v2484
        %v2490 = vadd.f32 %v2476, %v2486
        %s2491 = sld [smem:[#allocation6]]
        %v2492 = vstv %s2491
        %v2493 = vadd.f32 %v2489, %v2492
        %v2494 = vadd.f32 %v2490, %v2492
        %v2495 = vmax.f32 %v2493, 0.0
        %v2496 = vmax.f32 %v2494, 0.0
        %v2497 = vadd.f32 %v1656, %v2495
        %v2498 = vadd.f32 %v1657, %v2496
        %v2499 = vsub.f32 0.0, %v2497
        %v2500 = vsub.f32 0.0, %v2498
        %v2501 = vmul.f32 %v2499, 1.442695
        %v2502 = vpow.pop %v2501
        %v2503 = vmul.f32 %v2500, 1.442695
        %v2504 = vpow.pop %v2503
        %v2505 = vadd.f32 %v2502, 1.0
        %v2506 = vadd.f32 %v2504, 1.0
        %v2507 = vrcp.pop %v2505
        %v2508 = vmul.f32 1.0, %v2507
        %v2509 = vrcp.pop %v2506
        %v2510 = vmul.f32 1.0, %v2509
        %2511 = vst.msk [vmem:[%s429] sm:$0xff] %vm1016, %v2508
        %2512 = vst.msk [vmem:[%s429 + $0x8] sm:$0xff] %vm1016, %v2510
        %s2513 = sand.u32 %s234, 1
        %s2514 = scalar_lea.sflag [#allocation9], %s2513
        %s2515 = sand.u32 %s234, 1
        %s2516 = smul.addr %s2515, 16
        %s2517 = scalar_lea.vmem [#allocation20], %s2516
        // Predicated region
        $region85: #{tpu_custom_call.1} parent=55 // pred_check
          %p2518 = pneg %p244
        $region86: #{tpu_custom_call.1} parent=55 // pred_check_branch
          %2520 = sbr.rel (%p2518) target = $region88
        $region87: #{tpu_custom_call.1} parent=55 // pred_region
          %s2522 = ssub.s32 256, 256
          %2523 = vsyncadd %s2514, %s2522
          %s2524 = smul.addr %s32, 2
          %s2525 = smul.addr %s2524, 128
          %s2526 = scalar_lea.hbm %s9, %s2525
          %s2527 = sshll.u32 %s2517, 4
          %s2528 = int_to_ptr.vmem [resolvable:$true] %s2527
          %2533 = dma.vmem_to_hbm [thread:$0]  %s2528, 256, %s2526, %s2514, 128, 128, 8
        $region88: #{tpu_custom_call.1} parent=55 // pred_fallthru
          _
      $region56: #{tpu_custom_call.1} parent=5 // pred_fallthru
        _
      %p2534 = scmp.le.s32.totalorder 2, %s27
      // Predicated region
      $region89: #{tpu_custom_call.1} parent=5 // pred_check
        %p2535 = pneg %p2534
      $region90: #{tpu_custom_call.1} parent=5 // pred_check_branch
        %2537 = sbr.rel (%p2535) target = $region92
      $region91: #{tpu_custom_call.1} parent=5 // pred_region
        %s2538 = ssub.s32 %s27, 2
        // Predicated region
        $region93: #{tpu_custom_call.1} parent=91 // pred_check
          %p2539 = pneg %p250
        $region94: #{tpu_custom_call.1} parent=91 // pred_check_branch
          %2541 = sbr.rel (%p2539) target = $region96
        $region95: #{tpu_custom_call.1} parent=91 // pred_region
          %s2542 = sand.u32 %s235, 1
          %s2543 = scalar_lea.sflag [#allocation9], %s2542
          %s2544 = sand.u32 %s235, 1
          %s2545 = smul.addr %s2544, 16
          %s2546 = scalar_lea.vmem [#allocation20], %s2545
          %2547 = dma.done %s2543, 256
        $region96: #{tpu_custom_call.1} parent=91 // pred_fallthru
          _
      $region92: #{tpu_custom_call.1} parent=5 // pred_fallthru
        _
    $region6: #{tpu_custom_call.1} parent=1 // loop_footer
      %s31 = sadd.s32 1, %s27
    $region7: #{tpu_custom_call.1} parent=1 // loop_footer_branch
      %26 = sbr.rel target = $region3
    $region8: #{tpu_custom_call.1} parent=1 // loop_exit
      _
    %2548 = vsyncpa [#allocation8], 1
    %s2549 = scalar_lea.sflag [#allocation8], 1
    %2550 = vsyncpa %s2549, 1
    %2551 = vsyncpa [#allocation9], 1
    %s2552 = scalar_lea.sflag [#allocation9], 1
    %2553 = vsyncpa %s2552, 1
    %2554 = vsyncpa [#allocation10], 1
    %s2555 = scalar_lea.sflag [#allocation10], 1
    %2556 = vsyncpa %s2555, 1
    %2557 = vsyncpa [#allocation13], 1
    %2558 = vsyncpa [#allocation16], 1
    %2559 = vsyncpa [#allocation19], 1

</llo_original>
